<compile_context>
chip_gen: v7x
topology: tpu7x:2x2x1
jax: 0.10.0
libtpu: 0.0.40
codegen_flags: <defaults>
</compile_context>

<pallas_src>
import functools

import jax
import jax.numpy as jnp
from jax import lax
from jax.experimental import pallas as pl
from jax.experimental.pallas import tpu as pltpu

EPS = 1e-5


def _round_up(x, m):
    return (x + m - 1) // m * m


# ------------------------------ Pallas kernel ------------------------------- #

def _res_unit_kernel(x_ref, w1_ref, b1_ref, w2_ref, b2_ref, o_ref, y1p_ref, *,
                     W, P, stack_kw):
    """Fused  x -> CBS(1x1) -> CBS(3x3, pad=1) -> + x  for one image.

    x_ref  : [1, H*W, C]   compute dtype   (NHWC image, spatial-flattened)
    w1_ref : [C, C2]       compute dtype   1x1 conv weight, BN1 folded
    b1_ref : [1, C2]       f32             folded conv+BN1 bias
    w2_ref : [3, 3*C2, C]  (stack_kw) or [9, C2, C]   3x3 weight, BN2 folded
    b2_ref : [1, C]        f32             folded conv+BN2 bias
    o_ref  : [1, H*W, C]
    y1p_ref: [ROWS, 3*C2]  (stack_kw) or [ROWS, C2]   VMEM scratch, zero halo
    """
    HW = x_ref.shape[1]
    C2 = w1_ref.shape[1]
    ROWS, LANES = y1p_ref.shape

    x = x_ref[0]                                                      # [HW, C]

    # ---- CBS #1: 1x1 conv (BN folded into weight/bias) + SiLU ---------------
    z1 = jnp.dot(x, w1_ref[...], preferred_element_type=jnp.float32) + b1_ref[...]
    y1 = (z1 * jax.nn.sigmoid(z1)).astype(y1p_ref.dtype)              # [HW, C2]

    # Column index of every flattened pixel (hoisted once; feeds border masks).
    col = lax.broadcasted_iota(jnp.int32, (HW, 1), 0) % W

    # ---- zero ONLY the halo rows (interior is fully overwritten below). -----
    # Not gated on program_id(0)==0: under "parallel" megacore sharding one core
    # never executes step 0.
    if stack_kw:
        top, bot = P + 1, P + HW - 1       # shifted staging stores cover the rest
    else:
        top, bot = P, P + HW
    y1p_ref[pl.ds(0, top), :] = jnp.zeros((top, LANES), y1p_ref.dtype)
    y1p_ref[pl.ds(bot, ROWS - bot), :] = jnp.zeros((ROWS - bot, LANES),
                                                   y1p_ref.dtype)

    if stack_kw:
        # ---- v6e/v7x path: stage 3 column-shifted, pre-masked copies of y1 so
        #      the 3x3 becomes 3 matmuls with K = 3*C2 (fills the 256-deep MXU).
        #   lanes [0,   C2): kw=0 tap  (y1 shifted +1 row slot, right-border masked)
        #   lanes [C2, 2C2): kw=1 tap  (y1, unshifted)
        #   lanes [2C2,3C2): kw=2 tap  (y1 shifted -1 row slot, left-border masked)
        y1p_ref[pl.ds(P, HW), C2:2 * C2] = y1
        y1p_ref[pl.ds(P + 1, HW), 0:C2] = jnp.where(col != W - 1, y1, 0)
        y1p_ref[pl.ds(P - 1, HW), 2 * C2:3 * C2] = jnp.where(col != 0, y1, 0)

        # ---- CBS #2: one matmul per kh, f32 accumulation; b2 folded into init.
        acc = jnp.dot(y1p_ref[pl.ds(P - W, HW), :], w2_ref[0],
                      preferred_element_type=jnp.float32) + b2_ref[...]
        acc = acc + jnp.dot(y1p_ref[pl.ds(P, HW), :], w2_ref[1],
                            preferred_element_type=jnp.float32)
        acc = acc + jnp.dot(y1p_ref[pl.ds(P + W, HW), :], w2_ref[2],
                            preferred_element_type=jnp.float32)
    else:
        # ---- v4/v5 path: 9 separate C2-deep matmuls (128-deep MXU is already
        #      full at K=C2); border masks hoisted outside the unrolled loop.
        y1p_ref[pl.ds(P, HW), :] = y1
        mask_l = col != 0            # kw=0 taps: column 0 has no left neighbour
        mask_r = col != W - 1        # kw=2 taps: column W-1 has no right neighbour
        acc = None
        for kh in range(3):
            base = P + (kh - 1) * W
            for kw in range(3):
                win = y1p_ref[pl.ds(base + (kw - 1), HW), :]
                if kw == 0:
                    win = jnp.where(mask_l, win, 0)
                elif kw == 2:
                    win = jnp.where(mask_r, win, 0)
                d = jnp.dot(win, w2_ref[kh * 3 + kw],
                            preferred_element_type=jnp.float32)
                acc = d + b2_ref[...] if acc is None else acc + d

    # ---- SiLU + residual (f32 math; x was cast at the pallas_call boundary). --
    out = x.astype(jnp.float32) + acc * jax.nn.sigmoid(acc)
    o_ref[0] = out.astype(o_ref.dtype)


# ------------------------------- Wrapper ------------------------------------ #

def _fold_bn(conv_bias, gamma, beta, mean, var):
    """Fold eval-mode BatchNorm (running stats) + conv bias into scale / bias."""
    scale = gamma / jnp.sqrt(var + EPS)
    bias = (conv_bias - mean) * scale + beta
    return scale, bias


def _vmem_limit_bytes():
    # ~3/4 of per-core VMEM: ~96 MiB on v5e/v6e (128 MiB phys), ~48 MiB on v7x.
    try:
        cap = int(pltpu.get_tpu_info().vmem_capacity_bytes)
    except Exception:
        cap = 64 * 1024 * 1024
    return min(max(32 * 1024 * 1024, (3 * cap) // 4), 96 * 1024 * 1024)


def _default_stack_kw():
    # v6e/v7x MXU is 256 deep -> K=C2 (<=128 for C<=256) half-fills it; stack the
    # 3 kw taps into K=3*C2 there.  v2-v5 MXUs are 128 deep -> keep 9 C2-deep taps.
    try:
        kind = jax.devices()[0].device_kind.lower()
    except Exception:
        return True
    return not any(t in kind for t in ("v2", "v3", "v4", "v5"))


@functools.partial(jax.jit, static_argnames=("compute_dtype", "out_dtype", "stack_kw"))
def res_unit_forward_nhwc(x_nhwc, params, compute_dtype=jnp.bfloat16,
                          out_dtype=None, stack_kw=None):
    """ResUnit forward, NHWC in / NHWC out (preferred: no transpose glue)."""
    if stack_kw is None:
        stack_kw = _default_stack_kw()
    N, H, W, C = x_nhwc.shape
    C2 = C // 2
    HW = H * W
    out_dtype = x_nhwc.dtype if out_dtype is None else out_dtype

    x_rows = x_nhwc.reshape(N, HW, C).astype(compute_dtype)

    # --- fold eval-mode BN into conv weights / biases -------------------------
    s1, b1 = _fold_bn(params["b1"], params["g1"], params["be1"],
                      params["m1"], params["v1"])
    w1 = (params["w1"][:, :, 0, 0] * s1[:, None]).T                   # [C, C2]
    s2, b2 = _fold_bn(params["b2"], params["g2"], params["be2"],
                      params["m2"], params["v2"])
    w2 = jnp.transpose(params["w2"] * s2[:, None, None, None],
                       (2, 3, 1, 0))                                  # [3,3,C2,C]
    if stack_kw:
        w2 = w2.reshape(3, 3 * C2, C)      # per-kh weight, K stacked over (kw, ci)
        lanes = 3 * C2
    else:
        w2 = w2.reshape(9, C2, C)
        lanes = C2

    w1 = w1.astype(compute_dtype)
    w2 = w2.astype(compute_dtype)
    b1 = b1.reshape(1, C2).astype(jnp.float32)
    b2 = b2.reshape(1, C).astype(jnp.float32)

    # Scratch geometry: y1 staged at 8-sublane-aligned offset P, with a zero halo
    # of >= W+1 rows above / below for the row-shifted kh / kw taps.
    P = _round_up(W + 1, 8)
    ROWS = _round_up(P + HW + W + 1, 8)

    kernel = functools.partial(_res_unit_kernel, W=W, P=P, stack_kw=stack_kw)

    out_rows = pl.pallas_call(
        kernel,
        out_shape=jax.ShapeDtypeStruct((N, HW, C), out_dtype),
        grid_spec=pltpu.PrefetchScalarGridSpec(
            num_scalar_prefetch=0,
            grid=(N,),
            in_specs=[
                pl.BlockSpec((1, HW, C), lambda n: (n, 0, 0)),        # x (per image)
                pl.BlockSpec(w1.shape, lambda n: (0, 0)),             # w1 (folded)
                pl.BlockSpec((1, C2), lambda n: (0, 0)),              # b1 (folded)
                pl.BlockSpec(w2.shape, lambda n: (0, 0, 0)),          # w2 (folded)
                pl.BlockSpec((1, C), lambda n: (0, 0)),               # b2 (folded)
            ],
            out_specs=pl.BlockSpec((1, HW, C), lambda n: (n, 0, 0)),
            scratch_shapes=[pltpu.VMEM((ROWS, lanes), compute_dtype)],
        ),
        compiler_params=pltpu.CompilerParams(
            dimension_semantics=("parallel",),
            vmem_limit_bytes=_vmem_limit_bytes(),
        ),
    )(x_rows, w1, b1, w2, b2)

    return out_rows.reshape(N, H, W, C)


def res_unit_forward(x_nchw, params, compute_dtype=jnp.bfloat16, out_dtype=None,
                     stack_kw=None):
    """ResUnit forward, NCHW in / NCHW out (PyTorch layout parity)."""
    # TODO(synk): keep the surrounding model NHWC end-to-end and call
    # res_unit_forward_nhwc directly; this transpose pair is pure HBM glue.
    x_nhwc = jnp.transpose(x_nchw, (0, 2, 3, 1))
    out = res_unit_forward_nhwc(x_nhwc, params, compute_dtype=compute_dtype,
                                out_dtype=out_dtype, stack_kw=stack_kw)
    return jnp.transpose(out, (0, 3, 1, 2))


# --------------------------- Pure-JAX reference ------------------------------ #

def ref_forward(x, params):
    def cbs(h, w, b, g, be, m, v, pad):
        o = lax.conv_general_dilated(
            h, w, window_strides=(1, 1), padding=((pad, pad), (pad, pad)),
            dimension_numbers=("NCHW", "OIHW", "NCHW"))
        o = o + b[None, :, None, None]
        o = (o - m[None, :, None, None]) / jnp.sqrt(v + EPS)[None, :, None, None]
        o = o * g[None, :, None, None] + be[None, :, None, None]
        return o * jax.nn.sigmoid(o)

    h = cbs(x, params["w1"], params["b1"], params["g1"], params["be1"],
            params["m1"], params["v1"], pad=0)
    h = cbs(h, params["w2"], params["b2"], params["g2"], params["be2"],
            params["m2"], params["v2"], pad=1)
    return x + h


# ----------------------------------- Main ------------------------------------ #

if __name__ == "__main__":
    N, C, H, W = 2, 4, 16, 16
    C2 = C // 2

    keys = jax.random.split(jax.random.PRNGKey(0), 13)

    params = {
        # CBS #1: Conv2d(C, C//2, 1, 1, 0) + BatchNorm2d(C//2)
        "w1": 0.2 * jax.random.normal(keys[0], (C2, C, 1, 1), jnp.float32),
        "b1": 0.1 * jax.random.normal(keys[1], (C2,), jnp.float32),
        "g1": jax.random.uniform(keys[2], (C2,), jnp.float32, 0.5, 1.5),
        "be1": 0.1 * jax.random.normal(keys[3], (C2,), jnp.float32),
        "m1": 0.1 * jax.random.normal(keys[4], (C2,), jnp.float32),
        "v1": jax.random.uniform(keys[5], (C2,), jnp.float32, 0.5, 1.5),
        # CBS #2: Conv2d(C//2, C, 3, 1, 1) + BatchNorm2d(C)
        "w2": 0.2 * jax.random.normal(keys[6], (C, C2, 3, 3), jnp.float32),
        "b2": 0.1 * jax.random.normal(keys[7], (C,), jnp.float32),
        "g2": jax.random.uniform(keys[8], (C,), jnp.float32, 0.5, 1.5),
        "be2": 0.1 * jax.random.normal(keys[9], (C,), jnp.float32),
        "m2": 0.1 * jax.random.normal(keys[10], (C,), jnp.float32),
        "v2": jax.random.uniform(keys[11], (C,), jnp.float32, 0.5, 1.5),
    }

    x = jax.random.normal(keys[12], (N, C, H, W), jnp.float32)

    ref = jax.block_until_ready(ref_forward(x, params))

    # f32 checks of BOTH 3x3 code paths (stacked-K for v6e/v7x, 9-tap for v4/v5).
    for sk in (True, False):
        out_f32 = jax.block_until_ready(
            res_unit_forward(x, params, compute_dtype=jnp.float32, stack_kw=sk))
        assert out_f32.shape == (N, C, H, W)
        err32 = float(jnp.max(jnp.abs(out_f32 - ref)))
        assert jnp.allclose(out_f32, ref, rtol=1e-3, atol=1e-3), (sk, err32)

    # bf16 fast path (native bf16 MXU, halved HBM traffic) with the
    # generation-default 3x3 path; looser tolerance.
    out_bf16 = jax.block_until_ready(
        res_unit_forward(x, params, compute_dtype=jnp.bfloat16))
    err16 = float(jnp.max(jnp.abs(out_bf16 - ref)))
    assert jnp.allclose(out_bf16, ref, rtol=1e-1, atol=1e-1), err16

    print("KERNEL_OK")
</pallas_src>

<mosaic_0001>
module attributes {stable_mosaic.version = 11 : i64} {
  func.func @_res_unit_kernel(%arg0: i32, %arg1: memref<1x256x4xf32, #tpu.memory_space<vmem>>, %arg2: memref<4x2xf32, #tpu.memory_space<vmem>>, %arg3: memref<1x2xf32, #tpu.memory_space<vmem>>, %arg4: memref<3x6x4xf32, #tpu.memory_space<vmem>>, %arg5: memref<1x4xf32, #tpu.memory_space<vmem>>, %arg6: memref<1x256x4xf32, #tpu.memory_space<vmem>>, %arg7: memref<304x6xf32, #tpu.memory_space<vmem>>) attributes {dimension_semantics = [#tpu.dimension_semantics<parallel>], iteration_bounds = array<i64: 2>, scalar_prefetch = 0 : i64, scratch_operands = 1 : i64, tpu.core_type = #tpu.core_type<tc>, window_params = [{transform_indices = @transform_0, window_bounds = array<i64: 1, 256, 4>}, {pipeline_mode = #tpu.pipeline_mode<synchronous>, transform_indices = @transform_1, window_bounds = array<i64: 4, 2>}, {pipeline_mode = #tpu.pipeline_mode<synchronous>, transform_indices = @transform_2, window_bounds = array<i64: 1, 2>}, {pipeline_mode = #tpu.pipeline_mode<synchronous>, transform_indices = @transform_3, window_bounds = array<i64: 3, 6, 4>}, {pipeline_mode = #tpu.pipeline_mode<synchronous>, transform_indices = @transform_4, window_bounds = array<i64: 1, 4>}, {transform_indices = @transform_5, window_bounds = array<i64: 1, 256, 4>}]} {
    %c0 = arith.constant 0 : index
    %c0_0 = arith.constant 0 : index
    %c0_1 = arith.constant 0 : index
    %0 = vector.load %arg1[%c0, %c0_0, %c0_1] : memref<1x256x4xf32, #tpu.memory_space<vmem>>, vector<1x256x4xf32>
    %1 = vector.shape_cast %0 : vector<1x256x4xf32> to vector<256x4xf32>
    %c0_2 = arith.constant 0 : index
    %c0_3 = arith.constant 0 : index
    %2 = vector.load %arg2[%c0_2, %c0_3] : memref<4x2xf32, #tpu.memory_space<vmem>>, vector<4x2xf32>
    %cst = arith.constant dense<0.000000e+00> : vector<256x2xf32>
    %3 = tpu.matmul %1, %2, %cst {dimension_numbers = #tpu.dot_dimension_numbers<[1], [0], [0], [1], [0, 0, 1, 1], [], []>} : vector<256x4xf32>, vector<4x2xf32>, vector<256x2xf32> -> vector<256x2xf32>
    %c0_4 = arith.constant 0 : index
    %c0_5 = arith.constant 0 : index
    %4 = vector.load %arg3[%c0_4, %c0_5] : memref<1x2xf32, #tpu.memory_space<vmem>>, vector<1x2xf32>
    %5 = vector.broadcast %4 : vector<1x2xf32> to vector<256x2xf32>
    %6 = arith.addf %3, %5 : vector<256x2xf32>
    %7 = arith.negf %6 : vector<256x2xf32>
    %8 = math.exp %7 : vector<256x2xf32>
    %cst_6 = arith.constant 1.000000e+00 : f32
    %9 = vector.broadcast %cst_6 : f32 to vector<256x2xf32>
    %10 = arith.addf %9, %8 : vector<256x2xf32>
    %11 = arith.divf %9, %10 : vector<256x2xf32>
    %12 = arith.mulf %6, %11 : vector<256x2xf32>
    %13 = tpu.iota {dimensions = array<i32: 0>} : vector<256x1xi32>
    %c16_i32 = arith.constant 16 : i32
    %c0_i32 = arith.constant 0 : i32
    %14 = arith.cmpi eq, %c16_i32, %c0_i32 : i32
    %c1_i32 = arith.constant 1 : i32
    %15 = arith.select %14, %c1_i32, %c16_i32 : i32
    %16 = vector.broadcast %15 : i32 to vector<256x1xi32>
    %17 = arith.remsi %13, %16 : vector<256x1xi32>
    %c0_i32_7 = arith.constant 0 : i32
    %18 = vector.broadcast %c0_i32_7 : i32 to vector<256x1xi32>
    %19 = arith.cmpi ne, %17, %18 : vector<256x1xi32>
    %c0_i32_8 = arith.constant 0 : i32
    %20 = vector.broadcast %c0_i32_8 : i32 to vector<256x1xi32>
    %21 = arith.cmpi slt, %17, %20 : vector<256x1xi32>
    %c0_i32_9 = arith.constant 0 : i32
    %22 = arith.cmpi slt, %15, %c0_i32_9 : i32
    %23 = vector.broadcast %22 : i1 to vector<256x1xi1>
    %24 = vector.broadcast %23 : vector<256x1xi1> to vector<256x1xi1>
    %25 = arith.xori %21, %24 : vector<256x1xi1>
    %26 = arith.andi %25, %19 : vector<256x1xi1>
    %27 = vector.broadcast %15 : i32 to vector<256x1xi32>
    %28 = arith.addi %17, %27 : vector<256x1xi32>
    %29 = arith.select %26, %28, %17 : vector<256x1xi1>, vector<256x1xi32>
    %cst_10 = arith.constant 0.000000e+00 : f32
    %30 = vector.broadcast %cst_10 : f32 to vector<25x6xf32>
    %c0_11 = arith.constant 0 : index
    %c0_12 = arith.constant 0 : index
    %31 = vector.load %arg7[%c0_11, %c0_12] : memref<304x6xf32, #tpu.memory_space<vmem>>, vector<25x6xf32>
    tpu.vector_store %arg7[%c0_11, %c0_12], %30 {strides = array<i32>} : memref<304x6xf32, #tpu.memory_space<vmem>>, vector<25x6xf32>,
    %cst_13 = arith.constant 0.000000e+00 : f32
    %32 = vector.broadcast %cst_13 : f32 to vector<25x6xf32>
    %c279 = arith.constant 279 : index
    %c0_14 = arith.constant 0 : index
    %33 = vector.load %arg7[%c279, %c0_14] : memref<304x6xf32, #tpu.memory_space<vmem>>, vector<25x6xf32>
    tpu.vector_store %arg7[%c279, %c0_14], %32 {strides = array<i32>} : memref<304x6xf32, #tpu.memory_space<vmem>>, vector<25x6xf32>,
    %c24 = arith.constant 24 : index
    %c2 = arith.constant 2 : index
    %34 = vector.load %arg7[%c24, %c2] : memref<304x6xf32, #tpu.memory_space<vmem>>, vector<256x2xf32>
    tpu.vector_store %arg7[%c24, %c2], %12 {strides = array<i32>} : memref<304x6xf32, #tpu.memory_space<vmem>>, vector<256x2xf32>,
    %c15_i32 = arith.constant 15 : i32
    %35 = vector.broadcast %c15_i32 : i32 to vector<256x1xi32>
    %36 = arith.cmpi ne, %29, %35 : vector<256x1xi32>
    %c0_i32_15 = arith.constant 0 : i32
    %37 = arith.sitofp %c0_i32_15 : i32 to f32
    %38 = vector.shape_cast %36 : vector<256x1xi1> to vector<256x1xi1>
    %39 = vector.broadcast %38 : vector<256x1xi1> to vector<256x2xi1>
    %40 = vector.broadcast %37 : f32 to vector<256x2xf32>
    %41 = arith.select %39, %12, %40 : vector<256x2xi1>, vector<256x2xf32>
    %c25 = arith.constant 25 : index
    %c0_16 = arith.constant 0 : index
    %42 = vector.load %arg7[%c25, %c0_16] : memref<304x6xf32, #tpu.memory_space<vmem>>, vector<256x2xf32>
    tpu.vector_store %arg7[%c25, %c0_16], %41 {strides = array<i32>} : memref<304x6xf32, #tpu.memory_space<vmem>>, vector<256x2xf32>,
    %c0_i32_17 = arith.constant 0 : i32
    %43 = vector.broadcast %c0_i32_17 : i32 to vector<256x1xi32>
    %44 = arith.cmpi ne, %29, %43 : vector<256x1xi32>
    %c0_i32_18 = arith.constant 0 : i32
    %45 = arith.sitofp %c0_i32_18 : i32 to f32
    %46 = vector.shape_cast %44 : vector<256x1xi1> to vector<256x1xi1>
    %47 = vector.broadcast %46 : vector<256x1xi1> to vector<256x2xi1>
    %48 = vector.broadcast %45 : f32 to vector<256x2xf32>
    %49 = arith.select %47, %12, %48 : vector<256x2xi1>, vector<256x2xf32>
    %c23 = arith.constant 23 : index
    %c4 = arith.constant 4 : index
    %50 = vector.load %arg7[%c23, %c4] : memref<304x6xf32, #tpu.memory_space<vmem>>, vector<256x2xf32>
    tpu.vector_store %arg7[%c23, %c4], %49 {strides = array<i32>} : memref<304x6xf32, #tpu.memory_space<vmem>>, vector<256x2xf32>,
    %c8 = arith.constant 8 : index
    %c0_19 = arith.constant 0 : index
    %51 = vector.load %arg7[%c8, %c0_19] : memref<304x6xf32, #tpu.memory_space<vmem>>, vector<256x6xf32>
    %c0_20 = arith.constant 0 : index
    %c0_21 = arith.constant 0 : index
    %c0_22 = arith.constant 0 : index
    %52 = vector.load %arg4[%c0_20, %c0_21, %c0_22] : memref<3x6x4xf32, #tpu.memory_space<vmem>>, vector<1x6x4xf32>
    %53 = vector.shape_cast %52 : vector<1x6x4xf32> to vector<6x4xf32>
    %cst_23 = arith.constant dense<0.000000e+00> : vector<256x4xf32>
    %54 = tpu.matmul %51, %53, %cst_23 {dimension_numbers = #tpu.dot_dimension_numbers<[1], [0], [0], [1], [0, 0, 1, 1], [], []>} : vector<256x6xf32>, vector<6x4xf32>, vector<256x4xf32> -> vector<256x4xf32>
    %c0_24 = arith.constant 0 : index
    %c0_25 = arith.constant 0 : index
    %55 = vector.load %arg5[%c0_24, %c0_25] : memref<1x4xf32, #tpu.memory_space<vmem>>, vector<1x4xf32>
    %56 = vector.broadcast %55 : vector<1x4xf32> to vector<256x4xf32>
    %57 = arith.addf %54, %56 : vector<256x4xf32>
    %c24_26 = arith.constant 24 : index
    %c0_27 = arith.constant 0 : index
    %58 = vector.load %arg7[%c24_26, %c0_27] : memref<304x6xf32, #tpu.memory_space<vmem>>, vector<256x6xf32>
    %c1 = arith.constant 1 : index
    %c0_28 = arith.constant 0 : index
    %c0_29 = arith.constant 0 : index
    %59 = vector.load %arg4[%c1, %c0_28, %c0_29] : memref<3x6x4xf32, #tpu.memory_space<vmem>>, vector<1x6x4xf32>
    %60 = vector.shape_cast %59 : vector<1x6x4xf32> to vector<6x4xf32>
    %cst_30 = arith.constant dense<0.000000e+00> : vector<256x4xf32>
    %61 = tpu.matmul %58, %60, %cst_30 {dimension_numbers = #tpu.dot_dimension_numbers<[1], [0], [0], [1], [0, 0, 1, 1], [], []>} : vector<256x6xf32>, vector<6x4xf32>, vector<256x4xf32> -> vector<256x4xf32>
    %62 = arith.addf %57, %61 : vector<256x4xf32>
    %c40 = arith.constant 40 : index
    %c0_31 = arith.constant 0 : index
    %63 = vector.load %arg7[%c40, %c0_31] : memref<304x6xf32, #tpu.memory_space<vmem>>, vector<256x6xf32>
    %c2_32 = arith.constant 2 : index
    %c0_33 = arith.constant 0 : index
    %c0_34 = arith.constant 0 : index
    %64 = vector.load %arg4[%c2_32, %c0_33, %c0_34] : memref<3x6x4xf32, #tpu.memory_space<vmem>>, vector<1x6x4xf32>
    %65 = vector.shape_cast %64 : vector<1x6x4xf32> to vector<6x4xf32>
    %cst_35 = arith.constant dense<0.000000e+00> : vector<256x4xf32>
    %66 = tpu.matmul %63, %65, %cst_35 {dimension_numbers = #tpu.dot_dimension_numbers<[1], [0], [0], [1], [0, 0, 1, 1], [], []>} : vector<256x6xf32>, vector<6x4xf32>, vector<256x4xf32> -> vector<256x4xf32>
    %67 = arith.addf %62, %66 : vector<256x4xf32>
    %68 = arith.negf %67 : vector<256x4xf32>
    %69 = math.exp %68 : vector<256x4xf32>
    %cst_36 = arith.constant 1.000000e+00 : f32
    %70 = vector.broadcast %cst_36 : f32 to vector<256x4xf32>
    %71 = arith.addf %70, %69 : vector<256x4xf32>
    %72 = arith.divf %70, %71 : vector<256x4xf32>
    %73 = arith.mulf %67, %72 : vector<256x4xf32>
    %74 = arith.addf %1, %73 : vector<256x4xf32>
    %c0_37 = arith.constant 0 : index
    %c0_38 = arith.constant 0 : index
    %c0_39 = arith.constant 0 : index
    %75 = vector.load %arg6[%c0_37, %c0_38, %c0_39] : memref<1x256x4xf32, #tpu.memory_space<vmem>>, vector<1x256x4xf32>
    %76 = vector.shape_cast %75 : vector<1x256x4xf32> to vector<256x4xf32>
    %77 = vector.shape_cast %74 : vector<256x4xf32> to vector<1x256x4xf32>
    tpu.vector_store %arg6[%c0_37, %c0_38, %c0_39], %77 {strides = array<i32>} : memref<1x256x4xf32, #tpu.memory_space<vmem>>, vector<1x256x4xf32>,
    return
  }
  func.func @transform_0(%arg0: i32) -> (i32, i32, i32) {
    %c0_i32 = arith.constant 0 : i32
    %c0_i32_0 = arith.constant 0 : i32
    %c0_i32_1 = arith.constant 0 : i32
    return %arg0, %c0_i32, %c0_i32_0 : i32, i32, i32
  }
  func.func @transform_1(%arg0: i32) -> (i32, i32) {
    %c0_i32 = arith.constant 0 : i32
    %c0_i32_0 = arith.constant 0 : i32
    %c0_i32_1 = arith.constant 0 : i32
    return %c0_i32, %c0_i32_0 : i32, i32
  }
  func.func @transform_2(%arg0: i32) -> (i32, i32) {
    %c0_i32 = arith.constant 0 : i32
    %c0_i32_0 = arith.constant 0 : i32
    %c0_i32_1 = arith.constant 0 : i32
    return %c0_i32, %c0_i32_0 : i32, i32
  }
  func.func @transform_3(%arg0: i32) -> (i32, i32, i32) {
    %c0_i32 = arith.constant 0 : i32
    %c0_i32_0 = arith.constant 0 : i32
    %c0_i32_1 = arith.constant 0 : i32
    %c0_i32_2 = arith.constant 0 : i32
    return %c0_i32, %c0_i32_0, %c0_i32_1 : i32, i32, i32
  }
  func.func @transform_4(%arg0: i32) -> (i32, i32) {
    %c0_i32 = arith.constant 0 : i32
    %c0_i32_0 = arith.constant 0 : i32
    %c0_i32_1 = arith.constant 0 : i32
    return %c0_i32, %c0_i32_0 : i32, i32
  }
  func.func @transform_5(%arg0: i32) -> (i32, i32, i32) {
    %c0_i32 = arith.constant 0 : i32
    %c0_i32_0 = arith.constant 0 : i32
    %c0_i32_1 = arith.constant 0 : i32
    return %arg0, %c0_i32, %c0_i32_0 : i32, i32, i32
  }
}

</mosaic_0001>

<llo_original>
// kernel: res_unit_forward_nhwc.1
$region0: #{res_unit_forward_nhwc.1}
  #allocation0 [shape = 'u32[]', space=smem, size = 0x4, offset = 0x4, fixed_abs, tag = 'smem constant byte address 0x4 - core index']
  #allocation1 [shape = 'u32[144,128]{1,0:T(1,128)}', space=vmem, size = 0x12000, scoped, tag = 'internal scratch']
  #allocation2 [shape = 'f32[304,6]{1,0:T(8,128)}', space=vmem, size = 0x26000, scoped, tag = 'scratch operand']
  %s0 = inlined_call_operand.vmem [shape: f32[2,256,4], index: 0, kind: input, shape index: {}]
  %s1 = inlined_call_operand.vmem [shape: f32[4,2], index: 1, kind: input, shape index: {}]
  %s2 = inlined_call_operand.vmem [shape: f32[1,2], index: 2, kind: input, shape index: {}]
  %s3 = inlined_call_operand.vmem [shape: f32[3,6,4], index: 3, kind: input, shape index: {}]
  %s4 = inlined_call_operand.vmem [shape: f32[1,4], index: 4, kind: input, shape index: {}]
  %s5 = inlined_call_operand.vmem [shape: f32[2,256,4], index: 5, kind: output, shape index: {}]
  %s6 = sld [smem:[#allocation0]]
  $region53: #{res_unit_forward_nhwc.1} parent=0
    _
  %s8 = ssub.s32 1, %s6
  %s9 = scalar_select 0, %s8, %s6
  loop: start=0, step=1, limit=4
  $region2: #{res_unit_forward_nhwc.1} parent=0 // loop_pre_header
    _
  $region3: #{res_unit_forward_nhwc.1} parent=0 // loop_header
    %s11 = sphi 0, %s15
    %p12 = scmp.ge.s32.totalorder %s11, 4
    %s21 = sphi 0, %s23
    %s24 = sphi 0, %s21
    %s25 = sphi 0, %s24
    %s41 = sphi 0, %s25
    %s45 = sphi 0, %s45
    %s47 = sphi 0, %s45
    %s48 = sphi 0, %s47
    %s62 = sphi 0, %s48
    %s66 = sphi 0, %s66
    %s68 = sphi 0, %s66
    %s69 = sphi 0, %s68
    %s83 = sphi 0, %s69
    %s87 = sphi 0, %s87
    %s89 = sphi 0, %s87
    %s90 = sphi 0, %s89
    %s104 = sphi 0, %s90
    %s108 = sphi 0, %s108
    %s110 = sphi 0, %s108
    %s111 = sphi 0, %s110
    %s125 = sphi 0, %s111
    %s131 = sphi 0, %s133
    %s134 = sphi 0, %s131
    %s135 = sphi 0, %s134
    %s151 = sphi 0, %s135
  $region4: #{res_unit_forward_nhwc.1} parent=0 // loop_header_branch
    %14 = sbr.rel (%p12) target = $region8
  $region5: #{res_unit_forward_nhwc.1} parent=0 // loop_body
    %s16 = ssub.s32 %s11, 1
    %s17 = ssub.s32 %s11, 2
    %s18 = sadd.s32 %s11, 1
    %s19 = ssub.s32 %s11, %s18
    %p20 = scmp.eq.s32.totalorder %s19, 0
    %s22 = sadd.s32 %s21, 1
    %s23 = scalar_select %p20, %s21, %s22
    %p26 = pneg %p20
    %p27 = scmp.eq.s32.totalorder %s11, 1
    %p28 = por %p26, %p27
    %p29 = scmp.ne.s32.totalorder %s21, %s24
    %p30 = scmp.eq.s32.totalorder %s11, 0
    %p31 = por %p29, %p30
    %p32 = scmp.ne.s32.totalorder %s21, %s24
    %p33 = scmp.eq.s32.totalorder %s16, 1
    %p34 = por %p32, %p33
    %p35 = scmp.ne.s32.totalorder %s24, %s25
    %p36 = scmp.eq.s32.totalorder %s16, 0
    %p37 = por %p35, %p36
    %p38 = scmp.ne.s32.totalorder %s24, %s25
    %p39 = scmp.eq.s32.totalorder %s17, 1
    %p40 = por %p38, %p39
    %p42 = scmp.ne.s32.totalorder %s25, %s41
    %p43 = scmp.eq.s32.totalorder %s17, 0
    %p44 = por %p42, %p43
    %s46 = sadd.s32 %s45, 1
    %p49 = scmp.eq.s32.totalorder %s11, 1
    %p50 = scmp.ne.s32.totalorder %s45, %s47
    %p51 = scmp.eq.s32.totalorder %s11, 0
    %p52 = por %p50, %p51
    %p53 = scmp.ne.s32.totalorder %s45, %s47
    %p54 = scmp.eq.s32.totalorder %s16, 1
    %p55 = por %p53, %p54
    %p56 = scmp.ne.s32.totalorder %s47, %s48
    %p57 = scmp.eq.s32.totalorder %s16, 0
    %p58 = por %p56, %p57
    %p59 = scmp.ne.s32.totalorder %s47, %s48
    %p60 = scmp.eq.s32.totalorder %s17, 1
    %p61 = por %p59, %p60
    %p63 = scmp.ne.s32.totalorder %s48, %s62
    %p64 = scmp.eq.s32.totalorder %s17, 0
    %p65 = por %p63, %p64
    %s67 = sadd.s32 %s66, 1
    %p70 = scmp.eq.s32.totalorder %s11, 1
    %p71 = scmp.ne.s32.totalorder %s66, %s68
    %p72 = scmp.eq.s32.totalorder %s11, 0
    %p73 = por %p71, %p72
    %p74 = scmp.ne.s32.totalorder %s66, %s68
    %p75 = scmp.eq.s32.totalorder %s16, 1
    %p76 = por %p74, %p75
    %p77 = scmp.ne.s32.totalorder %s68, %s69
    %p78 = scmp.eq.s32.totalorder %s16, 0
    %p79 = por %p77, %p78
    %p80 = scmp.ne.s32.totalorder %s68, %s69
    %p81 = scmp.eq.s32.totalorder %s17, 1
    %p82 = por %p80, %p81
    %p84 = scmp.ne.s32.totalorder %s69, %s83
    %p85 = scmp.eq.s32.totalorder %s17, 0
    %p86 = por %p84, %p85
    %s88 = sadd.s32 %s87, 1
    %p91 = scmp.eq.s32.totalorder %s11, 1
    %p92 = scmp.ne.s32.totalorder %s87, %s89
    %p93 = scmp.eq.s32.totalorder %s11, 0
    %p94 = por %p92, %p93
    %p95 = scmp.ne.s32.totalorder %s87, %s89
    %p96 = scmp.eq.s32.totalorder %s16, 1
    %p97 = por %p95, %p96
    %p98 = scmp.ne.s32.totalorder %s89, %s90
    %p99 = scmp.eq.s32.totalorder %s16, 0
    %p100 = por %p98, %p99
    %p101 = scmp.ne.s32.totalorder %s89, %s90
    %p102 = scmp.eq.s32.totalorder %s17, 1
    %p103 = por %p101, %p102
    %p105 = scmp.ne.s32.totalorder %s90, %s104
    %p106 = scmp.eq.s32.totalorder %s17, 0
    %p107 = por %p105, %p106
    %s109 = sadd.s32 %s108, 1
    %p112 = scmp.eq.s32.totalorder %s11, 1
    %p113 = scmp.ne.s32.totalorder %s108, %s110
    %p114 = scmp.eq.s32.totalorder %s11, 0
    %p115 = por %p113, %p114
    %p116 = scmp.ne.s32.totalorder %s108, %s110
    %p117 = scmp.eq.s32.totalorder %s16, 1
    %p118 = por %p116, %p117
    %p119 = scmp.ne.s32.totalorder %s110, %s111
    %p120 = scmp.eq.s32.totalorder %s16, 0
    %p121 = por %p119, %p120
    %p122 = scmp.ne.s32.totalorder %s110, %s111
    %p123 = scmp.eq.s32.totalorder %s17, 1
    %p124 = por %p122, %p123
    %p126 = scmp.ne.s32.totalorder %s111, %s125
    %p127 = scmp.eq.s32.totalorder %s17, 0
    %p128 = por %p126, %p127
    %s129 = ssub.s32 %s11, %s18
    %p130 = scmp.eq.s32.totalorder %s129, 0
    %s132 = sadd.s32 %s131, 1
    %s133 = scalar_select %p130, %s131, %s132
    %p136 = pneg %p130
    %p137 = scmp.eq.s32.totalorder %s11, 1
    %p138 = por %p136, %p137
    %p139 = scmp.ne.s32.totalorder %s131, %s134
    %p140 = scmp.eq.s32.totalorder %s11, 0
    %p141 = por %p139, %p140
    %p142 = scmp.ne.s32.totalorder %s131, %s134
    %p143 = scmp.eq.s32.totalorder %s16, 1
    %p144 = por %p142, %p143
    %p145 = scmp.ne.s32.totalorder %s134, %s135
    %p146 = scmp.eq.s32.totalorder %s16, 0
    %p147 = por %p145, %p146
    %p148 = scmp.ne.s32.totalorder %s134, %s135
    %p149 = scmp.eq.s32.totalorder %s17, 1
    %p150 = por %p148, %p149
    %p152 = scmp.ne.s32.totalorder %s135, %s151
    %p153 = scmp.eq.s32.totalorder %s17, 0
    %p154 = por %p152, %p153
    %p155 = scmp.le.s32.totalorder 1, %s11
    %p156 = scmp.lt.s32.totalorder %s11, 3
    %p157 = pnand %p155, %p156
    %p158 = pneg %p157
    // Predicated region
    $region9: #{res_unit_forward_nhwc.1} parent=5 // pred_check
      _
    $region10: #{res_unit_forward_nhwc.1} parent=5 // pred_check_branch
      %160 = sbr.rel (%p157) target = $region12
    $region11: #{res_unit_forward_nhwc.1} parent=5 // pred_region
      %s161 = ssub.s32 %s11, 1
      // Predicated region
      $region13: #{res_unit_forward_nhwc.1} parent=11 // pred_check
        %p162 = pneg %p58
      $region14: #{res_unit_forward_nhwc.1} parent=11 // pred_check_branch
        %164 = sbr.rel (%p162) target = $region16
      $region15: #{res_unit_forward_nhwc.1} parent=11 // pred_region
        _
      $region16: #{res_unit_forward_nhwc.1} parent=11 // pred_fallthru
        _
      // Predicated region
      $region17: #{res_unit_forward_nhwc.1} parent=11 // pred_check
        %p165 = pneg %p79
      $region18: #{res_unit_forward_nhwc.1} parent=11 // pred_check_branch
        %167 = sbr.rel (%p165) target = $region20
      $region19: #{res_unit_forward_nhwc.1} parent=11 // pred_region
        _
      $region20: #{res_unit_forward_nhwc.1} parent=11 // pred_fallthru
        _
      // Predicated region
      $region21: #{res_unit_forward_nhwc.1} parent=11 // pred_check
        %p168 = pneg %p100
      $region22: #{res_unit_forward_nhwc.1} parent=11 // pred_check_branch
        %170 = sbr.rel (%p168) target = $region24
      $region23: #{res_unit_forward_nhwc.1} parent=11 // pred_region
        _
      $region24: #{res_unit_forward_nhwc.1} parent=11 // pred_fallthru
        _
      // Predicated region
      $region25: #{res_unit_forward_nhwc.1} parent=11 // pred_check
        %p171 = pneg %p121
      $region26: #{res_unit_forward_nhwc.1} parent=11 // pred_check_branch
        %173 = sbr.rel (%p171) target = $region28
      $region27: #{res_unit_forward_nhwc.1} parent=11 // pred_region
        _
      $region28: #{res_unit_forward_nhwc.1} parent=11 // pred_fallthru
        _
    $region12: #{res_unit_forward_nhwc.1} parent=5 // pred_fallthru
      _
    %p174 = scmp.lt.s32.totalorder %s11, 2
    // Predicated region
    $region29: #{res_unit_forward_nhwc.1} parent=5 // pred_check
      %p175 = pneg %p174
    $region30: #{res_unit_forward_nhwc.1} parent=5 // pred_check_branch
      %177 = sbr.rel (%p175) target = $region32
    $region31: #{res_unit_forward_nhwc.1} parent=5 // pred_region
      // Predicated region
      $region33: #{res_unit_forward_nhwc.1} parent=31 // pred_check
        %p178 = pneg %p31
      $region34: #{res_unit_forward_nhwc.1} parent=31 // pred_check_branch
        %180 = sbr.rel (%p178) target = $region36
      $region35: #{res_unit_forward_nhwc.1} parent=31 // pred_region
        %p181 = scmp.lt.s32.totalorder %s11, 1
        %s182 = scalar_select %p181, %s11, 1
        %s183 = smul.addr %s182, 32
        %s184 = smul.addr %s183, 8
        %s185 = scalar_lea.vmem %s0, %s184
      $region36: #{res_unit_forward_nhwc.1} parent=31 // pred_fallthru
        _
    $region32: #{res_unit_forward_nhwc.1} parent=5 // pred_fallthru
      _
    %p186 = scmp.le.s32.totalorder 1, %s11
    %p187 = scmp.lt.s32.totalorder %s11, 3
    %p188 = pnand %p186, %p187
    %p189 = pneg %p188
    // Predicated region
    $region37: #{res_unit_forward_nhwc.1} parent=5 // pred_check
      _
    $region38: #{res_unit_forward_nhwc.1} parent=5 // pred_check_branch
      %191 = sbr.rel (%p188) target = $region40
    $region39: #{res_unit_forward_nhwc.1} parent=5 // pred_region
      %s192 = ssub.s32 %s11, 1
      %p193 = scmp.lt.s32.totalorder %s16, 1
      %s194 = scalar_select %p193, %s16, 1
      %s195 = smul.addr %s194, 32
      %s196 = smul.addr %s195, 8
      %s197 = scalar_lea.vmem %s0, %s196
      %p198 = pneg %p37
      %p199 = pneg %p34
      %p200 = pneg %p58
      %p201 = pneg %p55
      %p202 = pneg %p79
      %p203 = pneg %p76
      %p204 = pneg %p100
      %p205 = pneg %p97
      %p206 = pneg %p121
      %p207 = pneg %p118
      %p208 = pneg %p147
      %p209 = pneg %p144
      %p210 = scmp.lt.s32.totalorder %s16, 1
      %s211 = scalar_select %p210, %s16, 1
      %s212 = smul.addr %s211, 32
      %s213 = smul.addr %s212, 8
      %s214 = scalar_lea.vmem %s5, %s213
      %p215 = scmp.lt.s32.totalorder %s16, 1
      %s216 = scalar_select %p215, %s16, 1
      %s217 = smul.addr %s216, 32
      %s218 = smul.addr %s217, 8
      %s219 = scalar_lea.vmem %s0, %s218
      %p220 = scmp.lt.s32.totalorder %s16, 1
      %s221 = scalar_select %p220, %s16, 1
      %s222 = smul.addr %s221, 32
      %s223 = smul.addr %s222, 8
      %s224 = scalar_lea.vmem %s5, %s223
      %v225 = vld [vmem:[%s219] sm:$0xff]
      %v226 = vld [vmem:[%s219 + $0x8] sm:$0xff]
      %v227 = vld [vmem:[%s219 + $0x10] sm:$0xff]
      %v228 = vld [vmem:[%s219 + $0x18] sm:$0xff]
      %v229 = vld [vmem:[%s219 + $0x20] sm:$0xff]
      %v230 = vld [vmem:[%s219 + $0x28] sm:$0xff]
      %v231 = vld [vmem:[%s219 + $0x30] sm:$0xff]
      %v232 = vld [vmem:[%s219 + $0x38] sm:$0xff]
      %v233 = vld [vmem:[%s219 + $0x40] sm:$0xff]
      %v234 = vld [vmem:[%s219 + $0x48] sm:$0xff]
      %v235 = vld [vmem:[%s219 + $0x50] sm:$0xff]
      %v236 = vld [vmem:[%s219 + $0x58] sm:$0xff]
      %v237 = vld [vmem:[%s219 + $0x60] sm:$0xff]
      %v238 = vld [vmem:[%s219 + $0x68] sm:$0xff]
      %v239 = vld [vmem:[%s219 + $0x70] sm:$0xff]
      %v240 = vld [vmem:[%s219 + $0x78] sm:$0xff]
      %v241 = vld [vmem:[%s219 + $0x80] sm:$0xff]
      %v242 = vld [vmem:[%s219 + $0x88] sm:$0xff]
      %v243 = vld [vmem:[%s219 + $0x90] sm:$0xff]
      %v244 = vld [vmem:[%s219 + $0x98] sm:$0xff]
      %v245 = vld [vmem:[%s219 + $0xa0] sm:$0xff]
      %v246 = vld [vmem:[%s219 + $0xa8] sm:$0xff]
      %v247 = vld [vmem:[%s219 + $0xb0] sm:$0xff]
      %v248 = vld [vmem:[%s219 + $0xb8] sm:$0xff]
      %v249 = vld [vmem:[%s219 + $0xc0] sm:$0xff]
      %v250 = vld [vmem:[%s219 + $0xc8] sm:$0xff]
      %v251 = vld [vmem:[%s219 + $0xd0] sm:$0xff]
      %v252 = vld [vmem:[%s219 + $0xd8] sm:$0xff]
      %v253 = vld [vmem:[%s219 + $0xe0] sm:$0xff]
      %v254 = vld [vmem:[%s219 + $0xe8] sm:$0xff]
      %v255 = vld [vmem:[%s219 + $0xf0] sm:$0xff]
      %v256 = vld [vmem:[%s219 + $0xf8] sm:$0xff]
      %v257 = vld [vmem:[%s1] sm:$0xf]
      %v258 = vld [vmem:[%s2] sm:$0x1]
      %v260 = vlaneseq
      %v261 = vshrl.u32 %v260, 7
      %v262 = vsub.s32 0, %v261
      %v263 = vrot.slane %v258, %v262
      %vm265 = vcmask 31744
      %v267 = vsel %vm265, %v225, 0
      %v270 = vsel %vm265, %v226, 0
      %v273 = vsel %vm265, %v227, 0
      %v276 = vsel %vm265, %v228, 0
      %v279 = vsel %vm265, %v229, 0
      %v282 = vsel %vm265, %v230, 0
      %v285 = vsel %vm265, %v231, 0
      %v288 = vsel %vm265, %v232, 0
      %v291 = vsel %vm265, %v233, 0
      %v294 = vsel %vm265, %v234, 0
      %v297 = vsel %vm265, %v235, 0
      %v300 = vsel %vm265, %v236, 0
      %v303 = vsel %vm265, %v237, 0
      %v306 = vsel %vm265, %v238, 0
      %v309 = vsel %vm265, %v239, 0
      %v312 = vsel %vm265, %v240, 0
      %v315 = vsel %vm265, %v241, 0
      %v318 = vsel %vm265, %v242, 0
      %v321 = vsel %vm265, %v243, 0
      %v324 = vsel %vm265, %v244, 0
      %v327 = vsel %vm265, %v245, 0
      %v330 = vsel %vm265, %v246, 0
      %v333 = vsel %vm265, %v247, 0
      %v336 = vsel %vm265, %v248, 0
      %v339 = vsel %vm265, %v249, 0
      %v342 = vsel %vm265, %v250, 0
      %v345 = vsel %vm265, %v251, 0
      %v348 = vsel %vm265, %v252, 0
      %v351 = vsel %vm265, %v253, 0
      %v354 = vsel %vm265, %v254, 0
      %v357 = vsel %vm265, %v255, 0
      %v360 = vsel %vm265, %v256, 0
      %vm362 = vcmask 1043456
      %v364 = vsel %vm362, %v257, 0
      %366 = vmatprep.subr.mxu0 0.0
      %367 = vmatpush1.msra.mxu0 %v364
      %368 = vmatprep.subr.mxu0 0.0
      %369 = vmatpush1.msra.mxu0 0.0
      %370 = vmatprep.subr.mxu0 0.0
      %371 = vmatpush1.msra.mxu0 0.0
      %372 = vmatprep.subr.mxu0 0.0
      %373 = vmatpush1.msra.mxu0 0.0
      %374 = vmatprep.subr.mxu0 0.0
      %375 = vmatpush1.msra.mxu0 0.0
      %376 = vmatprep.subr.mxu0 0.0
      %377 = vmatpush1.msra.mxu0 0.0
      %378 = vmatprep.subr.mxu0 0.0
      %379 = vmatpush1.msra.mxu0 0.0
      %380 = vmatprep.subr.mxu0 0.0
      %381 = vmatpush1.msra.mxu0 0.0
      %382 = vmatprep.subr.mxu0 0.0
      %383 = vmatpush1.msra.mxu0 0.0
      %384 = vmatprep.subr.mxu0 0.0
      %385 = vmatpush1.msra.mxu0 0.0
      %386 = vmatprep.subr.mxu0 0.0
      %387 = vmatpush1.msra.mxu0 0.0
      %388 = vmatprep.subr.mxu0 0.0
      %389 = vmatpush1.msra.mxu0 0.0
      %390 = vmatprep.subr.mxu0 0.0
      %391 = vmatpush1.msra.mxu0 0.0
      %392 = vmatprep.subr.mxu0 0.0
      %393 = vmatpush1.msra.mxu0 0.0
      %394 = vmatprep.subr.mxu0 0.0
      %395 = vmatpush1.msra.mxu0 0.0
      %396 = vmatprep.subr.mxu0 0.0
      %397 = vmatpush1.msra.mxu0 0.0
      %398 = vmatprep.subr.mxu0 0.0
      %399 = vmatpush1.msra.mxu0 0.0
      %400 = vmatprep.subr.mxu0 0.0
      %401 = vmatpush1.msra.mxu0 0.0
      %402 = vmatprep.subr.mxu0 0.0
      %403 = vmatpush1.msra.mxu0 0.0
      %404 = vmatprep.subr.mxu0 0.0
      %405 = vmatpush1.msra.mxu0 0.0
      %406 = vmatprep.subr.mxu0 0.0
      %407 = vmatpush1.msra.mxu0 0.0
      %408 = vmatprep.subr.mxu0 0.0
      %409 = vmatpush1.msra.mxu0 0.0
      %410 = vmatprep.subr.mxu0 0.0
      %411 = vmatpush1.msra.mxu0 0.0
      %412 = vmatprep.subr.mxu0 0.0
      %413 = vmatpush1.msra.mxu0 0.0
      %414 = vmatprep.subr.mxu0 0.0
      %415 = vmatpush1.msra.mxu0 0.0
      %416 = vmatprep.subr.mxu0 0.0
      %417 = vmatpush1.msra.mxu0 0.0
      %418 = vmatprep.subr.mxu0 0.0
      %419 = vmatpush1.msra.mxu0 0.0
      %420 = vmatprep.subr.mxu0 0.0
      %421 = vmatpush1.msra.mxu0 0.0
      %422 = vmatprep.subr.mxu0 0.0
      %423 = vmatpush1.msra.mxu0 0.0
      %424 = vmatprep.subr.mxu0 0.0
      %425 = vmatpush1.msra.mxu0 0.0
      %426 = vmatprep.subr.mxu0 0.0
      %427 = vmatpush1.msra.mxu0 0.0
      %428 = vmatprep.subr.mxu0 0.0
      %429 = vmatpush1.msra.mxu0 0.0
      %430 = vmatprep.mubr.f32.mxu0 0.0
      %431 = vmatmul.mubr.f32.gmra.mrb[0].mxu0 %v267
      %v432 = vpop.f32.mrb[0].mxu0
      %v433 = vadd.f32 %v263, %v432
      %v434 = vpop.f32.mrb[0].mxu0
      %435 = vmatprep.mubr.f32.mxu0 0.0
      %436 = vmatmul.mubr.f32.gmra.mrb[0].mxu0 %v270
      %v437 = vpop.f32.mrb[0].mxu0
      %v438 = vadd.f32 %v263, %v437
      %v439 = vpop.f32.mrb[0].mxu0
      %440 = vmatprep.mubr.f32.mxu0 0.0
      %441 = vmatmul.mubr.f32.gmra.mrb[0].mxu0 %v273
      %v442 = vpop.f32.mrb[0].mxu0
      %v443 = vadd.f32 %v263, %v442
      %v444 = vpop.f32.mrb[0].mxu0
      %445 = vmatprep.mubr.f32.mxu0 0.0
      %446 = vmatmul.mubr.f32.gmra.mrb[0].mxu0 %v276
      %v447 = vpop.f32.mrb[0].mxu0
      %v448 = vadd.f32 %v263, %v447
      %v449 = vpop.f32.mrb[0].mxu0
      %450 = vmatprep.mubr.f32.mxu0 0.0
      %451 = vmatmul.mubr.f32.gmra.mrb[0].mxu0 %v279
      %v452 = vpop.f32.mrb[0].mxu0
      %v453 = vadd.f32 %v263, %v452
      %v454 = vpop.f32.mrb[0].mxu0
      %455 = vmatprep.mubr.f32.mxu0 0.0
      %456 = vmatmul.mubr.f32.gmra.mrb[0].mxu0 %v282
      %v457 = vpop.f32.mrb[0].mxu0
      %v458 = vadd.f32 %v263, %v457
      %v459 = vpop.f32.mrb[0].mxu0
      %460 = vmatprep.mubr.f32.mxu0 0.0
      %461 = vmatmul.mubr.f32.gmra.mrb[0].mxu0 %v285
      %v462 = vpop.f32.mrb[0].mxu0
      %v463 = vadd.f32 %v263, %v462
      %v464 = vpop.f32.mrb[0].mxu0
      %465 = vmatprep.mubr.f32.mxu0 0.0
      %466 = vmatmul.mubr.f32.gmra.mrb[0].mxu0 %v288
      %v467 = vpop.f32.mrb[0].mxu0
      %v468 = vadd.f32 %v263, %v467
      %v469 = vpop.f32.mrb[0].mxu0
      %470 = vmatprep.mubr.f32.mxu0 0.0
      %471 = vmatmul.mubr.f32.gmra.mrb[0].mxu0 %v291
      %v472 = vpop.f32.mrb[0].mxu0
      %v473 = vadd.f32 %v263, %v472
      %v474 = vpop.f32.mrb[0].mxu0
      %475 = vmatprep.mubr.f32.mxu0 0.0
      %476 = vmatmul.mubr.f32.gmra.mrb[0].mxu0 %v294
      %v477 = vpop.f32.mrb[0].mxu0
      %v478 = vadd.f32 %v263, %v477
      %v479 = vpop.f32.mrb[0].mxu0
      %480 = vmatprep.mubr.f32.mxu0 0.0
      %481 = vmatmul.mubr.f32.gmra.mrb[0].mxu0 %v297
      %v482 = vpop.f32.mrb[0].mxu0
      %v483 = vadd.f32 %v263, %v482
      %v484 = vpop.f32.mrb[0].mxu0
      %485 = vmatprep.mubr.f32.mxu0 0.0
      %486 = vmatmul.mubr.f32.gmra.mrb[0].mxu0 %v300
      %v487 = vpop.f32.mrb[0].mxu0
      %v488 = vadd.f32 %v263, %v487
      %v489 = vpop.f32.mrb[0].mxu0
      %490 = vmatprep.mubr.f32.mxu0 0.0
      %491 = vmatmul.mubr.f32.gmra.mrb[0].mxu0 %v303
      %v492 = vpop.f32.mrb[0].mxu0
      %v493 = vadd.f32 %v263, %v492
      %v494 = vpop.f32.mrb[0].mxu0
      %495 = vmatprep.mubr.f32.mxu0 0.0
      %496 = vmatmul.mubr.f32.gmra.mrb[0].mxu0 %v306
      %v497 = vpop.f32.mrb[0].mxu0
      %v498 = vadd.f32 %v263, %v497
      %v499 = vpop.f32.mrb[0].mxu0
      %500 = vmatprep.mubr.f32.mxu0 0.0
      %501 = vmatmul.mubr.f32.gmra.mrb[0].mxu0 %v309
      %v502 = vpop.f32.mrb[0].mxu0
      %v503 = vadd.f32 %v263, %v502
      %v504 = vpop.f32.mrb[0].mxu0
      %505 = vmatprep.mubr.f32.mxu0 0.0
      %506 = vmatmul.mubr.f32.gmra.mrb[0].mxu0 %v312
      %v507 = vpop.f32.mrb[0].mxu0
      %v508 = vadd.f32 %v263, %v507
      %v509 = vpop.f32.mrb[0].mxu0
      %510 = vmatprep.mubr.f32.mxu0 0.0
      %511 = vmatmul.mubr.f32.gmra.mrb[0].mxu0 %v315
      %v512 = vpop.f32.mrb[0].mxu0
      %v513 = vadd.f32 %v263, %v512
      %v514 = vpop.f32.mrb[0].mxu0
      %515 = vmatprep.mubr.f32.mxu0 0.0
      %516 = vmatmul.mubr.f32.gmra.mrb[0].mxu0 %v318
      %v517 = vpop.f32.mrb[0].mxu0
      %v518 = vadd.f32 %v263, %v517
      %v519 = vpop.f32.mrb[0].mxu0
      %520 = vmatprep.mubr.f32.mxu0 0.0
      %521 = vmatmul.mubr.f32.gmra.mrb[0].mxu0 %v321
      %v522 = vpop.f32.mrb[0].mxu0
      %v523 = vadd.f32 %v263, %v522
      %v524 = vpop.f32.mrb[0].mxu0
      %525 = vmatprep.mubr.f32.mxu0 0.0
      %526 = vmatmul.mubr.f32.gmra.mrb[0].mxu0 %v324
      %v527 = vpop.f32.mrb[0].mxu0
      %v528 = vadd.f32 %v263, %v527
      %v529 = vpop.f32.mrb[0].mxu0
      %530 = vmatprep.mubr.f32.mxu0 0.0
      %531 = vmatmul.mubr.f32.gmra.mrb[0].mxu0 %v327
      %v532 = vpop.f32.mrb[0].mxu0
      %v533 = vadd.f32 %v263, %v532
      %v534 = vpop.f32.mrb[0].mxu0
      %535 = vmatprep.mubr.f32.mxu0 0.0
      %536 = vmatmul.mubr.f32.gmra.mrb[0].mxu0 %v330
      %v537 = vpop.f32.mrb[0].mxu0
      %v538 = vadd.f32 %v263, %v537
      %v539 = vpop.f32.mrb[0].mxu0
      %540 = vmatprep.mubr.f32.mxu0 0.0
      %541 = vmatmul.mubr.f32.gmra.mrb[0].mxu0 %v333
      %v542 = vpop.f32.mrb[0].mxu0
      %v543 = vadd.f32 %v263, %v542
      %v544 = vpop.f32.mrb[0].mxu0
      %545 = vmatprep.mubr.f32.mxu0 0.0
      %546 = vmatmul.mubr.f32.gmra.mrb[0].mxu0 %v336
      %v547 = vpop.f32.mrb[0].mxu0
      %v548 = vadd.f32 %v263, %v547
      %v549 = vpop.f32.mrb[0].mxu0
      %550 = vmatprep.mubr.f32.mxu0 0.0
      %551 = vmatmul.mubr.f32.gmra.mrb[0].mxu0 %v339
      %v552 = vpop.f32.mrb[0].mxu0
      %v553 = vadd.f32 %v263, %v552
      %v554 = vpop.f32.mrb[0].mxu0
      %555 = vmatprep.mubr.f32.mxu0 0.0
      %556 = vmatmul.mubr.f32.gmra.mrb[0].mxu0 %v342
      %v557 = vpop.f32.mrb[0].mxu0
      %v558 = vadd.f32 %v263, %v557
      %v559 = vpop.f32.mrb[0].mxu0
      %560 = vmatprep.mubr.f32.mxu0 0.0
      %561 = vmatmul.mubr.f32.gmra.mrb[0].mxu0 %v345
      %v562 = vpop.f32.mrb[0].mxu0
      %v563 = vadd.f32 %v263, %v562
      %v564 = vpop.f32.mrb[0].mxu0
      %565 = vmatprep.mubr.f32.mxu0 0.0
      %566 = vmatmul.mubr.f32.gmra.mrb[0].mxu0 %v348
      %v567 = vpop.f32.mrb[0].mxu0
      %v568 = vadd.f32 %v263, %v567
      %v569 = vpop.f32.mrb[0].mxu0
      %570 = vmatprep.mubr.f32.mxu0 0.0
      %571 = vmatmul.mubr.f32.gmra.mrb[0].mxu0 %v351
      %v572 = vpop.f32.mrb[0].mxu0
      %v573 = vadd.f32 %v263, %v572
      %v574 = vpop.f32.mrb[0].mxu0
      %575 = vmatprep.mubr.f32.mxu0 0.0
      %576 = vmatmul.mubr.f32.gmra.mrb[0].mxu0 %v354
      %v577 = vpop.f32.mrb[0].mxu0
      %v578 = vadd.f32 %v263, %v577
      %v579 = vpop.f32.mrb[0].mxu0
      %580 = vmatprep.mubr.f32.mxu0 0.0
      %581 = vmatmul.mubr.f32.gmra.mrb[0].mxu0 %v357
      %v582 = vpop.f32.mrb[0].mxu0
      %v583 = vadd.f32 %v263, %v582
      %v584 = vpop.f32.mrb[0].mxu0
      %585 = vmatprep.mubr.f32.mxu0 0.0
      %586 = vmatmul.mubr.f32.gmra.mrb[0].mxu0 %v360
      %v587 = vpop.f32.mrb[0].mxu0
      %v588 = vadd.f32 %v263, %v587
      %v589 = vpop.f32.mrb[0].mxu0
      %590 = vdwg.mxu0
      %v591 = vxor.u32 %v433, 2147483648
      %v592 = vxor.u32 %v438, 2147483648
      %v593 = vxor.u32 %v443, 2147483648
      %v594 = vxor.u32 %v448, 2147483648
      %v595 = vxor.u32 %v453, 2147483648
      %v596 = vxor.u32 %v458, 2147483648
      %v597 = vxor.u32 %v463, 2147483648
      %v598 = vxor.u32 %v468, 2147483648
      %v599 = vxor.u32 %v473, 2147483648
      %v600 = vxor.u32 %v478, 2147483648
      %v601 = vxor.u32 %v483, 2147483648
      %v602 = vxor.u32 %v488, 2147483648
      %v603 = vxor.u32 %v493, 2147483648
      %v604 = vxor.u32 %v498, 2147483648
      %v605 = vxor.u32 %v503, 2147483648
      %v606 = vxor.u32 %v508, 2147483648
      %v607 = vxor.u32 %v513, 2147483648
      %v608 = vxor.u32 %v518, 2147483648
      %v609 = vxor.u32 %v523, 2147483648
      %v610 = vxor.u32 %v528, 2147483648
      %v611 = vxor.u32 %v533, 2147483648
      %v612 = vxor.u32 %v538, 2147483648
      %v613 = vxor.u32 %v543, 2147483648
      %v614 = vxor.u32 %v548, 2147483648
      %v615 = vxor.u32 %v553, 2147483648
      %v616 = vxor.u32 %v558, 2147483648
      %v617 = vxor.u32 %v563, 2147483648
      %v618 = vxor.u32 %v568, 2147483648
      %v619 = vxor.u32 %v573, 2147483648
      %v620 = vxor.u32 %v578, 2147483648
      %v621 = vxor.u32 %v583, 2147483648
      %v622 = vxor.u32 %v588, 2147483648
      %v623 = vmul.f32 %v591, 1.442695
      %v624 = vpow.pop %v623
      %v625 = vmul.f32 %v592, 1.442695
      %v626 = vpow.pop %v625
      %v627 = vmul.f32 %v593, 1.442695
      %v628 = vpow.pop %v627
      %v629 = vmul.f32 %v594, 1.442695
      %v630 = vpow.pop %v629
      %v631 = vmul.f32 %v595, 1.442695
      %v632 = vpow.pop %v631
      %v633 = vmul.f32 %v596, 1.442695
      %v634 = vpow.pop %v633
      %v635 = vmul.f32 %v597, 1.442695
      %v636 = vpow.pop %v635
      %v637 = vmul.f32 %v598, 1.442695
      %v638 = vpow.pop %v637
      %v639 = vmul.f32 %v599, 1.442695
      %v640 = vpow.pop %v639
      %v641 = vmul.f32 %v600, 1.442695
      %v642 = vpow.pop %v641
      %v643 = vmul.f32 %v601, 1.442695
      %v644 = vpow.pop %v643
      %v645 = vmul.f32 %v602, 1.442695
      %v646 = vpow.pop %v645
      %v647 = vmul.f32 %v603, 1.442695
      %v648 = vpow.pop %v647
      %v649 = vmul.f32 %v604, 1.442695
      %v650 = vpow.pop %v649
      %v651 = vmul.f32 %v605, 1.442695
      %v652 = vpow.pop %v651
      %v653 = vmul.f32 %v606, 1.442695
      %v654 = vpow.pop %v653
      %v655 = vmul.f32 %v607, 1.442695
      %v656 = vpow.pop %v655
      %v657 = vmul.f32 %v608, 1.442695
      %v658 = vpow.pop %v657
      %v659 = vmul.f32 %v609, 1.442695
      %v660 = vpow.pop %v659
      %v661 = vmul.f32 %v610, 1.442695
      %v662 = vpow.pop %v661
      %v663 = vmul.f32 %v611, 1.442695
      %v664 = vpow.pop %v663
      %v665 = vmul.f32 %v612, 1.442695
      %v666 = vpow.pop %v665
      %v667 = vmul.f32 %v613, 1.442695
      %v668 = vpow.pop %v667
      %v669 = vmul.f32 %v614, 1.442695
      %v670 = vpow.pop %v669
      %v671 = vmul.f32 %v615, 1.442695
      %v672 = vpow.pop %v671
      %v673 = vmul.f32 %v616, 1.442695
      %v674 = vpow.pop %v673
      %v675 = vmul.f32 %v617, 1.442695
      %v676 = vpow.pop %v675
      %v677 = vmul.f32 %v618, 1.442695
      %v678 = vpow.pop %v677
      %v679 = vmul.f32 %v619, 1.442695
      %v680 = vpow.pop %v679
      %v681 = vmul.f32 %v620, 1.442695
      %v682 = vpow.pop %v681
      %v683 = vmul.f32 %v621, 1.442695
      %v684 = vpow.pop %v683
      %v685 = vmul.f32 %v622, 1.442695
      %v686 = vpow.pop %v685
      %v687 = vadd.f32 %v624, 1.0
      %v688 = vadd.f32 %v626, 1.0
      %v689 = vadd.f32 %v628, 1.0
      %v690 = vadd.f32 %v630, 1.0
      %v691 = vadd.f32 %v632, 1.0
      %v692 = vadd.f32 %v634, 1.0
      %v693 = vadd.f32 %v636, 1.0
      %v694 = vadd.f32 %v638, 1.0
      %v695 = vadd.f32 %v640, 1.0
      %v696 = vadd.f32 %v642, 1.0
      %v697 = vadd.f32 %v644, 1.0
      %v698 = vadd.f32 %v646, 1.0
      %v699 = vadd.f32 %v648, 1.0
      %v700 = vadd.f32 %v650, 1.0
      %v701 = vadd.f32 %v652, 1.0
      %v702 = vadd.f32 %v654, 1.0
      %v703 = vadd.f32 %v656, 1.0
      %v704 = vadd.f32 %v658, 1.0
      %v705 = vadd.f32 %v660, 1.0
      %v706 = vadd.f32 %v662, 1.0
      %v707 = vadd.f32 %v664, 1.0
      %v708 = vadd.f32 %v666, 1.0
      %v709 = vadd.f32 %v668, 1.0
      %v710 = vadd.f32 %v670, 1.0
      %v711 = vadd.f32 %v672, 1.0
      %v712 = vadd.f32 %v674, 1.0
      %v713 = vadd.f32 %v676, 1.0
      %v714 = vadd.f32 %v678, 1.0
      %v715 = vadd.f32 %v680, 1.0
      %v716 = vadd.f32 %v682, 1.0
      %v717 = vadd.f32 %v684, 1.0
      %v718 = vadd.f32 %v686, 1.0
      %v719 = vrcp.pop %v687
      %v720 = vmul.f32 1.0, %v719
      %v721 = vrcp.pop %v688
      %v722 = vmul.f32 1.0, %v721
      %v723 = vrcp.pop %v689
      %v724 = vmul.f32 1.0, %v723
      %v725 = vrcp.pop %v690
      %v726 = vmul.f32 1.0, %v725
      %v727 = vrcp.pop %v691
      %v728 = vmul.f32 1.0, %v727
      %v729 = vrcp.pop %v692
      %v730 = vmul.f32 1.0, %v729
      %v731 = vrcp.pop %v693
      %v732 = vmul.f32 1.0, %v731
      %v733 = vrcp.pop %v694
      %v734 = vmul.f32 1.0, %v733
      %v735 = vrcp.pop %v695
      %v736 = vmul.f32 1.0, %v735
      %v737 = vrcp.pop %v696
      %v738 = vmul.f32 1.0, %v737
      %v739 = vrcp.pop %v697
      %v740 = vmul.f32 1.0, %v739
      %v741 = vrcp.pop %v698
      %v742 = vmul.f32 1.0, %v741
      %v743 = vrcp.pop %v699
      %v744 = vmul.f32 1.0, %v743
      %v745 = vrcp.pop %v700
      %v746 = vmul.f32 1.0, %v745
      %v747 = vrcp.pop %v701
      %v748 = vmul.f32 1.0, %v747
      %v749 = vrcp.pop %v702
      %v750 = vmul.f32 1.0, %v749
      %v751 = vrcp.pop %v703
      %v752 = vmul.f32 1.0, %v751
      %v753 = vrcp.pop %v704
      %v754 = vmul.f32 1.0, %v753
      %v755 = vrcp.pop %v705
      %v756 = vmul.f32 1.0, %v755
      %v757 = vrcp.pop %v706
      %v758 = vmul.f32 1.0, %v757
      %v759 = vrcp.pop %v707
      %v760 = vmul.f32 1.0, %v759
      %v761 = vrcp.pop %v708
      %v762 = vmul.f32 1.0, %v761
      %v763 = vrcp.pop %v709
      %v764 = vmul.f32 1.0, %v763
      %v765 = vrcp.pop %v710
      %v766 = vmul.f32 1.0, %v765
      %v767 = vrcp.pop %v711
      %v768 = vmul.f32 1.0, %v767
      %v769 = vrcp.pop %v712
      %v770 = vmul.f32 1.0, %v769
      %v771 = vrcp.pop %v713
      %v772 = vmul.f32 1.0, %v771
      %v773 = vrcp.pop %v714
      %v774 = vmul.f32 1.0, %v773
      %v775 = vrcp.pop %v715
      %v776 = vmul.f32 1.0, %v775
      %v777 = vrcp.pop %v716
      %v778 = vmul.f32 1.0, %v777
      %v779 = vrcp.pop %v717
      %v780 = vmul.f32 1.0, %v779
      %v781 = vrcp.pop %v718
      %v782 = vmul.f32 1.0, %v781
      %v783 = vmul.f32 %v433, %v720
      %v784 = vmul.f32 %v438, %v722
      %v785 = vmul.f32 %v443, %v724
      %v786 = vmul.f32 %v448, %v726
      %v787 = vmul.f32 %v453, %v728
      %v788 = vmul.f32 %v458, %v730
      %v789 = vmul.f32 %v463, %v732
      %v790 = vmul.f32 %v468, %v734
      %v791 = vmul.f32 %v473, %v736
      %v792 = vmul.f32 %v478, %v738
      %v793 = vmul.f32 %v483, %v740
      %v794 = vmul.f32 %v488, %v742
      %v795 = vmul.f32 %v493, %v744
      %v796 = vmul.f32 %v498, %v746
      %v797 = vmul.f32 %v503, %v748
      %v798 = vmul.f32 %v508, %v750
      %v799 = vmul.f32 %v513, %v752
      %v800 = vmul.f32 %v518, %v754
      %v801 = vmul.f32 %v523, %v756
      %v802 = vmul.f32 %v528, %v758
      %v803 = vmul.f32 %v533, %v760
      %v804 = vmul.f32 %v538, %v762
      %v805 = vmul.f32 %v543, %v764
      %v806 = vmul.f32 %v548, %v766
      %v807 = vmul.f32 %v553, %v768
      %v808 = vmul.f32 %v558, %v770
      %v809 = vmul.f32 %v563, %v772
      %v810 = vmul.f32 %v568, %v774
      %v811 = vmul.f32 %v573, %v776
      %v812 = vmul.f32 %v578, %v778
      %v813 = vmul.f32 %v583, %v780
      %v814 = vmul.f32 %v588, %v782
      %v815 = vlaneseq
      %v816 = vshrl.u32 %v815, 7
      %v817 = vadd.s32 %v816, 8
      %v818 = vadd.s32 %v816, 16
      %v819 = vadd.s32 %v816, 24
      %v820 = vadd.s32 %v816, 32
      %v821 = vadd.s32 %v816, 40
      %v822 = vadd.s32 %v816, 48
      %v823 = vadd.s32 %v816, 56
      %v824 = vadd.s32 %v816, 64
      %v825 = vadd.s32 %v816, 72
      %v826 = vadd.s32 %v816, 80
      %v827 = vadd.s32 %v816, 88
      %v828 = vadd.s32 %v816, 96
      %v829 = vadd.s32 %v816, 104
      %v830 = vadd.s32 %v816, 112
      %v831 = vadd.s32 %v816, 120
      %v832 = vadd.s32 %v816, 128
      %v833 = vadd.s32 %v816, 136
      %v834 = vadd.s32 %v816, 144
      %v835 = vadd.s32 %v816, 152
      %v836 = vadd.s32 %v816, 160
      %v837 = vadd.s32 %v816, 168
      %v838 = vadd.s32 %v816, 176
      %v839 = vadd.s32 %v816, 184
      %v840 = vadd.s32 %v816, 192
      %v841 = vadd.s32 %v816, 200
      %v842 = vadd.s32 %v816, 208
      %v843 = vadd.s32 %v816, 216
      %v844 = vadd.s32 %v816, 224
      %v845 = vadd.s32 %v816, 232
      %v846 = vadd.s32 %v816, 240
      %v847 = vadd.s32 %v816, 248
      %vm848 = vcmp.lt.s32.totalorder %v816, 0
      %v849 = vsub.s32 0, %v816
      %v850 = vsel %vm848, %v849, %v816
      %v851 = vshrl.u32 %v850, 4
      %v852 = vand.u32 %v850, 15
      %v853 = vsub.s32 0, %v852
      %v854 = vsel %vm848, %v853, %v852
      %vm855 = vcmp.lt.s32.totalorder %v817, 0
      %v856 = vsub.s32 0, %v817
      %v857 = vsel %vm855, %v856, %v817
      %v858 = vshrl.u32 %v857, 4
      %v859 = vand.u32 %v857, 15
      %v860 = vsub.s32 0, %v859
      %v861 = vsel %vm855, %v860, %v859
      %vm862 = vcmp.lt.s32.totalorder %v818, 0
      %v863 = vsub.s32 0, %v818
      %v864 = vsel %vm862, %v863, %v818
      %v865 = vshrl.u32 %v864, 4
      %v866 = vand.u32 %v864, 15
      %v867 = vsub.s32 0, %v866
      %v868 = vsel %vm862, %v867, %v866
      %vm869 = vcmp.lt.s32.totalorder %v819, 0
      %v870 = vsub.s32 0, %v819
      %v871 = vsel %vm869, %v870, %v819
      %v872 = vshrl.u32 %v871, 4
      %v873 = vand.u32 %v871, 15
      %v874 = vsub.s32 0, %v873
      %v875 = vsel %vm869, %v874, %v873
      %vm876 = vcmp.lt.s32.totalorder %v820, 0
      %v877 = vsub.s32 0, %v820
      %v878 = vsel %vm876, %v877, %v820
      %v879 = vshrl.u32 %v878, 4
      %v880 = vand.u32 %v878, 15
      %v881 = vsub.s32 0, %v880
      %v882 = vsel %vm876, %v881, %v880
      %vm883 = vcmp.lt.s32.totalorder %v821, 0
      %v884 = vsub.s32 0, %v821
      %v885 = vsel %vm883, %v884, %v821
      %v886 = vshrl.u32 %v885, 4
      %v887 = vand.u32 %v885, 15
      %v888 = vsub.s32 0, %v887
      %v889 = vsel %vm883, %v888, %v887
      %vm890 = vcmp.lt.s32.totalorder %v822, 0
      %v891 = vsub.s32 0, %v822
      %v892 = vsel %vm890, %v891, %v822
      %v893 = vshrl.u32 %v892, 4
      %v894 = vand.u32 %v892, 15
      %v895 = vsub.s32 0, %v894
      %v896 = vsel %vm890, %v895, %v894
      %vm897 = vcmp.lt.s32.totalorder %v823, 0
      %v898 = vsub.s32 0, %v823
      %v899 = vsel %vm897, %v898, %v823
      %v900 = vshrl.u32 %v899, 4
      %v901 = vand.u32 %v899, 15
      %v902 = vsub.s32 0, %v901
      %v903 = vsel %vm897, %v902, %v901
      %vm904 = vcmp.lt.s32.totalorder %v824, 0
      %v905 = vsub.s32 0, %v824
      %v906 = vsel %vm904, %v905, %v824
      %v907 = vshrl.u32 %v906, 4
      %v908 = vand.u32 %v906, 15
      %v909 = vsub.s32 0, %v908
      %v910 = vsel %vm904, %v909, %v908
      %vm911 = vcmp.lt.s32.totalorder %v825, 0
      %v912 = vsub.s32 0, %v825
      %v913 = vsel %vm911, %v912, %v825
      %v914 = vshrl.u32 %v913, 4
      %v915 = vand.u32 %v913, 15
      %v916 = vsub.s32 0, %v915
      %v917 = vsel %vm911, %v916, %v915
      %vm918 = vcmp.lt.s32.totalorder %v826, 0
      %v919 = vsub.s32 0, %v826
      %v920 = vsel %vm918, %v919, %v826
      %v921 = vshrl.u32 %v920, 4
      %v922 = vand.u32 %v920, 15
      %v923 = vsub.s32 0, %v922
      %v924 = vsel %vm918, %v923, %v922
      %vm925 = vcmp.lt.s32.totalorder %v827, 0
      %v926 = vsub.s32 0, %v827
      %v927 = vsel %vm925, %v926, %v827
      %v928 = vshrl.u32 %v927, 4
      %v929 = vand.u32 %v927, 15
      %v930 = vsub.s32 0, %v929
      %v931 = vsel %vm925, %v930, %v929
      %vm932 = vcmp.lt.s32.totalorder %v828, 0
      %v933 = vsub.s32 0, %v828
      %v934 = vsel %vm932, %v933, %v828
      %v935 = vshrl.u32 %v934, 4
      %v936 = vand.u32 %v934, 15
      %v937 = vsub.s32 0, %v936
      %v938 = vsel %vm932, %v937, %v936
      %vm939 = vcmp.lt.s32.totalorder %v829, 0
      %v940 = vsub.s32 0, %v829
      %v941 = vsel %vm939, %v940, %v829
      %v942 = vshrl.u32 %v941, 4
      %v943 = vand.u32 %v941, 15
      %v944 = vsub.s32 0, %v943
      %v945 = vsel %vm939, %v944, %v943
      %vm946 = vcmp.lt.s32.totalorder %v830, 0
      %v947 = vsub.s32 0, %v830
      %v948 = vsel %vm946, %v947, %v830
      %v949 = vshrl.u32 %v948, 4
      %v950 = vand.u32 %v948, 15
      %v951 = vsub.s32 0, %v950
      %v952 = vsel %vm946, %v951, %v950
      %vm953 = vcmp.lt.s32.totalorder %v831, 0
      %v954 = vsub.s32 0, %v831
      %v955 = vsel %vm953, %v954, %v831
      %v956 = vshrl.u32 %v955, 4
      %v957 = vand.u32 %v955, 15
      %v958 = vsub.s32 0, %v957
      %v959 = vsel %vm953, %v958, %v957
      %vm960 = vcmp.lt.s32.totalorder %v832, 0
      %v961 = vsub.s32 0, %v832
      %v962 = vsel %vm960, %v961, %v832
      %v963 = vshrl.u32 %v962, 4
      %v964 = vand.u32 %v962, 15
      %v965 = vsub.s32 0, %v964
      %v966 = vsel %vm960, %v965, %v964
      %vm967 = vcmp.lt.s32.totalorder %v833, 0
      %v968 = vsub.s32 0, %v833
      %v969 = vsel %vm967, %v968, %v833
      %v970 = vshrl.u32 %v969, 4
      %v971 = vand.u32 %v969, 15
      %v972 = vsub.s32 0, %v971
      %v973 = vsel %vm967, %v972, %v971
      %vm974 = vcmp.lt.s32.totalorder %v834, 0
      %v975 = vsub.s32 0, %v834
      %v976 = vsel %vm974, %v975, %v834
      %v977 = vshrl.u32 %v976, 4
      %v978 = vand.u32 %v976, 15
      %v979 = vsub.s32 0, %v978
      %v980 = vsel %vm974, %v979, %v978
      %vm981 = vcmp.lt.s32.totalorder %v835, 0
      %v982 = vsub.s32 0, %v835
      %v983 = vsel %vm981, %v982, %v835
      %v984 = vshrl.u32 %v983, 4
      %v985 = vand.u32 %v983, 15
      %v986 = vsub.s32 0, %v985
      %v987 = vsel %vm981, %v986, %v985
      %vm988 = vcmp.lt.s32.totalorder %v836, 0
      %v989 = vsub.s32 0, %v836
      %v990 = vsel %vm988, %v989, %v836
      %v991 = vshrl.u32 %v990, 4
      %v992 = vand.u32 %v990, 15
      %v993 = vsub.s32 0, %v992
      %v994 = vsel %vm988, %v993, %v992
      %vm995 = vcmp.lt.s32.totalorder %v837, 0
      %v996 = vsub.s32 0, %v837
      %v997 = vsel %vm995, %v996, %v837
      %v998 = vshrl.u32 %v997, 4
      %v999 = vand.u32 %v997, 15
      %v1000 = vsub.s32 0, %v999
      %v1001 = vsel %vm995, %v1000, %v999
      %vm1002 = vcmp.lt.s32.totalorder %v838, 0
      %v1003 = vsub.s32 0, %v838
      %v1004 = vsel %vm1002, %v1003, %v838
      %v1005 = vshrl.u32 %v1004, 4
      %v1006 = vand.u32 %v1004, 15
      %v1007 = vsub.s32 0, %v1006
      %v1008 = vsel %vm1002, %v1007, %v1006
      %vm1009 = vcmp.lt.s32.totalorder %v839, 0
      %v1010 = vsub.s32 0, %v839
      %v1011 = vsel %vm1009, %v1010, %v839
      %v1012 = vshrl.u32 %v1011, 4
      %v1013 = vand.u32 %v1011, 15
      %v1014 = vsub.s32 0, %v1013
      %v1015 = vsel %vm1009, %v1014, %v1013
      %vm1016 = vcmp.lt.s32.totalorder %v840, 0
      %v1017 = vsub.s32 0, %v840
      %v1018 = vsel %vm1016, %v1017, %v840
      %v1019 = vshrl.u32 %v1018, 4
      %v1020 = vand.u32 %v1018, 15
      %v1021 = vsub.s32 0, %v1020
      %v1022 = vsel %vm1016, %v1021, %v1020
      %vm1023 = vcmp.lt.s32.totalorder %v841, 0
      %v1024 = vsub.s32 0, %v841
      %v1025 = vsel %vm1023, %v1024, %v841
      %v1026 = vshrl.u32 %v1025, 4
      %v1027 = vand.u32 %v1025, 15
      %v1028 = vsub.s32 0, %v1027
      %v1029 = vsel %vm1023, %v1028, %v1027
      %vm1030 = vcmp.lt.s32.totalorder %v842, 0
      %v1031 = vsub.s32 0, %v842
      %v1032 = vsel %vm1030, %v1031, %v842
      %v1033 = vshrl.u32 %v1032, 4
      %v1034 = vand.u32 %v1032, 15
      %v1035 = vsub.s32 0, %v1034
      %v1036 = vsel %vm1030, %v1035, %v1034
      %vm1037 = vcmp.lt.s32.totalorder %v843, 0
      %v1038 = vsub.s32 0, %v843
      %v1039 = vsel %vm1037, %v1038, %v843
      %v1040 = vshrl.u32 %v1039, 4
      %v1041 = vand.u32 %v1039, 15
      %v1042 = vsub.s32 0, %v1041
      %v1043 = vsel %vm1037, %v1042, %v1041
      %vm1044 = vcmp.lt.s32.totalorder %v844, 0
      %v1045 = vsub.s32 0, %v844
      %v1046 = vsel %vm1044, %v1045, %v844
      %v1047 = vshrl.u32 %v1046, 4
      %v1048 = vand.u32 %v1046, 15
      %v1049 = vsub.s32 0, %v1048
      %v1050 = vsel %vm1044, %v1049, %v1048
      %vm1051 = vcmp.lt.s32.totalorder %v845, 0
      %v1052 = vsub.s32 0, %v845
      %v1053 = vsel %vm1051, %v1052, %v845
      %v1054 = vshrl.u32 %v1053, 4
      %v1055 = vand.u32 %v1053, 15
      %v1056 = vsub.s32 0, %v1055
      %v1057 = vsel %vm1051, %v1056, %v1055
      %vm1058 = vcmp.lt.s32.totalorder %v846, 0
      %v1059 = vsub.s32 0, %v846
      %v1060 = vsel %vm1058, %v1059, %v846
      %v1061 = vshrl.u32 %v1060, 4
      %v1062 = vand.u32 %v1060, 15
      %v1063 = vsub.s32 0, %v1062
      %v1064 = vsel %vm1058, %v1063, %v1062
      %vm1065 = vcmp.lt.s32.totalorder %v847, 0
      %v1066 = vsub.s32 0, %v847
      %v1067 = vsel %vm1065, %v1066, %v847
      %v1068 = vshrl.u32 %v1067, 4
      %v1069 = vand.u32 %v1067, 15
      %v1070 = vsub.s32 0, %v1069
      %v1071 = vsel %vm1065, %v1070, %v1069
      %vm1072 = vcmp.ne.s32.totalorder %v854, 0
      %vm1073 = vcmp.ne.s32.totalorder %v861, 0
      %vm1074 = vcmp.ne.s32.totalorder %v868, 0
      %vm1075 = vcmp.ne.s32.totalorder %v875, 0
      %vm1076 = vcmp.ne.s32.totalorder %v882, 0
      %vm1077 = vcmp.ne.s32.totalorder %v889, 0
      %vm1078 = vcmp.ne.s32.totalorder %v896, 0
      %vm1079 = vcmp.ne.s32.totalorder %v903, 0
      %vm1080 = vcmp.ne.s32.totalorder %v910, 0
      %vm1081 = vcmp.ne.s32.totalorder %v917, 0
      %vm1082 = vcmp.ne.s32.totalorder %v924, 0
      %vm1083 = vcmp.ne.s32.totalorder %v931, 0
      %vm1084 = vcmp.ne.s32.totalorder %v938, 0
      %vm1085 = vcmp.ne.s32.totalorder %v945, 0
      %vm1086 = vcmp.ne.s32.totalorder %v952, 0
      %vm1087 = vcmp.ne.s32.totalorder %v959, 0
      %vm1088 = vcmp.ne.s32.totalorder %v966, 0
      %vm1089 = vcmp.ne.s32.totalorder %v973, 0
      %vm1090 = vcmp.ne.s32.totalorder %v980, 0
      %vm1091 = vcmp.ne.s32.totalorder %v987, 0
      %vm1092 = vcmp.ne.s32.totalorder %v994, 0
      %vm1093 = vcmp.ne.s32.totalorder %v1001, 0
      %vm1094 = vcmp.ne.s32.totalorder %v1008, 0
      %vm1095 = vcmp.ne.s32.totalorder %v1015, 0
      %vm1096 = vcmp.ne.s32.totalorder %v1022, 0
      %vm1097 = vcmp.ne.s32.totalorder %v1029, 0
      %vm1098 = vcmp.ne.s32.totalorder %v1036, 0
      %vm1099 = vcmp.ne.s32.totalorder %v1043, 0
      %vm1100 = vcmp.ne.s32.totalorder %v1050, 0
      %vm1101 = vcmp.ne.s32.totalorder %v1057, 0
      %vm1102 = vcmp.ne.s32.totalorder %v1064, 0
      %vm1103 = vcmp.ne.s32.totalorder %v1071, 0
      %vm1104 = vcmp.lt.s32.totalorder %v854, 0
      %vm1105 = vcmp.lt.s32.totalorder %v861, 0
      %vm1106 = vcmp.lt.s32.totalorder %v868, 0
      %vm1107 = vcmp.lt.s32.totalorder %v875, 0
      %vm1108 = vcmp.lt.s32.totalorder %v882, 0
      %vm1109 = vcmp.lt.s32.totalorder %v889, 0
      %vm1110 = vcmp.lt.s32.totalorder %v896, 0
      %vm1111 = vcmp.lt.s32.totalorder %v903, 0
      %vm1112 = vcmp.lt.s32.totalorder %v910, 0
      %vm1113 = vcmp.lt.s32.totalorder %v917, 0
      %vm1114 = vcmp.lt.s32.totalorder %v924, 0
      %vm1115 = vcmp.lt.s32.totalorder %v931, 0
      %vm1116 = vcmp.lt.s32.totalorder %v938, 0
      %vm1117 = vcmp.lt.s32.totalorder %v945, 0
      %vm1118 = vcmp.lt.s32.totalorder %v952, 0
      %vm1119 = vcmp.lt.s32.totalorder %v959, 0
      %vm1120 = vcmp.lt.s32.totalorder %v966, 0
      %vm1121 = vcmp.lt.s32.totalorder %v973, 0
      %vm1122 = vcmp.lt.s32.totalorder %v980, 0
      %vm1123 = vcmp.lt.s32.totalorder %v987, 0
      %vm1124 = vcmp.lt.s32.totalorder %v994, 0
      %vm1125 = vcmp.lt.s32.totalorder %v1001, 0
      %vm1126 = vcmp.lt.s32.totalorder %v1008, 0
      %vm1127 = vcmp.lt.s32.totalorder %v1015, 0
      %vm1128 = vcmp.lt.s32.totalorder %v1022, 0
      %vm1129 = vcmp.lt.s32.totalorder %v1029, 0
      %vm1130 = vcmp.lt.s32.totalorder %v1036, 0
      %vm1131 = vcmp.lt.s32.totalorder %v1043, 0
      %vm1132 = vcmp.lt.s32.totalorder %v1050, 0
      %vm1133 = vcmp.lt.s32.totalorder %v1057, 0
      %vm1134 = vcmp.lt.s32.totalorder %v1064, 0
      %vm1135 = vcmp.lt.s32.totalorder %v1071, 0
      %vm1136 = vmand %vm1104, %vm1072
      %vm1137 = vmand %vm1105, %vm1073
      %vm1138 = vmand %vm1106, %vm1074
      %vm1139 = vmand %vm1107, %vm1075
      %vm1140 = vmand %vm1108, %vm1076
      %vm1141 = vmand %vm1109, %vm1077
      %vm1142 = vmand %vm1110, %vm1078
      %vm1143 = vmand %vm1111, %vm1079
      %vm1144 = vmand %vm1112, %vm1080
      %vm1145 = vmand %vm1113, %vm1081
      %vm1146 = vmand %vm1114, %vm1082
      %vm1147 = vmand %vm1115, %vm1083
      %vm1148 = vmand %vm1116, %vm1084
      %vm1149 = vmand %vm1117, %vm1085
      %vm1150 = vmand %vm1118, %vm1086
      %vm1151 = vmand %vm1119, %vm1087
      %vm1152 = vmand %vm1120, %vm1088
      %vm1153 = vmand %vm1121, %vm1089
      %vm1154 = vmand %vm1122, %vm1090
      %vm1155 = vmand %vm1123, %vm1091
      %vm1156 = vmand %vm1124, %vm1092
      %vm1157 = vmand %vm1125, %vm1093
      %vm1158 = vmand %vm1126, %vm1094
      %vm1159 = vmand %vm1127, %vm1095
      %vm1160 = vmand %vm1128, %vm1096
      %vm1161 = vmand %vm1129, %vm1097
      %vm1162 = vmand %vm1130, %vm1098
      %vm1163 = vmand %vm1131, %vm1099
      %vm1164 = vmand %vm1132, %vm1100
      %vm1165 = vmand %vm1133, %vm1101
      %vm1166 = vmand %vm1134, %vm1102
      %vm1167 = vmand %vm1135, %vm1103
      %v1168 = vadd.s32 %v854, 16
      %v1169 = vadd.s32 %v861, 16
      %v1170 = vadd.s32 %v868, 16
      %v1171 = vadd.s32 %v875, 16
      %v1172 = vadd.s32 %v882, 16
      %v1173 = vadd.s32 %v889, 16
      %v1174 = vadd.s32 %v896, 16
      %v1175 = vadd.s32 %v903, 16
      %v1176 = vadd.s32 %v910, 16
      %v1177 = vadd.s32 %v917, 16
      %v1178 = vadd.s32 %v924, 16
      %v1179 = vadd.s32 %v931, 16
      %v1180 = vadd.s32 %v938, 16
      %v1181 = vadd.s32 %v945, 16
      %v1182 = vadd.s32 %v952, 16
      %v1183 = vadd.s32 %v959, 16
      %v1184 = vadd.s32 %v966, 16
      %v1185 = vadd.s32 %v973, 16
      %v1186 = vadd.s32 %v980, 16
      %v1187 = vadd.s32 %v987, 16
      %v1188 = vadd.s32 %v994, 16
      %v1189 = vadd.s32 %v1001, 16
      %v1190 = vadd.s32 %v1008, 16
      %v1191 = vadd.s32 %v1015, 16
      %v1192 = vadd.s32 %v1022, 16
      %v1193 = vadd.s32 %v1029, 16
      %v1194 = vadd.s32 %v1036, 16
      %v1195 = vadd.s32 %v1043, 16
      %v1196 = vadd.s32 %v1050, 16
      %v1197 = vadd.s32 %v1057, 16
      %v1198 = vadd.s32 %v1064, 16
      %v1199 = vadd.s32 %v1071, 16
      %v1200 = vsel %vm1136, %v1168, %v854
      %v1201 = vsel %vm1137, %v1169, %v861
      %v1202 = vsel %vm1138, %v1170, %v868
      %v1203 = vsel %vm1139, %v1171, %v875
      %v1204 = vsel %vm1140, %v1172, %v882
      %v1205 = vsel %vm1141, %v1173, %v889
      %v1206 = vsel %vm1142, %v1174, %v896
      %v1207 = vsel %vm1143, %v1175, %v903
      %v1208 = vsel %vm1144, %v1176, %v910
      %v1209 = vsel %vm1145, %v1177, %v917
      %v1210 = vsel %vm1146, %v1178, %v924
      %v1211 = vsel %vm1147, %v1179, %v931
      %v1212 = vsel %vm1148, %v1180, %v938
      %v1213 = vsel %vm1149, %v1181, %v945
      %v1214 = vsel %vm1150, %v1182, %v952
      %v1215 = vsel %vm1151, %v1183, %v959
      %v1216 = vsel %vm1152, %v1184, %v966
      %v1217 = vsel %vm1153, %v1185, %v973
      %v1218 = vsel %vm1154, %v1186, %v980
      %v1219 = vsel %vm1155, %v1187, %v987
      %v1220 = vsel %vm1156, %v1188, %v994
      %v1221 = vsel %vm1157, %v1189, %v1001
      %v1222 = vsel %vm1158, %v1190, %v1008
      %v1223 = vsel %vm1159, %v1191, %v1015
      %v1224 = vsel %vm1160, %v1192, %v1022
      %v1225 = vsel %vm1161, %v1193, %v1029
      %v1226 = vsel %vm1162, %v1194, %v1036
      %v1227 = vsel %vm1163, %v1195, %v1043
      %v1228 = vsel %vm1164, %v1196, %v1050
      %v1229 = vsel %vm1165, %v1197, %v1057
      %v1230 = vsel %vm1166, %v1198, %v1064
      %v1231 = vsel %vm1167, %v1199, %v1071
      %vm1232 = vcmask 48128
      %1233 = vst.msk [vmem:[#allocation2] sm:$0xff] %vm1232, 0.0
      %1234 = vst.msk [vmem:[#allocation2 + $0x8] sm:$0xff] %vm1232, 0.0
      %1235 = vst.msk [vmem:[#allocation2 + $0x10] sm:$0xff] %vm1232, 0.0
      %vm1236 = vcmask 40960
      %1237 = vst.msk [vmem:[#allocation2 + $0x18] sm:$0x1] %vm1236, 0.0
      %1238 = vst.msk [vmem:[#allocation2 + $0x117] sm:$0xff] %vm1232, 0.0
      %1239 = vst.msk [vmem:[#allocation2 + $0x11f] sm:$0xff] %vm1232, 0.0
      %1240 = vst.msk [vmem:[#allocation2 + $0x127] sm:$0xff] %vm1232, 0.0
      %1241 = vst.msk [vmem:[#allocation2 + $0x12f] sm:$0x1] %vm1236, 0.0
      %1274 = vrot.lane.b32.xlu0 %v783, 2
      %v1275 = vpop.permute.xlu0 %1274
      %1276 = vrot.lane.b32.xlu0 %v784, 2
      %v1277 = vpop.permute.xlu0 %1276
      %1278 = vrot.lane.b32.xlu0 %v785, 2
      %v1279 = vpop.permute.xlu0 %1278
      %1280 = vrot.lane.b32.xlu0 %v786, 2
      %v1281 = vpop.permute.xlu0 %1280
      %1282 = vrot.lane.b32.xlu0 %v787, 2
      %v1283 = vpop.permute.xlu0 %1282
      %1284 = vrot.lane.b32.xlu0 %v788, 2
      %v1285 = vpop.permute.xlu0 %1284
      %1286 = vrot.lane.b32.xlu0 %v789, 2
      %v1287 = vpop.permute.xlu0 %1286
      %1288 = vrot.lane.b32.xlu0 %v790, 2
      %v1289 = vpop.permute.xlu0 %1288
      %1290 = vrot.lane.b32.xlu0 %v791, 2
      %v1291 = vpop.permute.xlu0 %1290
      %1292 = vrot.lane.b32.xlu0 %v792, 2
      %v1293 = vpop.permute.xlu0 %1292
      %1294 = vrot.lane.b32.xlu0 %v793, 2
      %v1295 = vpop.permute.xlu0 %1294
      %1296 = vrot.lane.b32.xlu0 %v794, 2
      %v1297 = vpop.permute.xlu0 %1296
      %1298 = vrot.lane.b32.xlu0 %v795, 2
      %v1299 = vpop.permute.xlu0 %1298
      %1300 = vrot.lane.b32.xlu0 %v796, 2
      %v1301 = vpop.permute.xlu0 %1300
      %1302 = vrot.lane.b32.xlu0 %v797, 2
      %v1303 = vpop.permute.xlu0 %1302
      %1304 = vrot.lane.b32.xlu0 %v798, 2
      %v1305 = vpop.permute.xlu0 %1304
      %1306 = vrot.lane.b32.xlu0 %v799, 2
      %v1307 = vpop.permute.xlu0 %1306
      %1308 = vrot.lane.b32.xlu0 %v800, 2
      %v1309 = vpop.permute.xlu0 %1308
      %1310 = vrot.lane.b32.xlu0 %v801, 2
      %v1311 = vpop.permute.xlu0 %1310
      %1312 = vrot.lane.b32.xlu0 %v802, 2
      %v1313 = vpop.permute.xlu0 %1312
      %1314 = vrot.lane.b32.xlu0 %v803, 2
      %v1315 = vpop.permute.xlu0 %1314
      %1316 = vrot.lane.b32.xlu0 %v804, 2
      %v1317 = vpop.permute.xlu0 %1316
      %1318 = vrot.lane.b32.xlu0 %v805, 2
      %v1319 = vpop.permute.xlu0 %1318
      %1320 = vrot.lane.b32.xlu0 %v806, 2
      %v1321 = vpop.permute.xlu0 %1320
      %1322 = vrot.lane.b32.xlu0 %v807, 2
      %v1323 = vpop.permute.xlu0 %1322
      %1324 = vrot.lane.b32.xlu0 %v808, 2
      %v1325 = vpop.permute.xlu0 %1324
      %1326 = vrot.lane.b32.xlu0 %v809, 2
      %v1327 = vpop.permute.xlu0 %1326
      %1328 = vrot.lane.b32.xlu0 %v810, 2
      %v1329 = vpop.permute.xlu0 %1328
      %1330 = vrot.lane.b32.xlu0 %v811, 2
      %v1331 = vpop.permute.xlu0 %1330
      %1332 = vrot.lane.b32.xlu0 %v812, 2
      %v1333 = vpop.permute.xlu0 %1332
      %1334 = vrot.lane.b32.xlu0 %v813, 2
      %v1335 = vpop.permute.xlu0 %1334
      %1336 = vrot.lane.b32.xlu0 %v814, 2
      %v1337 = vpop.permute.xlu0 %1336
      %vm1370 = vcmask 31760
      %1371 = vst.msk [vmem:[#allocation2 + $0x18] sm:$0xff] %vm1370, %v1275
      %1372 = vst.msk [vmem:[#allocation2 + $0x20] sm:$0xff] %vm1370, %v1277
      %1373 = vst.msk [vmem:[#allocation2 + $0x28] sm:$0xff] %vm1370, %v1279
      %1374 = vst.msk [vmem:[#allocation2 + $0x30] sm:$0xff] %vm1370, %v1281
      %1375 = vst.msk [vmem:[#allocation2 + $0x38] sm:$0xff] %vm1370, %v1283
      %1376 = vst.msk [vmem:[#allocation2 + $0x40] sm:$0xff] %vm1370, %v1285
      %1377 = vst.msk [vmem:[#allocation2 + $0x48] sm:$0xff] %vm1370, %v1287
      %1378 = vst.msk [vmem:[#allocation2 + $0x50] sm:$0xff] %vm1370, %v1289
      %1379 = vst.msk [vmem:[#allocation2 + $0x58] sm:$0xff] %vm1370, %v1291
      %1380 = vst.msk [vmem:[#allocation2 + $0x60] sm:$0xff] %vm1370, %v1293
      %1381 = vst.msk [vmem:[#allocation2 + $0x68] sm:$0xff] %vm1370, %v1295
      %1382 = vst.msk [vmem:[#allocation2 + $0x70] sm:$0xff] %vm1370, %v1297
      %1383 = vst.msk [vmem:[#allocation2 + $0x78] sm:$0xff] %vm1370, %v1299
      %1384 = vst.msk [vmem:[#allocation2 + $0x80] sm:$0xff] %vm1370, %v1301
      %1385 = vst.msk [vmem:[#allocation2 + $0x88] sm:$0xff] %vm1370, %v1303
      %1386 = vst.msk [vmem:[#allocation2 + $0x90] sm:$0xff] %vm1370, %v1305
      %1387 = vst.msk [vmem:[#allocation2 + $0x98] sm:$0xff] %vm1370, %v1307
      %1388 = vst.msk [vmem:[#allocation2 + $0xa0] sm:$0xff] %vm1370, %v1309
      %1389 = vst.msk [vmem:[#allocation2 + $0xa8] sm:$0xff] %vm1370, %v1311
      %1390 = vst.msk [vmem:[#allocation2 + $0xb0] sm:$0xff] %vm1370, %v1313
      %1391 = vst.msk [vmem:[#allocation2 + $0xb8] sm:$0xff] %vm1370, %v1315
      %1392 = vst.msk [vmem:[#allocation2 + $0xc0] sm:$0xff] %vm1370, %v1317
      %1393 = vst.msk [vmem:[#allocation2 + $0xc8] sm:$0xff] %vm1370, %v1319
      %1394 = vst.msk [vmem:[#allocation2 + $0xd0] sm:$0xff] %vm1370, %v1321
      %1395 = vst.msk [vmem:[#allocation2 + $0xd8] sm:$0xff] %vm1370, %v1323
      %1396 = vst.msk [vmem:[#allocation2 + $0xe0] sm:$0xff] %vm1370, %v1325
      %1397 = vst.msk [vmem:[#allocation2 + $0xe8] sm:$0xff] %vm1370, %v1327
      %1398 = vst.msk [vmem:[#allocation2 + $0xf0] sm:$0xff] %vm1370, %v1329
      %1399 = vst.msk [vmem:[#allocation2 + $0xf8] sm:$0xff] %vm1370, %v1331
      %1400 = vst.msk [vmem:[#allocation2 + $0x100] sm:$0xff] %vm1370, %v1333
      %1401 = vst.msk [vmem:[#allocation2 + $0x108] sm:$0xff] %vm1370, %v1335
      %1402 = vst.msk [vmem:[#allocation2 + $0x110] sm:$0xff] %vm1370, %v1337
      %vm1403 = vcmp.ne.s32.totalorder %v1200, 15
      %vm1404 = vcmp.ne.s32.totalorder %v1201, 15
      %vm1405 = vcmp.ne.s32.totalorder %v1202, 15
      %vm1406 = vcmp.ne.s32.totalorder %v1203, 15
      %vm1407 = vcmp.ne.s32.totalorder %v1204, 15
      %vm1408 = vcmp.ne.s32.totalorder %v1205, 15
      %vm1409 = vcmp.ne.s32.totalorder %v1206, 15
      %vm1410 = vcmp.ne.s32.totalorder %v1207, 15
      %vm1411 = vcmp.ne.s32.totalorder %v1208, 15
      %vm1412 = vcmp.ne.s32.totalorder %v1209, 15
      %vm1413 = vcmp.ne.s32.totalorder %v1210, 15
      %vm1414 = vcmp.ne.s32.totalorder %v1211, 15
      %vm1415 = vcmp.ne.s32.totalorder %v1212, 15
      %vm1416 = vcmp.ne.s32.totalorder %v1213, 15
      %vm1417 = vcmp.ne.s32.totalorder %v1214, 15
      %vm1418 = vcmp.ne.s32.totalorder %v1215, 15
      %vm1419 = vcmp.ne.s32.totalorder %v1216, 15
      %vm1420 = vcmp.ne.s32.totalorder %v1217, 15
      %vm1421 = vcmp.ne.s32.totalorder %v1218, 15
      %vm1422 = vcmp.ne.s32.totalorder %v1219, 15
      %vm1423 = vcmp.ne.s32.totalorder %v1220, 15
      %vm1424 = vcmp.ne.s32.totalorder %v1221, 15
      %vm1425 = vcmp.ne.s32.totalorder %v1222, 15
      %vm1426 = vcmp.ne.s32.totalorder %v1223, 15
      %vm1427 = vcmp.ne.s32.totalorder %v1224, 15
      %vm1428 = vcmp.ne.s32.totalorder %v1225, 15
      %vm1429 = vcmp.ne.s32.totalorder %v1226, 15
      %vm1430 = vcmp.ne.s32.totalorder %v1227, 15
      %vm1431 = vcmp.ne.s32.totalorder %v1228, 15
      %vm1432 = vcmp.ne.s32.totalorder %v1229, 15
      %vm1433 = vcmp.ne.s32.totalorder %v1230, 15
      %vm1434 = vcmp.ne.s32.totalorder %v1231, 15
      %v1435 = vsel %vm1403, 1, 0
      %v1436 = vsel %vm1404, 1, 0
      %v1437 = vsel %vm1405, 1, 0
      %v1438 = vsel %vm1406, 1, 0
      %v1439 = vsel %vm1407, 1, 0
      %v1440 = vsel %vm1408, 1, 0
      %v1441 = vsel %vm1409, 1, 0
      %v1442 = vsel %vm1410, 1, 0
      %v1443 = vsel %vm1411, 1, 0
      %v1444 = vsel %vm1412, 1, 0
      %v1445 = vsel %vm1413, 1, 0
      %v1446 = vsel %vm1414, 1, 0
      %v1447 = vsel %vm1415, 1, 0
      %v1448 = vsel %vm1416, 1, 0
      %v1449 = vsel %vm1417, 1, 0
      %v1450 = vsel %vm1418, 1, 0
      %v1451 = vsel %vm1419, 1, 0
      %v1452 = vsel %vm1420, 1, 0
      %v1453 = vsel %vm1421, 1, 0
      %v1454 = vsel %vm1422, 1, 0
      %v1455 = vsel %vm1423, 1, 0
      %v1456 = vsel %vm1424, 1, 0
      %v1457 = vsel %vm1425, 1, 0
      %v1458 = vsel %vm1426, 1, 0
      %v1459 = vsel %vm1427, 1, 0
      %v1460 = vsel %vm1428, 1, 0
      %v1461 = vsel %vm1429, 1, 0
      %v1462 = vsel %vm1430, 1, 0
      %v1463 = vsel %vm1431, 1, 0
      %v1464 = vsel %vm1432, 1, 0
      %v1465 = vsel %vm1433, 1, 0
      %v1466 = vsel %vm1434, 1, 0
      %vm1467 = vcmp.eq.s32.totalorder %v1435, 1
      %vm1468 = vcmp.eq.s32.totalorder %v1436, 1
      %vm1469 = vcmp.eq.s32.totalorder %v1437, 1
      %vm1470 = vcmp.eq.s32.totalorder %v1438, 1
      %vm1471 = vcmp.eq.s32.totalorder %v1439, 1
      %vm1472 = vcmp.eq.s32.totalorder %v1440, 1
      %vm1473 = vcmp.eq.s32.totalorder %v1441, 1
      %vm1474 = vcmp.eq.s32.totalorder %v1442, 1
      %vm1475 = vcmp.eq.s32.totalorder %v1443, 1
      %vm1476 = vcmp.eq.s32.totalorder %v1444, 1
      %vm1477 = vcmp.eq.s32.totalorder %v1445, 1
      %vm1478 = vcmp.eq.s32.totalorder %v1446, 1
      %vm1479 = vcmp.eq.s32.totalorder %v1447, 1
      %vm1480 = vcmp.eq.s32.totalorder %v1448, 1
      %vm1481 = vcmp.eq.s32.totalorder %v1449, 1
      %vm1482 = vcmp.eq.s32.totalorder %v1450, 1
      %vm1483 = vcmp.eq.s32.totalorder %v1451, 1
      %vm1484 = vcmp.eq.s32.totalorder %v1452, 1
      %vm1485 = vcmp.eq.s32.totalorder %v1453, 1
      %vm1486 = vcmp.eq.s32.totalorder %v1454, 1
      %vm1487 = vcmp.eq.s32.totalorder %v1455, 1
      %vm1488 = vcmp.eq.s32.totalorder %v1456, 1
      %vm1489 = vcmp.eq.s32.totalorder %v1457, 1
      %vm1490 = vcmp.eq.s32.totalorder %v1458, 1
      %vm1491 = vcmp.eq.s32.totalorder %v1459, 1
      %vm1492 = vcmp.eq.s32.totalorder %v1460, 1
      %vm1493 = vcmp.eq.s32.totalorder %v1461, 1
      %vm1494 = vcmp.eq.s32.totalorder %v1462, 1
      %vm1495 = vcmp.eq.s32.totalorder %v1463, 1
      %vm1496 = vcmp.eq.s32.totalorder %v1464, 1
      %vm1497 = vcmp.eq.s32.totalorder %v1465, 1
      %vm1498 = vcmp.eq.s32.totalorder %v1466, 1
      %v1499 = vsel %vm1467, %v783, 0.0
      %v1500 = vsel %vm1468, %v784, 0.0
      %v1501 = vsel %vm1469, %v785, 0.0
      %v1502 = vsel %vm1470, %v786, 0.0
      %v1503 = vsel %vm1471, %v787, 0.0
      %v1504 = vsel %vm1472, %v788, 0.0
      %v1505 = vsel %vm1473, %v789, 0.0
      %v1506 = vsel %vm1474, %v790, 0.0
      %v1507 = vsel %vm1475, %v791, 0.0
      %v1508 = vsel %vm1476, %v792, 0.0
      %v1509 = vsel %vm1477, %v793, 0.0
      %v1510 = vsel %vm1478, %v794, 0.0
      %v1511 = vsel %vm1479, %v795, 0.0
      %v1512 = vsel %vm1480, %v796, 0.0
      %v1513 = vsel %vm1481, %v797, 0.0
      %v1514 = vsel %vm1482, %v798, 0.0
      %v1515 = vsel %vm1483, %v799, 0.0
      %v1516 = vsel %vm1484, %v800, 0.0
      %v1517 = vsel %vm1485, %v801, 0.0
      %v1518 = vsel %vm1486, %v802, 0.0
      %v1519 = vsel %vm1487, %v803, 0.0
      %v1520 = vsel %vm1488, %v804, 0.0
      %v1521 = vsel %vm1489, %v805, 0.0
      %v1522 = vsel %vm1490, %v806, 0.0
      %v1523 = vsel %vm1491, %v807, 0.0
      %v1524 = vsel %vm1492, %v808, 0.0
      %v1525 = vsel %vm1493, %v809, 0.0
      %v1526 = vsel %vm1494, %v810, 0.0
      %v1527 = vsel %vm1495, %v811, 0.0
      %v1528 = vsel %vm1496, %v812, 0.0
      %v1529 = vsel %vm1497, %v813, 0.0
      %v1530 = vsel %vm1498, %v814, 0.0
      %vm1531 = vcmask 15360
      %1532 = vst.msk [vmem:[#allocation2 + $0x19] sm:$0xff] %vm1531, %v1499
      %1533 = vst.msk [vmem:[#allocation2 + $0x21] sm:$0xff] %vm1531, %v1500
      %1534 = vst.msk [vmem:[#allocation2 + $0x29] sm:$0xff] %vm1531, %v1501
      %1535 = vst.msk [vmem:[#allocation2 + $0x31] sm:$0xff] %vm1531, %v1502
      %1536 = vst.msk [vmem:[#allocation2 + $0x39] sm:$0xff] %vm1531, %v1503
      %1537 = vst.msk [vmem:[#allocation2 + $0x41] sm:$0xff] %vm1531, %v1504
      %1538 = vst.msk [vmem:[#allocation2 + $0x49] sm:$0xff] %vm1531, %v1505
      %1539 = vst.msk [vmem:[#allocation2 + $0x51] sm:$0xff] %vm1531, %v1506
      %1540 = vst.msk [vmem:[#allocation2 + $0x59] sm:$0xff] %vm1531, %v1507
      %1541 = vst.msk [vmem:[#allocation2 + $0x61] sm:$0xff] %vm1531, %v1508
      %1542 = vst.msk [vmem:[#allocation2 + $0x69] sm:$0xff] %vm1531, %v1509
      %1543 = vst.msk [vmem:[#allocation2 + $0x71] sm:$0xff] %vm1531, %v1510
      %1544 = vst.msk [vmem:[#allocation2 + $0x79] sm:$0xff] %vm1531, %v1511
      %1545 = vst.msk [vmem:[#allocation2 + $0x81] sm:$0xff] %vm1531, %v1512
      %1546 = vst.msk [vmem:[#allocation2 + $0x89] sm:$0xff] %vm1531, %v1513
      %1547 = vst.msk [vmem:[#allocation2 + $0x91] sm:$0xff] %vm1531, %v1514
      %1548 = vst.msk [vmem:[#allocation2 + $0x99] sm:$0xff] %vm1531, %v1515
      %1549 = vst.msk [vmem:[#allocation2 + $0xa1] sm:$0xff] %vm1531, %v1516
      %1550 = vst.msk [vmem:[#allocation2 + $0xa9] sm:$0xff] %vm1531, %v1517
      %1551 = vst.msk [vmem:[#allocation2 + $0xb1] sm:$0xff] %vm1531, %v1518
      %1552 = vst.msk [vmem:[#allocation2 + $0xb9] sm:$0xff] %vm1531, %v1519
      %1553 = vst.msk [vmem:[#allocation2 + $0xc1] sm:$0xff] %vm1531, %v1520
      %1554 = vst.msk [vmem:[#allocation2 + $0xc9] sm:$0xff] %vm1531, %v1521
      %1555 = vst.msk [vmem:[#allocation2 + $0xd1] sm:$0xff] %vm1531, %v1522
      %1556 = vst.msk [vmem:[#allocation2 + $0xd9] sm:$0xff] %vm1531, %v1523
      %1557 = vst.msk [vmem:[#allocation2 + $0xe1] sm:$0xff] %vm1531, %v1524
      %1558 = vst.msk [vmem:[#allocation2 + $0xe9] sm:$0xff] %vm1531, %v1525
      %1559 = vst.msk [vmem:[#allocation2 + $0xf1] sm:$0xff] %vm1531, %v1526
      %1560 = vst.msk [vmem:[#allocation2 + $0xf9] sm:$0xff] %vm1531, %v1527
      %1561 = vst.msk [vmem:[#allocation2 + $0x101] sm:$0xff] %vm1531, %v1528
      %1562 = vst.msk [vmem:[#allocation2 + $0x109] sm:$0xff] %vm1531, %v1529
      %1563 = vst.msk [vmem:[#allocation2 + $0x111] sm:$0xff] %vm1531, %v1530
      %vm1564 = vcmp.ne.s32.totalorder %v1200, 0
      %vm1565 = vcmp.ne.s32.totalorder %v1201, 0
      %vm1566 = vcmp.ne.s32.totalorder %v1202, 0
      %vm1567 = vcmp.ne.s32.totalorder %v1203, 0
      %vm1568 = vcmp.ne.s32.totalorder %v1204, 0
      %vm1569 = vcmp.ne.s32.totalorder %v1205, 0
      %vm1570 = vcmp.ne.s32.totalorder %v1206, 0
      %vm1571 = vcmp.ne.s32.totalorder %v1207, 0
      %vm1572 = vcmp.ne.s32.totalorder %v1208, 0
      %vm1573 = vcmp.ne.s32.totalorder %v1209, 0
      %vm1574 = vcmp.ne.s32.totalorder %v1210, 0
      %vm1575 = vcmp.ne.s32.totalorder %v1211, 0
      %vm1576 = vcmp.ne.s32.totalorder %v1212, 0
      %vm1577 = vcmp.ne.s32.totalorder %v1213, 0
      %vm1578 = vcmp.ne.s32.totalorder %v1214, 0
      %vm1579 = vcmp.ne.s32.totalorder %v1215, 0
      %vm1580 = vcmp.ne.s32.totalorder %v1216, 0
      %vm1581 = vcmp.ne.s32.totalorder %v1217, 0
      %vm1582 = vcmp.ne.s32.totalorder %v1218, 0
      %vm1583 = vcmp.ne.s32.totalorder %v1219, 0
      %vm1584 = vcmp.ne.s32.totalorder %v1220, 0
      %vm1585 = vcmp.ne.s32.totalorder %v1221, 0
      %vm1586 = vcmp.ne.s32.totalorder %v1222, 0
      %vm1587 = vcmp.ne.s32.totalorder %v1223, 0
      %vm1588 = vcmp.ne.s32.totalorder %v1224, 0
      %vm1589 = vcmp.ne.s32.totalorder %v1225, 0
      %vm1590 = vcmp.ne.s32.totalorder %v1226, 0
      %vm1591 = vcmp.ne.s32.totalorder %v1227, 0
      %vm1592 = vcmp.ne.s32.totalorder %v1228, 0
      %vm1593 = vcmp.ne.s32.totalorder %v1229, 0
      %vm1594 = vcmp.ne.s32.totalorder %v1230, 0
      %vm1595 = vcmp.ne.s32.totalorder %v1231, 0
      %v1596 = vsel %vm1564, 1, 0
      %v1597 = vsel %vm1565, 1, 0
      %v1598 = vsel %vm1566, 1, 0
      %v1599 = vsel %vm1567, 1, 0
      %v1600 = vsel %vm1568, 1, 0
      %v1601 = vsel %vm1569, 1, 0
      %v1602 = vsel %vm1570, 1, 0
      %v1603 = vsel %vm1571, 1, 0
      %v1604 = vsel %vm1572, 1, 0
      %v1605 = vsel %vm1573, 1, 0
      %v1606 = vsel %vm1574, 1, 0
      %v1607 = vsel %vm1575, 1, 0
      %v1608 = vsel %vm1576, 1, 0
      %v1609 = vsel %vm1577, 1, 0
      %v1610 = vsel %vm1578, 1, 0
      %v1611 = vsel %vm1579, 1, 0
      %v1612 = vsel %vm1580, 1, 0
      %v1613 = vsel %vm1581, 1, 0
      %v1614 = vsel %vm1582, 1, 0
      %v1615 = vsel %vm1583, 1, 0
      %v1616 = vsel %vm1584, 1, 0
      %v1617 = vsel %vm1585, 1, 0
      %v1618 = vsel %vm1586, 1, 0
      %v1619 = vsel %vm1587, 1, 0
      %v1620 = vsel %vm1588, 1, 0
      %v1621 = vsel %vm1589, 1, 0
      %v1622 = vsel %vm1590, 1, 0
      %v1623 = vsel %vm1591, 1, 0
      %v1624 = vsel %vm1592, 1, 0
      %v1625 = vsel %vm1593, 1, 0
      %v1626 = vsel %vm1594, 1, 0
      %v1627 = vsel %vm1595, 1, 0
      %vm1628 = vcmp.eq.s32.totalorder %v1596, 1
      %vm1629 = vcmp.eq.s32.totalorder %v1597, 1
      %vm1630 = vcmp.eq.s32.totalorder %v1598, 1
      %vm1631 = vcmp.eq.s32.totalorder %v1599, 1
      %vm1632 = vcmp.eq.s32.totalorder %v1600, 1
      %vm1633 = vcmp.eq.s32.totalorder %v1601, 1
      %vm1634 = vcmp.eq.s32.totalorder %v1602, 1
      %vm1635 = vcmp.eq.s32.totalorder %v1603, 1
      %vm1636 = vcmp.eq.s32.totalorder %v1604, 1
      %vm1637 = vcmp.eq.s32.totalorder %v1605, 1
      %vm1638 = vcmp.eq.s32.totalorder %v1606, 1
      %vm1639 = vcmp.eq.s32.totalorder %v1607, 1
      %vm1640 = vcmp.eq.s32.totalorder %v1608, 1
      %vm1641 = vcmp.eq.s32.totalorder %v1609, 1
      %vm1642 = vcmp.eq.s32.totalorder %v1610, 1
      %vm1643 = vcmp.eq.s32.totalorder %v1611, 1
      %vm1644 = vcmp.eq.s32.totalorder %v1612, 1
      %vm1645 = vcmp.eq.s32.totalorder %v1613, 1
      %vm1646 = vcmp.eq.s32.totalorder %v1614, 1
      %vm1647 = vcmp.eq.s32.totalorder %v1615, 1
      %vm1648 = vcmp.eq.s32.totalorder %v1616, 1
      %vm1649 = vcmp.eq.s32.totalorder %v1617, 1
      %vm1650 = vcmp.eq.s32.totalorder %v1618, 1
      %vm1651 = vcmp.eq.s32.totalorder %v1619, 1
      %vm1652 = vcmp.eq.s32.totalorder %v1620, 1
      %vm1653 = vcmp.eq.s32.totalorder %v1621, 1
      %vm1654 = vcmp.eq.s32.totalorder %v1622, 1
      %vm1655 = vcmp.eq.s32.totalorder %v1623, 1
      %vm1656 = vcmp.eq.s32.totalorder %v1624, 1
      %vm1657 = vcmp.eq.s32.totalorder %v1625, 1
      %vm1658 = vcmp.eq.s32.totalorder %v1626, 1
      %vm1659 = vcmp.eq.s32.totalorder %v1627, 1
      %v1660 = vsel %vm1628, %v783, 0.0
      %v1661 = vsel %vm1629, %v784, 0.0
      %v1662 = vsel %vm1630, %v785, 0.0
      %v1663 = vsel %vm1631, %v786, 0.0
      %v1664 = vsel %vm1632, %v787, 0.0
      %v1665 = vsel %vm1633, %v788, 0.0
      %v1666 = vsel %vm1634, %v789, 0.0
      %v1667 = vsel %vm1635, %v790, 0.0
      %v1668 = vsel %vm1636, %v791, 0.0
      %v1669 = vsel %vm1637, %v792, 0.0
      %v1670 = vsel %vm1638, %v793, 0.0
      %v1671 = vsel %vm1639, %v794, 0.0
      %v1672 = vsel %vm1640, %v795, 0.0
      %v1673 = vsel %vm1641, %v796, 0.0
      %v1674 = vsel %vm1642, %v797, 0.0
      %v1675 = vsel %vm1643, %v798, 0.0
      %v1676 = vsel %vm1644, %v799, 0.0
      %v1677 = vsel %vm1645, %v800, 0.0
      %v1678 = vsel %vm1646, %v801, 0.0
      %v1679 = vsel %vm1647, %v802, 0.0
      %v1680 = vsel %vm1648, %v803, 0.0
      %v1681 = vsel %vm1649, %v804, 0.0
      %v1682 = vsel %vm1650, %v805, 0.0
      %v1683 = vsel %vm1651, %v806, 0.0
      %v1684 = vsel %vm1652, %v807, 0.0
      %v1685 = vsel %vm1653, %v808, 0.0
      %v1686 = vsel %vm1654, %v809, 0.0
      %v1687 = vsel %vm1655, %v810, 0.0
      %v1688 = vsel %vm1656, %v811, 0.0
      %v1689 = vsel %vm1657, %v812, 0.0
      %v1690 = vsel %vm1658, %v813, 0.0
      %v1691 = vsel %vm1659, %v814, 0.0
      %1724 = vrot.lane.b32.xlu0 %v1660, 4
      %v1725 = vpop.permute.xlu0 %1724
      %1726 = vrot.lane.b32.xlu0 %v1661, 4
      %v1727 = vpop.permute.xlu0 %1726
      %1728 = vrot.lane.b32.xlu0 %v1662, 4
      %v1729 = vpop.permute.xlu0 %1728
      %1730 = vrot.lane.b32.xlu0 %v1663, 4
      %v1731 = vpop.permute.xlu0 %1730
      %1732 = vrot.lane.b32.xlu0 %v1664, 4
      %v1733 = vpop.permute.xlu0 %1732
      %1734 = vrot.lane.b32.xlu0 %v1665, 4
      %v1735 = vpop.permute.xlu0 %1734
      %1736 = vrot.lane.b32.xlu0 %v1666, 4
      %v1737 = vpop.permute.xlu0 %1736
      %1738 = vrot.lane.b32.xlu0 %v1667, 4
      %v1739 = vpop.permute.xlu0 %1738
      %1740 = vrot.lane.b32.xlu0 %v1668, 4
      %v1741 = vpop.permute.xlu0 %1740
      %1742 = vrot.lane.b32.xlu0 %v1669, 4
      %v1743 = vpop.permute.xlu0 %1742
      %1744 = vrot.lane.b32.xlu0 %v1670, 4
      %v1745 = vpop.permute.xlu0 %1744
      %1746 = vrot.lane.b32.xlu0 %v1671, 4
      %v1747 = vpop.permute.xlu0 %1746
      %1748 = vrot.lane.b32.xlu0 %v1672, 4
      %v1749 = vpop.permute.xlu0 %1748
      %1750 = vrot.lane.b32.xlu0 %v1673, 4
      %v1751 = vpop.permute.xlu0 %1750
      %1752 = vrot.lane.b32.xlu0 %v1674, 4
      %v1753 = vpop.permute.xlu0 %1752
      %1754 = vrot.lane.b32.xlu0 %v1675, 4
      %v1755 = vpop.permute.xlu0 %1754
      %1756 = vrot.lane.b32.xlu0 %v1676, 4
      %v1757 = vpop.permute.xlu0 %1756
      %1758 = vrot.lane.b32.xlu0 %v1677, 4
      %v1759 = vpop.permute.xlu0 %1758
      %1760 = vrot.lane.b32.xlu0 %v1678, 4
      %v1761 = vpop.permute.xlu0 %1760
      %1762 = vrot.lane.b32.xlu0 %v1679, 4
      %v1763 = vpop.permute.xlu0 %1762
      %1764 = vrot.lane.b32.xlu0 %v1680, 4
      %v1765 = vpop.permute.xlu0 %1764
      %1766 = vrot.lane.b32.xlu0 %v1681, 4
      %v1767 = vpop.permute.xlu0 %1766
      %1768 = vrot.lane.b32.xlu0 %v1682, 4
      %v1769 = vpop.permute.xlu0 %1768
      %1770 = vrot.lane.b32.xlu0 %v1683, 4
      %v1771 = vpop.permute.xlu0 %1770
      %1772 = vrot.lane.b32.xlu0 %v1684, 4
      %v1773 = vpop.permute.xlu0 %1772
      %1774 = vrot.lane.b32.xlu0 %v1685, 4
      %v1775 = vpop.permute.xlu0 %1774
      %1776 = vrot.lane.b32.xlu0 %v1686, 4
      %v1777 = vpop.permute.xlu0 %1776
      %1778 = vrot.lane.b32.xlu0 %v1687, 4
      %v1779 = vpop.permute.xlu0 %1778
      %1780 = vrot.lane.b32.xlu0 %v1688, 4
      %v1781 = vpop.permute.xlu0 %1780
      %1782 = vrot.lane.b32.xlu0 %v1689, 4
      %v1783 = vpop.permute.xlu0 %1782
      %1784 = vrot.lane.b32.xlu0 %v1690, 4
      %v1785 = vpop.permute.xlu0 %1784
      %1786 = vrot.lane.b32.xlu0 %v1691, 4
      %v1787 = vpop.permute.xlu0 %1786
      %vm1820 = vcmask 48160
      %1821 = vst.msk [vmem:[#allocation2 + $0x17] sm:$0xff] %vm1820, %v1725
      %1822 = vst.msk [vmem:[#allocation2 + $0x1f] sm:$0xff] %vm1820, %v1727
      %1823 = vst.msk [vmem:[#allocation2 + $0x27] sm:$0xff] %vm1820, %v1729
      %1824 = vst.msk [vmem:[#allocation2 + $0x2f] sm:$0xff] %vm1820, %v1731
      %1825 = vst.msk [vmem:[#allocation2 + $0x37] sm:$0xff] %vm1820, %v1733
      %1826 = vst.msk [vmem:[#allocation2 + $0x3f] sm:$0xff] %vm1820, %v1735
      %1827 = vst.msk [vmem:[#allocation2 + $0x47] sm:$0xff] %vm1820, %v1737
      %1828 = vst.msk [vmem:[#allocation2 + $0x4f] sm:$0xff] %vm1820, %v1739
      %1829 = vst.msk [vmem:[#allocation2 + $0x57] sm:$0xff] %vm1820, %v1741
      %1830 = vst.msk [vmem:[#allocation2 + $0x5f] sm:$0xff] %vm1820, %v1743
      %1831 = vst.msk [vmem:[#allocation2 + $0x67] sm:$0xff] %vm1820, %v1745
      %1832 = vst.msk [vmem:[#allocation2 + $0x6f] sm:$0xff] %vm1820, %v1747
      %1833 = vst.msk [vmem:[#allocation2 + $0x77] sm:$0xff] %vm1820, %v1749
      %1834 = vst.msk [vmem:[#allocation2 + $0x7f] sm:$0xff] %vm1820, %v1751
      %1835 = vst.msk [vmem:[#allocation2 + $0x87] sm:$0xff] %vm1820, %v1753
      %1836 = vst.msk [vmem:[#allocation2 + $0x8f] sm:$0xff] %vm1820, %v1755
      %1837 = vst.msk [vmem:[#allocation2 + $0x97] sm:$0xff] %vm1820, %v1757
      %1838 = vst.msk [vmem:[#allocation2 + $0x9f] sm:$0xff] %vm1820, %v1759
      %1839 = vst.msk [vmem:[#allocation2 + $0xa7] sm:$0xff] %vm1820, %v1761
      %1840 = vst.msk [vmem:[#allocation2 + $0xaf] sm:$0xff] %vm1820, %v1763
      %1841 = vst.msk [vmem:[#allocation2 + $0xb7] sm:$0xff] %vm1820, %v1765
      %1842 = vst.msk [vmem:[#allocation2 + $0xbf] sm:$0xff] %vm1820, %v1767
      %1843 = vst.msk [vmem:[#allocation2 + $0xc7] sm:$0xff] %vm1820, %v1769
      %1844 = vst.msk [vmem:[#allocation2 + $0xcf] sm:$0xff] %vm1820, %v1771
      %1845 = vst.msk [vmem:[#allocation2 + $0xd7] sm:$0xff] %vm1820, %v1773
      %1846 = vst.msk [vmem:[#allocation2 + $0xdf] sm:$0xff] %vm1820, %v1775
      %1847 = vst.msk [vmem:[#allocation2 + $0xe7] sm:$0xff] %vm1820, %v1777
      %1848 = vst.msk [vmem:[#allocation2 + $0xef] sm:$0xff] %vm1820, %v1779
      %1849 = vst.msk [vmem:[#allocation2 + $0xf7] sm:$0xff] %vm1820, %v1781
      %1850 = vst.msk [vmem:[#allocation2 + $0xff] sm:$0xff] %vm1820, %v1783
      %1851 = vst.msk [vmem:[#allocation2 + $0x107] sm:$0xff] %vm1820, %v1785
      %1852 = vst.msk [vmem:[#allocation2 + $0x10f] sm:$0xff] %vm1820, %v1787
      %v1853 = vld [vmem:[#allocation2 + $0x8] sm:$0xff]
      %v1854 = vld [vmem:[#allocation2 + $0x10] sm:$0xff]
      %v1855 = vld [vmem:[#allocation2 + $0x18] sm:$0xff]
      %v1856 = vld [vmem:[#allocation2 + $0x20] sm:$0xff]
      %v1857 = vld [vmem:[#allocation2 + $0x28] sm:$0xff]
      %v1858 = vld [vmem:[#allocation2 + $0x30] sm:$0xff]
      %v1859 = vld [vmem:[#allocation2 + $0x38] sm:$0xff]
      %v1860 = vld [vmem:[#allocation2 + $0x40] sm:$0xff]
      %v1861 = vld [vmem:[#allocation2 + $0x48] sm:$0xff]
      %v1862 = vld [vmem:[#allocation2 + $0x50] sm:$0xff]
      %v1863 = vld [vmem:[#allocation2 + $0x58] sm:$0xff]
      %v1864 = vld [vmem:[#allocation2 + $0x60] sm:$0xff]
      %v1865 = vld [vmem:[#allocation2 + $0x68] sm:$0xff]
      %v1866 = vld [vmem:[#allocation2 + $0x70] sm:$0xff]
      %v1867 = vld [vmem:[#allocation2 + $0x78] sm:$0xff]
      %v1868 = vld [vmem:[#allocation2 + $0x80] sm:$0xff]
      %v1869 = vld [vmem:[#allocation2 + $0x88] sm:$0xff]
      %v1870 = vld [vmem:[#allocation2 + $0x90] sm:$0xff]
      %v1871 = vld [vmem:[#allocation2 + $0x98] sm:$0xff]
      %v1872 = vld [vmem:[#allocation2 + $0xa0] sm:$0xff]
      %v1873 = vld [vmem:[#allocation2 + $0xa8] sm:$0xff]
      %v1874 = vld [vmem:[#allocation2 + $0xb0] sm:$0xff]
      %v1875 = vld [vmem:[#allocation2 + $0xb8] sm:$0xff]
      %v1876 = vld [vmem:[#allocation2 + $0xc0] sm:$0xff]
      %v1877 = vld [vmem:[#allocation2 + $0xc8] sm:$0xff]
      %v1878 = vld [vmem:[#allocation2 + $0xd0] sm:$0xff]
      %v1879 = vld [vmem:[#allocation2 + $0xd8] sm:$0xff]
      %v1880 = vld [vmem:[#allocation2 + $0xe0] sm:$0xff]
      %v1881 = vld [vmem:[#allocation2 + $0xe8] sm:$0xff]
      %v1882 = vld [vmem:[#allocation2 + $0xf0] sm:$0xff]
      %v1883 = vld [vmem:[#allocation2 + $0xf8] sm:$0xff]
      %v1884 = vld [vmem:[#allocation2 + $0x100] sm:$0xff]
      %v1885 = vld [vmem:[%s3] sm:$0x3f]
      %v1886 = vld [vmem:[%s4] sm:$0x1]
      %v1888 = vlaneseq
      %v1889 = vshrl.u32 %v1888, 7
      %v1890 = vsub.s32 0, %v1889
      %v1891 = vrot.slane %v1886, %v1890
      %v1894 = vsel %vm1232, %v1853, 0
      %v1897 = vsel %vm1232, %v1854, 0
      %v1900 = vsel %vm1232, %v1855, 0
      %v1903 = vsel %vm1232, %v1856, 0
      %v1906 = vsel %vm1232, %v1857, 0
      %v1909 = vsel %vm1232, %v1858, 0
      %v1912 = vsel %vm1232, %v1859, 0
      %v1915 = vsel %vm1232, %v1860, 0
      %v1918 = vsel %vm1232, %v1861, 0
      %v1921 = vsel %vm1232, %v1862, 0
      %v1924 = vsel %vm1232, %v1863, 0
      %v1927 = vsel %vm1232, %v1864, 0
      %v1930 = vsel %vm1232, %v1865, 0
      %v1933 = vsel %vm1232, %v1866, 0
      %v1936 = vsel %vm1232, %v1867, 0
      %v1939 = vsel %vm1232, %v1868, 0
      %v1942 = vsel %vm1232, %v1869, 0
      %v1945 = vsel %vm1232, %v1870, 0
      %v1948 = vsel %vm1232, %v1871, 0
      %v1951 = vsel %vm1232, %v1872, 0
      %v1954 = vsel %vm1232, %v1873, 0
      %v1957 = vsel %vm1232, %v1874, 0
      %v1960 = vsel %vm1232, %v1875, 0
      %v1963 = vsel %vm1232, %v1876, 0
      %v1966 = vsel %vm1232, %v1877, 0
      %v1969 = vsel %vm1232, %v1878, 0
      %v1972 = vsel %vm1232, %v1879, 0
      %v1975 = vsel %vm1232, %v1880, 0
      %v1978 = vsel %vm1232, %v1881, 0
      %v1981 = vsel %vm1232, %v1882, 0
      %v1984 = vsel %vm1232, %v1883, 0
      %v1987 = vsel %vm1232, %v1884, 0
      %vm1989 = vcmask 1045504
      %v1991 = vsel %vm1989, %v1885, 0
      %1993 = vmatprep.subr.mxu0 0.0
      %1994 = vmatpush1.msra.mxu0 %v1991
      %1995 = vmatprep.subr.mxu0 0.0
      %1996 = vmatpush1.msra.mxu0 0.0
      %1997 = vmatprep.subr.mxu0 0.0
      %1998 = vmatpush1.msra.mxu0 0.0
      %1999 = vmatprep.subr.mxu0 0.0
      %2000 = vmatpush1.msra.mxu0 0.0
      %2001 = vmatprep.subr.mxu0 0.0
      %2002 = vmatpush1.msra.mxu0 0.0
      %2003 = vmatprep.subr.mxu0 0.0
      %2004 = vmatpush1.msra.mxu0 0.0
      %2005 = vmatprep.subr.mxu0 0.0
      %2006 = vmatpush1.msra.mxu0 0.0
      %2007 = vmatprep.subr.mxu0 0.0
      %2008 = vmatpush1.msra.mxu0 0.0
      %2009 = vmatprep.subr.mxu0 0.0
      %2010 = vmatpush1.msra.mxu0 0.0
      %2011 = vmatprep.subr.mxu0 0.0
      %2012 = vmatpush1.msra.mxu0 0.0
      %2013 = vmatprep.subr.mxu0 0.0
      %2014 = vmatpush1.msra.mxu0 0.0
      %2015 = vmatprep.subr.mxu0 0.0
      %2016 = vmatpush1.msra.mxu0 0.0
      %2017 = vmatprep.subr.mxu0 0.0
      %2018 = vmatpush1.msra.mxu0 0.0
      %2019 = vmatprep.subr.mxu0 0.0
      %2020 = vmatpush1.msra.mxu0 0.0
      %2021 = vmatprep.subr.mxu0 0.0
      %2022 = vmatpush1.msra.mxu0 0.0
      %2023 = vmatprep.subr.mxu0 0.0
      %2024 = vmatpush1.msra.mxu0 0.0
      %2025 = vmatprep.subr.mxu0 0.0
      %2026 = vmatpush1.msra.mxu0 0.0
      %2027 = vmatprep.subr.mxu0 0.0
      %2028 = vmatpush1.msra.mxu0 0.0
      %2029 = vmatprep.subr.mxu0 0.0
      %2030 = vmatpush1.msra.mxu0 0.0
      %2031 = vmatprep.subr.mxu0 0.0
      %2032 = vmatpush1.msra.mxu0 0.0
      %2033 = vmatprep.subr.mxu0 0.0
      %2034 = vmatpush1.msra.mxu0 0.0
      %2035 = vmatprep.subr.mxu0 0.0
      %2036 = vmatpush1.msra.mxu0 0.0
      %2037 = vmatprep.subr.mxu0 0.0
      %2038 = vmatpush1.msra.mxu0 0.0
      %2039 = vmatprep.subr.mxu0 0.0
      %2040 = vmatpush1.msra.mxu0 0.0
      %2041 = vmatprep.subr.mxu0 0.0
      %2042 = vmatpush1.msra.mxu0 0.0
      %2043 = vmatprep.subr.mxu0 0.0
      %2044 = vmatpush1.msra.mxu0 0.0
      %2045 = vmatprep.subr.mxu0 0.0
      %2046 = vmatpush1.msra.mxu0 0.0
      %2047 = vmatprep.subr.mxu0 0.0
      %2048 = vmatpush1.msra.mxu0 0.0
      %2049 = vmatprep.subr.mxu0 0.0
      %2050 = vmatpush1.msra.mxu0 0.0
      %2051 = vmatprep.subr.mxu0 0.0
      %2052 = vmatpush1.msra.mxu0 0.0
      %2053 = vmatprep.subr.mxu0 0.0
      %2054 = vmatpush1.msra.mxu0 0.0
      %2055 = vmatprep.subr.mxu0 0.0
      %2056 = vmatpush1.msra.mxu0 0.0
      %2057 = vmatprep.mubr.f32.mxu0 0.0
      %2058 = vmatmul.mubr.f32.gmra.mrb[0].mxu0 %v1894
      %v2059 = vpop.f32.mrb[0].mxu0
      %v2060 = vadd.f32 %v1891, %v2059
      %v2061 = vpop.f32.mrb[0].mxu0
      %2062 = vmatprep.mubr.f32.mxu0 0.0
      %2063 = vmatmul.mubr.f32.gmra.mrb[0].mxu0 %v1897
      %v2064 = vpop.f32.mrb[0].mxu0
      %v2065 = vadd.f32 %v1891, %v2064
      %v2066 = vpop.f32.mrb[0].mxu0
      %2067 = vmatprep.mubr.f32.mxu0 0.0
      %2068 = vmatmul.mubr.f32.gmra.mrb[0].mxu0 %v1900
      %v2069 = vpop.f32.mrb[0].mxu0
      %v2070 = vadd.f32 %v1891, %v2069
      %v2071 = vpop.f32.mrb[0].mxu0
      %2072 = vmatprep.mubr.f32.mxu0 0.0
      %2073 = vmatmul.mubr.f32.gmra.mrb[0].mxu0 %v1903
      %v2074 = vpop.f32.mrb[0].mxu0
      %v2075 = vadd.f32 %v1891, %v2074
      %v2076 = vpop.f32.mrb[0].mxu0
      %2077 = vmatprep.mubr.f32.mxu0 0.0
      %2078 = vmatmul.mubr.f32.gmra.mrb[0].mxu0 %v1906
      %v2079 = vpop.f32.mrb[0].mxu0
      %v2080 = vadd.f32 %v1891, %v2079
      %v2081 = vpop.f32.mrb[0].mxu0
      %2082 = vmatprep.mubr.f32.mxu0 0.0
      %2083 = vmatmul.mubr.f32.gmra.mrb[0].mxu0 %v1909
      %v2084 = vpop.f32.mrb[0].mxu0
      %v2085 = vadd.f32 %v1891, %v2084
      %v2086 = vpop.f32.mrb[0].mxu0
      %2087 = vmatprep.mubr.f32.mxu0 0.0
      %2088 = vmatmul.mubr.f32.gmra.mrb[0].mxu0 %v1912
      %v2089 = vpop.f32.mrb[0].mxu0
      %v2090 = vadd.f32 %v1891, %v2089
      %v2091 = vpop.f32.mrb[0].mxu0
      %2092 = vmatprep.mubr.f32.mxu0 0.0
      %2093 = vmatmul.mubr.f32.gmra.mrb[0].mxu0 %v1915
      %v2094 = vpop.f32.mrb[0].mxu0
      %v2095 = vadd.f32 %v1891, %v2094
      %v2096 = vpop.f32.mrb[0].mxu0
      %2097 = vmatprep.mubr.f32.mxu0 0.0
      %2098 = vmatmul.mubr.f32.gmra.mrb[0].mxu0 %v1918
      %v2099 = vpop.f32.mrb[0].mxu0
      %v2100 = vadd.f32 %v1891, %v2099
      %v2101 = vpop.f32.mrb[0].mxu0
      %2102 = vmatprep.mubr.f32.mxu0 0.0
      %2103 = vmatmul.mubr.f32.gmra.mrb[0].mxu0 %v1921
      %v2104 = vpop.f32.mrb[0].mxu0
      %v2105 = vadd.f32 %v1891, %v2104
      %v2106 = vpop.f32.mrb[0].mxu0
      %2107 = vmatprep.mubr.f32.mxu0 0.0
      %2108 = vmatmul.mubr.f32.gmra.mrb[0].mxu0 %v1924
      %v2109 = vpop.f32.mrb[0].mxu0
      %v2110 = vadd.f32 %v1891, %v2109
      %v2111 = vpop.f32.mrb[0].mxu0
      %2112 = vmatprep.mubr.f32.mxu0 0.0
      %2113 = vmatmul.mubr.f32.gmra.mrb[0].mxu0 %v1927
      %v2114 = vpop.f32.mrb[0].mxu0
      %v2115 = vadd.f32 %v1891, %v2114
      %v2116 = vpop.f32.mrb[0].mxu0
      %2117 = vmatprep.mubr.f32.mxu0 0.0
      %2118 = vmatmul.mubr.f32.gmra.mrb[0].mxu0 %v1930
      %v2119 = vpop.f32.mrb[0].mxu0
      %v2120 = vadd.f32 %v1891, %v2119
      %v2121 = vpop.f32.mrb[0].mxu0
      %2122 = vmatprep.mubr.f32.mxu0 0.0
      %2123 = vmatmul.mubr.f32.gmra.mrb[0].mxu0 %v1933
      %v2124 = vpop.f32.mrb[0].mxu0
      %v2125 = vadd.f32 %v1891, %v2124
      %v2126 = vpop.f32.mrb[0].mxu0
      %2127 = vmatprep.mubr.f32.mxu0 0.0
      %2128 = vmatmul.mubr.f32.gmra.mrb[0].mxu0 %v1936
      %v2129 = vpop.f32.mrb[0].mxu0
      %v2130 = vadd.f32 %v1891, %v2129
      %v2131 = vpop.f32.mrb[0].mxu0
      %2132 = vmatprep.mubr.f32.mxu0 0.0
      %2133 = vmatmul.mubr.f32.gmra.mrb[0].mxu0 %v1939
      %v2134 = vpop.f32.mrb[0].mxu0
      %v2135 = vadd.f32 %v1891, %v2134
      %v2136 = vpop.f32.mrb[0].mxu0
      %2137 = vmatprep.mubr.f32.mxu0 0.0
      %2138 = vmatmul.mubr.f32.gmra.mrb[0].mxu0 %v1942
      %v2139 = vpop.f32.mrb[0].mxu0
      %v2140 = vadd.f32 %v1891, %v2139
      %v2141 = vpop.f32.mrb[0].mxu0
      %2142 = vmatprep.mubr.f32.mxu0 0.0
      %2143 = vmatmul.mubr.f32.gmra.mrb[0].mxu0 %v1945
      %v2144 = vpop.f32.mrb[0].mxu0
      %v2145 = vadd.f32 %v1891, %v2144
      %v2146 = vpop.f32.mrb[0].mxu0
      %2147 = vmatprep.mubr.f32.mxu0 0.0
      %2148 = vmatmul.mubr.f32.gmra.mrb[0].mxu0 %v1948
      %v2149 = vpop.f32.mrb[0].mxu0
      %v2150 = vadd.f32 %v1891, %v2149
      %v2151 = vpop.f32.mrb[0].mxu0
      %2152 = vmatprep.mubr.f32.mxu0 0.0
      %2153 = vmatmul.mubr.f32.gmra.mrb[0].mxu0 %v1951
      %v2154 = vpop.f32.mrb[0].mxu0
      %v2155 = vadd.f32 %v1891, %v2154
      %v2156 = vpop.f32.mrb[0].mxu0
      %2157 = vmatprep.mubr.f32.mxu0 0.0
      %2158 = vmatmul.mubr.f32.gmra.mrb[0].mxu0 %v1954
      %v2159 = vpop.f32.mrb[0].mxu0
      %v2160 = vadd.f32 %v1891, %v2159
      %v2161 = vpop.f32.mrb[0].mxu0
      %2162 = vmatprep.mubr.f32.mxu0 0.0
      %2163 = vmatmul.mubr.f32.gmra.mrb[0].mxu0 %v1957
      %v2164 = vpop.f32.mrb[0].mxu0
      %v2165 = vadd.f32 %v1891, %v2164
      %v2166 = vpop.f32.mrb[0].mxu0
      %2167 = vmatprep.mubr.f32.mxu0 0.0
      %2168 = vmatmul.mubr.f32.gmra.mrb[0].mxu0 %v1960
      %v2169 = vpop.f32.mrb[0].mxu0
      %v2170 = vadd.f32 %v1891, %v2169
      %v2171 = vpop.f32.mrb[0].mxu0
      %2172 = vmatprep.mubr.f32.mxu0 0.0
      %2173 = vmatmul.mubr.f32.gmra.mrb[0].mxu0 %v1963
      %v2174 = vpop.f32.mrb[0].mxu0
      %v2175 = vadd.f32 %v1891, %v2174
      %v2176 = vpop.f32.mrb[0].mxu0
      %2177 = vmatprep.mubr.f32.mxu0 0.0
      %2178 = vmatmul.mubr.f32.gmra.mrb[0].mxu0 %v1966
      %v2179 = vpop.f32.mrb[0].mxu0
      %v2180 = vadd.f32 %v1891, %v2179
      %v2181 = vpop.f32.mrb[0].mxu0
      %2182 = vmatprep.mubr.f32.mxu0 0.0
      %2183 = vmatmul.mubr.f32.gmra.mrb[0].mxu0 %v1969
      %v2184 = vpop.f32.mrb[0].mxu0
      %v2185 = vadd.f32 %v1891, %v2184
      %v2186 = vpop.f32.mrb[0].mxu0
      %2187 = vmatprep.mubr.f32.mxu0 0.0
      %2188 = vmatmul.mubr.f32.gmra.mrb[0].mxu0 %v1972
      %v2189 = vpop.f32.mrb[0].mxu0
      %v2190 = vadd.f32 %v1891, %v2189
      %v2191 = vpop.f32.mrb[0].mxu0
      %2192 = vmatprep.mubr.f32.mxu0 0.0
      %2193 = vmatmul.mubr.f32.gmra.mrb[0].mxu0 %v1975
      %v2194 = vpop.f32.mrb[0].mxu0
      %v2195 = vadd.f32 %v1891, %v2194
      %v2196 = vpop.f32.mrb[0].mxu0
      %2197 = vmatprep.mubr.f32.mxu0 0.0
      %2198 = vmatmul.mubr.f32.gmra.mrb[0].mxu0 %v1978
      %v2199 = vpop.f32.mrb[0].mxu0
      %v2200 = vadd.f32 %v1891, %v2199
      %v2201 = vpop.f32.mrb[0].mxu0
      %2202 = vmatprep.mubr.f32.mxu0 0.0
      %2203 = vmatmul.mubr.f32.gmra.mrb[0].mxu0 %v1981
      %v2204 = vpop.f32.mrb[0].mxu0
      %v2205 = vadd.f32 %v1891, %v2204
      %v2206 = vpop.f32.mrb[0].mxu0
      %2207 = vmatprep.mubr.f32.mxu0 0.0
      %2208 = vmatmul.mubr.f32.gmra.mrb[0].mxu0 %v1984
      %v2209 = vpop.f32.mrb[0].mxu0
      %v2210 = vadd.f32 %v1891, %v2209
      %v2211 = vpop.f32.mrb[0].mxu0
      %2212 = vmatprep.mubr.f32.mxu0 0.0
      %2213 = vmatmul.mubr.f32.gmra.mrb[0].mxu0 %v1987
      %v2214 = vpop.f32.mrb[0].mxu0
      %v2215 = vadd.f32 %v1891, %v2214
      %v2216 = vpop.f32.mrb[0].mxu0
      %2217 = vdwg.mxu0
      %v2218 = vld [vmem:[#allocation2 + $0x18] sm:$0xff]
      %v2219 = vld [vmem:[#allocation2 + $0x20] sm:$0xff]
      %v2220 = vld [vmem:[#allocation2 + $0x28] sm:$0xff]
      %v2221 = vld [vmem:[#allocation2 + $0x30] sm:$0xff]
      %v2222 = vld [vmem:[#allocation2 + $0x38] sm:$0xff]
      %v2223 = vld [vmem:[#allocation2 + $0x40] sm:$0xff]
      %v2224 = vld [vmem:[#allocation2 + $0x48] sm:$0xff]
      %v2225 = vld [vmem:[#allocation2 + $0x50] sm:$0xff]
      %v2226 = vld [vmem:[#allocation2 + $0x58] sm:$0xff]
      %v2227 = vld [vmem:[#allocation2 + $0x60] sm:$0xff]
      %v2228 = vld [vmem:[#allocation2 + $0x68] sm:$0xff]
      %v2229 = vld [vmem:[#allocation2 + $0x70] sm:$0xff]
      %v2230 = vld [vmem:[#allocation2 + $0x78] sm:$0xff]
      %v2231 = vld [vmem:[#allocation2 + $0x80] sm:$0xff]
      %v2232 = vld [vmem:[#allocation2 + $0x88] sm:$0xff]
      %v2233 = vld [vmem:[#allocation2 + $0x90] sm:$0xff]
      %v2234 = vld [vmem:[#allocation2 + $0x98] sm:$0xff]
      %v2235 = vld [vmem:[#allocation2 + $0xa0] sm:$0xff]
      %v2236 = vld [vmem:[#allocation2 + $0xa8] sm:$0xff]
      %v2237 = vld [vmem:[#allocation2 + $0xb0] sm:$0xff]
      %v2238 = vld [vmem:[#allocation2 + $0xb8] sm:$0xff]
      %v2239 = vld [vmem:[#allocation2 + $0xc0] sm:$0xff]
      %v2240 = vld [vmem:[#allocation2 + $0xc8] sm:$0xff]
      %v2241 = vld [vmem:[#allocation2 + $0xd0] sm:$0xff]
      %v2242 = vld [vmem:[#allocation2 + $0xd8] sm:$0xff]
      %v2243 = vld [vmem:[#allocation2 + $0xe0] sm:$0xff]
      %v2244 = vld [vmem:[#allocation2 + $0xe8] sm:$0xff]
      %v2245 = vld [vmem:[#allocation2 + $0xf0] sm:$0xff]
      %v2246 = vld [vmem:[#allocation2 + $0xf8] sm:$0xff]
      %v2247 = vld [vmem:[#allocation2 + $0x100] sm:$0xff]
      %v2248 = vld [vmem:[#allocation2 + $0x108] sm:$0xff]
      %v2249 = vld [vmem:[#allocation2 + $0x110] sm:$0xff]
      %s2250 = scalar_lea.vmem %s3, 8
      %v2251 = vld [vmem:[%s2250] sm:$0x3f]
      %v2253 = vsel %vm1232, %v2218, 0
      %v2256 = vsel %vm1232, %v2219, 0
      %v2259 = vsel %vm1232, %v2220, 0
      %v2262 = vsel %vm1232, %v2221, 0
      %v2265 = vsel %vm1232, %v2222, 0
      %v2268 = vsel %vm1232, %v2223, 0
      %v2271 = vsel %vm1232, %v2224, 0
      %v2274 = vsel %vm1232, %v2225, 0
      %v2277 = vsel %vm1232, %v2226, 0
      %v2280 = vsel %vm1232, %v2227, 0
      %v2283 = vsel %vm1232, %v2228, 0
      %v2286 = vsel %vm1232, %v2229, 0
      %v2289 = vsel %vm1232, %v2230, 0
      %v2292 = vsel %vm1232, %v2231, 0
      %v2295 = vsel %vm1232, %v2232, 0
      %v2298 = vsel %vm1232, %v2233, 0
      %v2301 = vsel %vm1232, %v2234, 0
      %v2304 = vsel %vm1232, %v2235, 0
      %v2307 = vsel %vm1232, %v2236, 0
      %v2310 = vsel %vm1232, %v2237, 0
      %v2313 = vsel %vm1232, %v2238, 0
      %v2316 = vsel %vm1232, %v2239, 0
      %v2319 = vsel %vm1232, %v2240, 0
      %v2322 = vsel %vm1232, %v2241, 0
      %v2325 = vsel %vm1232, %v2242, 0
      %v2328 = vsel %vm1232, %v2243, 0
      %v2331 = vsel %vm1232, %v2244, 0
      %v2334 = vsel %vm1232, %v2245, 0
      %v2337 = vsel %vm1232, %v2246, 0
      %v2340 = vsel %vm1232, %v2247, 0
      %v2343 = vsel %vm1232, %v2248, 0
      %v2346 = vsel %vm1232, %v2249, 0
      %v2349 = vsel %vm1989, %v2251, 0
      %2351 = vmatprep.subr.mxu0 0.0
      %2352 = vmatpush1.msra.mxu0 %v2349
      %2353 = vmatprep.subr.mxu0 0.0
      %2354 = vmatpush1.msra.mxu0 0.0
      %2355 = vmatprep.subr.mxu0 0.0
      %2356 = vmatpush1.msra.mxu0 0.0
      %2357 = vmatprep.subr.mxu0 0.0
      %2358 = vmatpush1.msra.mxu0 0.0
      %2359 = vmatprep.subr.mxu0 0.0
      %2360 = vmatpush1.msra.mxu0 0.0
      %2361 = vmatprep.subr.mxu0 0.0
      %2362 = vmatpush1.msra.mxu0 0.0
      %2363 = vmatprep.subr.mxu0 0.0
      %2364 = vmatpush1.msra.mxu0 0.0
      %2365 = vmatprep.subr.mxu0 0.0
      %2366 = vmatpush1.msra.mxu0 0.0
      %2367 = vmatprep.subr.mxu0 0.0
      %2368 = vmatpush1.msra.mxu0 0.0
      %2369 = vmatprep.subr.mxu0 0.0
      %2370 = vmatpush1.msra.mxu0 0.0
      %2371 = vmatprep.subr.mxu0 0.0
      %2372 = vmatpush1.msra.mxu0 0.0
      %2373 = vmatprep.subr.mxu0 0.0
      %2374 = vmatpush1.msra.mxu0 0.0
      %2375 = vmatprep.subr.mxu0 0.0
      %2376 = vmatpush1.msra.mxu0 0.0
      %2377 = vmatprep.subr.mxu0 0.0
      %2378 = vmatpush1.msra.mxu0 0.0
      %2379 = vmatprep.subr.mxu0 0.0
      %2380 = vmatpush1.msra.mxu0 0.0
      %2381 = vmatprep.subr.mxu0 0.0
      %2382 = vmatpush1.msra.mxu0 0.0
      %2383 = vmatprep.subr.mxu0 0.0
      %2384 = vmatpush1.msra.mxu0 0.0
      %2385 = vmatprep.subr.mxu0 0.0
      %2386 = vmatpush1.msra.mxu0 0.0
      %2387 = vmatprep.subr.mxu0 0.0
      %2388 = vmatpush1.msra.mxu0 0.0
      %2389 = vmatprep.subr.mxu0 0.0
      %2390 = vmatpush1.msra.mxu0 0.0
      %2391 = vmatprep.subr.mxu0 0.0
      %2392 = vmatpush1.msra.mxu0 0.0
      %2393 = vmatprep.subr.mxu0 0.0
      %2394 = vmatpush1.msra.mxu0 0.0
      %2395 = vmatprep.subr.mxu0 0.0
      %2396 = vmatpush1.msra.mxu0 0.0
      %2397 = vmatprep.subr.mxu0 0.0
      %2398 = vmatpush1.msra.mxu0 0.0
      %2399 = vmatprep.subr.mxu0 0.0
      %2400 = vmatpush1.msra.mxu0 0.0
      %2401 = vmatprep.subr.mxu0 0.0
      %2402 = vmatpush1.msra.mxu0 0.0
      %2403 = vmatprep.subr.mxu0 0.0
      %2404 = vmatpush1.msra.mxu0 0.0
      %2405 = vmatprep.subr.mxu0 0.0
      %2406 = vmatpush1.msra.mxu0 0.0
      %2407 = vmatprep.subr.mxu0 0.0
      %2408 = vmatpush1.msra.mxu0 0.0
      %2409 = vmatprep.subr.mxu0 0.0
      %2410 = vmatpush1.msra.mxu0 0.0
      %2411 = vmatprep.subr.mxu0 0.0
      %2412 = vmatpush1.msra.mxu0 0.0
      %2413 = vmatprep.subr.mxu0 0.0
      %2414 = vmatpush1.msra.mxu0 0.0
      %2415 = vmatprep.mubr.f32.mxu0 0.0
      %2416 = vmatmul.mubr.f32.gmra.mrb[0].mxu0 %v2253
      %v2417 = vpop.f32.mrb[0].mxu0
      %v2418 = vadd.f32 0.0, %v2417
      %v2419 = vpop.f32.mrb[0].mxu0
      %2420 = vmatprep.mubr.f32.mxu0 0.0
      %2421 = vmatmul.mubr.f32.gmra.mrb[0].mxu0 %v2256
      %v2422 = vpop.f32.mrb[0].mxu0
      %v2423 = vadd.f32 0.0, %v2422
      %v2424 = vpop.f32.mrb[0].mxu0
      %2425 = vmatprep.mubr.f32.mxu0 0.0
      %2426 = vmatmul.mubr.f32.gmra.mrb[0].mxu0 %v2259
      %v2427 = vpop.f32.mrb[0].mxu0
      %v2428 = vadd.f32 0.0, %v2427
      %v2429 = vpop.f32.mrb[0].mxu0
      %2430 = vmatprep.mubr.f32.mxu0 0.0
      %2431 = vmatmul.mubr.f32.gmra.mrb[0].mxu0 %v2262
      %v2432 = vpop.f32.mrb[0].mxu0
      %v2433 = vadd.f32 0.0, %v2432
      %v2434 = vpop.f32.mrb[0].mxu0
      %2435 = vmatprep.mubr.f32.mxu0 0.0
      %2436 = vmatmul.mubr.f32.gmra.mrb[0].mxu0 %v2265
      %v2437 = vpop.f32.mrb[0].mxu0
      %v2438 = vadd.f32 0.0, %v2437
      %v2439 = vpop.f32.mrb[0].mxu0
      %2440 = vmatprep.mubr.f32.mxu0 0.0
      %2441 = vmatmul.mubr.f32.gmra.mrb[0].mxu0 %v2268
      %v2442 = vpop.f32.mrb[0].mxu0
      %v2443 = vadd.f32 0.0, %v2442
      %v2444 = vpop.f32.mrb[0].mxu0
      %2445 = vmatprep.mubr.f32.mxu0 0.0
      %2446 = vmatmul.mubr.f32.gmra.mrb[0].mxu0 %v2271
      %v2447 = vpop.f32.mrb[0].mxu0
      %v2448 = vadd.f32 0.0, %v2447
      %v2449 = vpop.f32.mrb[0].mxu0
      %2450 = vmatprep.mubr.f32.mxu0 0.0
      %2451 = vmatmul.mubr.f32.gmra.mrb[0].mxu0 %v2274
      %v2452 = vpop.f32.mrb[0].mxu0
      %v2453 = vadd.f32 0.0, %v2452
      %v2454 = vpop.f32.mrb[0].mxu0
      %2455 = vmatprep.mubr.f32.mxu0 0.0
      %2456 = vmatmul.mubr.f32.gmra.mrb[0].mxu0 %v2277
      %v2457 = vpop.f32.mrb[0].mxu0
      %v2458 = vadd.f32 0.0, %v2457
      %v2459 = vpop.f32.mrb[0].mxu0
      %2460 = vmatprep.mubr.f32.mxu0 0.0
      %2461 = vmatmul.mubr.f32.gmra.mrb[0].mxu0 %v2280
      %v2462 = vpop.f32.mrb[0].mxu0
      %v2463 = vadd.f32 0.0, %v2462
      %v2464 = vpop.f32.mrb[0].mxu0
      %2465 = vmatprep.mubr.f32.mxu0 0.0
      %2466 = vmatmul.mubr.f32.gmra.mrb[0].mxu0 %v2283
      %v2467 = vpop.f32.mrb[0].mxu0
      %v2468 = vadd.f32 0.0, %v2467
      %v2469 = vpop.f32.mrb[0].mxu0
      %2470 = vmatprep.mubr.f32.mxu0 0.0
      %2471 = vmatmul.mubr.f32.gmra.mrb[0].mxu0 %v2286
      %v2472 = vpop.f32.mrb[0].mxu0
      %v2473 = vadd.f32 0.0, %v2472
      %v2474 = vpop.f32.mrb[0].mxu0
      %2475 = vmatprep.mubr.f32.mxu0 0.0
      %2476 = vmatmul.mubr.f32.gmra.mrb[0].mxu0 %v2289
      %v2477 = vpop.f32.mrb[0].mxu0
      %v2478 = vadd.f32 0.0, %v2477
      %v2479 = vpop.f32.mrb[0].mxu0
      %2480 = vmatprep.mubr.f32.mxu0 0.0
      %2481 = vmatmul.mubr.f32.gmra.mrb[0].mxu0 %v2292
      %v2482 = vpop.f32.mrb[0].mxu0
      %v2483 = vadd.f32 0.0, %v2482
      %v2484 = vpop.f32.mrb[0].mxu0
      %2485 = vmatprep.mubr.f32.mxu0 0.0
      %2486 = vmatmul.mubr.f32.gmra.mrb[0].mxu0 %v2295
      %v2487 = vpop.f32.mrb[0].mxu0
      %v2488 = vadd.f32 0.0, %v2487
      %v2489 = vpop.f32.mrb[0].mxu0
      %2490 = vmatprep.mubr.f32.mxu0 0.0
      %2491 = vmatmul.mubr.f32.gmra.mrb[0].mxu0 %v2298
      %v2492 = vpop.f32.mrb[0].mxu0
      %v2493 = vadd.f32 0.0, %v2492
      %v2494 = vpop.f32.mrb[0].mxu0
      %2495 = vmatprep.mubr.f32.mxu0 0.0
      %2496 = vmatmul.mubr.f32.gmra.mrb[0].mxu0 %v2301
      %v2497 = vpop.f32.mrb[0].mxu0
      %v2498 = vadd.f32 0.0, %v2497
      %v2499 = vpop.f32.mrb[0].mxu0
      %2500 = vmatprep.mubr.f32.mxu0 0.0
      %2501 = vmatmul.mubr.f32.gmra.mrb[0].mxu0 %v2304
      %v2502 = vpop.f32.mrb[0].mxu0
      %v2503 = vadd.f32 0.0, %v2502
      %v2504 = vpop.f32.mrb[0].mxu0
      %2505 = vmatprep.mubr.f32.mxu0 0.0
      %2506 = vmatmul.mubr.f32.gmra.mrb[0].mxu0 %v2307
      %v2507 = vpop.f32.mrb[0].mxu0
      %v2508 = vadd.f32 0.0, %v2507
      %v2509 = vpop.f32.mrb[0].mxu0
      %2510 = vmatprep.mubr.f32.mxu0 0.0
      %2511 = vmatmul.mubr.f32.gmra.mrb[0].mxu0 %v2310
      %v2512 = vpop.f32.mrb[0].mxu0
      %v2513 = vadd.f32 0.0, %v2512
      %v2514 = vpop.f32.mrb[0].mxu0
      %2515 = vmatprep.mubr.f32.mxu0 0.0
      %2516 = vmatmul.mubr.f32.gmra.mrb[0].mxu0 %v2313
      %v2517 = vpop.f32.mrb[0].mxu0
      %v2518 = vadd.f32 0.0, %v2517
      %v2519 = vpop.f32.mrb[0].mxu0
      %2520 = vmatprep.mubr.f32.mxu0 0.0
      %2521 = vmatmul.mubr.f32.gmra.mrb[0].mxu0 %v2316
      %v2522 = vpop.f32.mrb[0].mxu0
      %v2523 = vadd.f32 0.0, %v2522
      %v2524 = vpop.f32.mrb[0].mxu0
      %2525 = vmatprep.mubr.f32.mxu0 0.0
      %2526 = vmatmul.mubr.f32.gmra.mrb[0].mxu0 %v2319
      %v2527 = vpop.f32.mrb[0].mxu0
      %v2528 = vadd.f32 0.0, %v2527
      %v2529 = vpop.f32.mrb[0].mxu0
      %2530 = vmatprep.mubr.f32.mxu0 0.0
      %2531 = vmatmul.mubr.f32.gmra.mrb[0].mxu0 %v2322
      %v2532 = vpop.f32.mrb[0].mxu0
      %v2533 = vadd.f32 0.0, %v2532
      %v2534 = vpop.f32.mrb[0].mxu0
      %2535 = vmatprep.mubr.f32.mxu0 0.0
      %2536 = vmatmul.mubr.f32.gmra.mrb[0].mxu0 %v2325
      %v2537 = vpop.f32.mrb[0].mxu0
      %v2538 = vadd.f32 0.0, %v2537
      %v2539 = vpop.f32.mrb[0].mxu0
      %2540 = vmatprep.mubr.f32.mxu0 0.0
      %2541 = vmatmul.mubr.f32.gmra.mrb[0].mxu0 %v2328
      %v2542 = vpop.f32.mrb[0].mxu0
      %v2543 = vadd.f32 0.0, %v2542
      %v2544 = vpop.f32.mrb[0].mxu0
      %2545 = vmatprep.mubr.f32.mxu0 0.0
      %2546 = vmatmul.mubr.f32.gmra.mrb[0].mxu0 %v2331
      %v2547 = vpop.f32.mrb[0].mxu0
      %v2548 = vadd.f32 0.0, %v2547
      %v2549 = vpop.f32.mrb[0].mxu0
      %2550 = vmatprep.mubr.f32.mxu0 0.0
      %2551 = vmatmul.mubr.f32.gmra.mrb[0].mxu0 %v2334
      %v2552 = vpop.f32.mrb[0].mxu0
      %v2553 = vadd.f32 0.0, %v2552
      %v2554 = vpop.f32.mrb[0].mxu0
      %2555 = vmatprep.mubr.f32.mxu0 0.0
      %2556 = vmatmul.mubr.f32.gmra.mrb[0].mxu0 %v2337
      %v2557 = vpop.f32.mrb[0].mxu0
      %v2558 = vadd.f32 0.0, %v2557
      %v2559 = vpop.f32.mrb[0].mxu0
      %2560 = vmatprep.mubr.f32.mxu0 0.0
      %2561 = vmatmul.mubr.f32.gmra.mrb[0].mxu0 %v2340
      %v2562 = vpop.f32.mrb[0].mxu0
      %v2563 = vadd.f32 0.0, %v2562
      %v2564 = vpop.f32.mrb[0].mxu0
      %2565 = vmatprep.mubr.f32.mxu0 0.0
      %2566 = vmatmul.mubr.f32.gmra.mrb[0].mxu0 %v2343
      %v2567 = vpop.f32.mrb[0].mxu0
      %v2568 = vadd.f32 0.0, %v2567
      %v2569 = vpop.f32.mrb[0].mxu0
      %2570 = vmatprep.mubr.f32.mxu0 0.0
      %2571 = vmatmul.mubr.f32.gmra.mrb[0].mxu0 %v2346
      %v2572 = vpop.f32.mrb[0].mxu0
      %v2573 = vadd.f32 0.0, %v2572
      %v2574 = vpop.f32.mrb[0].mxu0
      %2575 = vdwg.mxu0
      %v2576 = vadd.f32 %v2060, %v2418
      %v2577 = vadd.f32 %v2065, %v2423
      %v2578 = vadd.f32 %v2070, %v2428
      %v2579 = vadd.f32 %v2075, %v2433
      %v2580 = vadd.f32 %v2080, %v2438
      %v2581 = vadd.f32 %v2085, %v2443
      %v2582 = vadd.f32 %v2090, %v2448
      %v2583 = vadd.f32 %v2095, %v2453
      %v2584 = vadd.f32 %v2100, %v2458
      %v2585 = vadd.f32 %v2105, %v2463
      %v2586 = vadd.f32 %v2110, %v2468
      %v2587 = vadd.f32 %v2115, %v2473
      %v2588 = vadd.f32 %v2120, %v2478
      %v2589 = vadd.f32 %v2125, %v2483
      %v2590 = vadd.f32 %v2130, %v2488
      %v2591 = vadd.f32 %v2135, %v2493
      %v2592 = vadd.f32 %v2140, %v2498
      %v2593 = vadd.f32 %v2145, %v2503
      %v2594 = vadd.f32 %v2150, %v2508
      %v2595 = vadd.f32 %v2155, %v2513
      %v2596 = vadd.f32 %v2160, %v2518
      %v2597 = vadd.f32 %v2165, %v2523
      %v2598 = vadd.f32 %v2170, %v2528
      %v2599 = vadd.f32 %v2175, %v2533
      %v2600 = vadd.f32 %v2180, %v2538
      %v2601 = vadd.f32 %v2185, %v2543
      %v2602 = vadd.f32 %v2190, %v2548
      %v2603 = vadd.f32 %v2195, %v2553
      %v2604 = vadd.f32 %v2200, %v2558
      %v2605 = vadd.f32 %v2205, %v2563
      %v2606 = vadd.f32 %v2210, %v2568
      %v2607 = vadd.f32 %v2215, %v2573
      %v2608 = vld [vmem:[#allocation2 + $0x28] sm:$0xff]
      %v2609 = vld [vmem:[#allocation2 + $0x30] sm:$0xff]
      %v2610 = vld [vmem:[#allocation2 + $0x38] sm:$0xff]
      %v2611 = vld [vmem:[#allocation2 + $0x40] sm:$0xff]
      %v2612 = vld [vmem:[#allocation2 + $0x48] sm:$0xff]
      %v2613 = vld [vmem:[#allocation2 + $0x50] sm:$0xff]
      %v2614 = vld [vmem:[#allocation2 + $0x58] sm:$0xff]
      %v2615 = vld [vmem:[#allocation2 + $0x60] sm:$0xff]
      %v2616 = vld [vmem:[#allocation2 + $0x68] sm:$0xff]
      %v2617 = vld [vmem:[#allocation2 + $0x70] sm:$0xff]
      %v2618 = vld [vmem:[#allocation2 + $0x78] sm:$0xff]
      %v2619 = vld [vmem:[#allocation2 + $0x80] sm:$0xff]
      %v2620 = vld [vmem:[#allocation2 + $0x88] sm:$0xff]
      %v2621 = vld [vmem:[#allocation2 + $0x90] sm:$0xff]
      %v2622 = vld [vmem:[#allocation2 + $0x98] sm:$0xff]
      %v2623 = vld [vmem:[#allocation2 + $0xa0] sm:$0xff]
      %v2624 = vld [vmem:[#allocation2 + $0xa8] sm:$0xff]
      %v2625 = vld [vmem:[#allocation2 + $0xb0] sm:$0xff]
      %v2626 = vld [vmem:[#allocation2 + $0xb8] sm:$0xff]
      %v2627 = vld [vmem:[#allocation2 + $0xc0] sm:$0xff]
      %v2628 = vld [vmem:[#allocation2 + $0xc8] sm:$0xff]
      %v2629 = vld [vmem:[#allocation2 + $0xd0] sm:$0xff]
      %v2630 = vld [vmem:[#allocation2 + $0xd8] sm:$0xff]
      %v2631 = vld [vmem:[#allocation2 + $0xe0] sm:$0xff]
      %v2632 = vld [vmem:[#allocation2 + $0xe8] sm:$0xff]
      %v2633 = vld [vmem:[#allocation2 + $0xf0] sm:$0xff]
      %v2634 = vld [vmem:[#allocation2 + $0xf8] sm:$0xff]
      %v2635 = vld [vmem:[#allocation2 + $0x100] sm:$0xff]
      %v2636 = vld [vmem:[#allocation2 + $0x108] sm:$0xff]
      %v2637 = vld [vmem:[#allocation2 + $0x110] sm:$0xff]
      %v2638 = vld [vmem:[#allocation2 + $0x118] sm:$0xff]
      %v2639 = vld [vmem:[#allocation2 + $0x120] sm:$0xff]
      %s2640 = scalar_lea.vmem %s3, 16
      %v2641 = vld [vmem:[%s2640] sm:$0x3f]
      %v2643 = vsel %vm1232, %v2608, 0
      %v2646 = vsel %vm1232, %v2609, 0
      %v2649 = vsel %vm1232, %v2610, 0
      %v2652 = vsel %vm1232, %v2611, 0
      %v2655 = vsel %vm1232, %v2612, 0
      %v2658 = vsel %vm1232, %v2613, 0
      %v2661 = vsel %vm1232, %v2614, 0
      %v2664 = vsel %vm1232, %v2615, 0
      %v2667 = vsel %vm1232, %v2616, 0
      %v2670 = vsel %vm1232, %v2617, 0
      %v2673 = vsel %vm1232, %v2618, 0
      %v2676 = vsel %vm1232, %v2619, 0
      %v2679 = vsel %vm1232, %v2620, 0
      %v2682 = vsel %vm1232, %v2621, 0
      %v2685 = vsel %vm1232, %v2622, 0
      %v2688 = vsel %vm1232, %v2623, 0
      %v2691 = vsel %vm1232, %v2624, 0
      %v2694 = vsel %vm1232, %v2625, 0
      %v2697 = vsel %vm1232, %v2626, 0
      %v2700 = vsel %vm1232, %v2627, 0
      %v2703 = vsel %vm1232, %v2628, 0
      %v2706 = vsel %vm1232, %v2629, 0
      %v2709 = vsel %vm1232, %v2630, 0
      %v2712 = vsel %vm1232, %v2631, 0
      %v2715 = vsel %vm1232, %v2632, 0
      %v2718 = vsel %vm1232, %v2633, 0
      %v2721 = vsel %vm1232, %v2634, 0
      %v2724 = vsel %vm1232, %v2635, 0
      %v2727 = vsel %vm1232, %v2636, 0
      %v2730 = vsel %vm1232, %v2637, 0
      %v2733 = vsel %vm1232, %v2638, 0
      %v2736 = vsel %vm1232, %v2639, 0
      %v2739 = vsel %vm1989, %v2641, 0
      %2741 = vmatprep.subr.mxu0 0.0
      %2742 = vmatpush1.msra.mxu0 %v2739
      %2743 = vmatprep.subr.mxu0 0.0
      %2744 = vmatpush1.msra.mxu0 0.0
      %2745 = vmatprep.subr.mxu0 0.0
      %2746 = vmatpush1.msra.mxu0 0.0
      %2747 = vmatprep.subr.mxu0 0.0
      %2748 = vmatpush1.msra.mxu0 0.0
      %2749 = vmatprep.subr.mxu0 0.0
      %2750 = vmatpush1.msra.mxu0 0.0
      %2751 = vmatprep.subr.mxu0 0.0
      %2752 = vmatpush1.msra.mxu0 0.0
      %2753 = vmatprep.subr.mxu0 0.0
      %2754 = vmatpush1.msra.mxu0 0.0
      %2755 = vmatprep.subr.mxu0 0.0
      %2756 = vmatpush1.msra.mxu0 0.0
      %2757 = vmatprep.subr.mxu0 0.0
      %2758 = vmatpush1.msra.mxu0 0.0
      %2759 = vmatprep.subr.mxu0 0.0
      %2760 = vmatpush1.msra.mxu0 0.0
      %2761 = vmatprep.subr.mxu0 0.0
      %2762 = vmatpush1.msra.mxu0 0.0
      %2763 = vmatprep.subr.mxu0 0.0
      %2764 = vmatpush1.msra.mxu0 0.0
      %2765 = vmatprep.subr.mxu0 0.0
      %2766 = vmatpush1.msra.mxu0 0.0
      %2767 = vmatprep.subr.mxu0 0.0
      %2768 = vmatpush1.msra.mxu0 0.0
      %2769 = vmatprep.subr.mxu0 0.0
      %2770 = vmatpush1.msra.mxu0 0.0
      %2771 = vmatprep.subr.mxu0 0.0
      %2772 = vmatpush1.msra.mxu0 0.0
      %2773 = vmatprep.subr.mxu0 0.0
      %2774 = vmatpush1.msra.mxu0 0.0
      %2775 = vmatprep.subr.mxu0 0.0
      %2776 = vmatpush1.msra.mxu0 0.0
      %2777 = vmatprep.subr.mxu0 0.0
      %2778 = vmatpush1.msra.mxu0 0.0
      %2779 = vmatprep.subr.mxu0 0.0
      %2780 = vmatpush1.msra.mxu0 0.0
      %2781 = vmatprep.subr.mxu0 0.0
      %2782 = vmatpush1.msra.mxu0 0.0
      %2783 = vmatprep.subr.mxu0 0.0
      %2784 = vmatpush1.msra.mxu0 0.0
      %2785 = vmatprep.subr.mxu0 0.0
      %2786 = vmatpush1.msra.mxu0 0.0
      %2787 = vmatprep.subr.mxu0 0.0
      %2788 = vmatpush1.msra.mxu0 0.0
      %2789 = vmatprep.subr.mxu0 0.0
      %2790 = vmatpush1.msra.mxu0 0.0
      %2791 = vmatprep.subr.mxu0 0.0
      %2792 = vmatpush1.msra.mxu0 0.0
      %2793 = vmatprep.subr.mxu0 0.0
      %2794 = vmatpush1.msra.mxu0 0.0
      %2795 = vmatprep.subr.mxu0 0.0
      %2796 = vmatpush1.msra.mxu0 0.0
      %2797 = vmatprep.subr.mxu0 0.0
      %2798 = vmatpush1.msra.mxu0 0.0
      %2799 = vmatprep.subr.mxu0 0.0
      %2800 = vmatpush1.msra.mxu0 0.0
      %2801 = vmatprep.subr.mxu0 0.0
      %2802 = vmatpush1.msra.mxu0 0.0
      %2803 = vmatprep.subr.mxu0 0.0
      %2804 = vmatpush1.msra.mxu0 0.0
      %2805 = vmatprep.mubr.f32.mxu0 0.0
      %2806 = vmatmul.mubr.f32.gmra.mrb[0].mxu0 %v2643
      %v2807 = vpop.f32.mrb[0].mxu0
      %v2808 = vadd.f32 0.0, %v2807
      %v2809 = vpop.f32.mrb[0].mxu0
      %2810 = vmatprep.mubr.f32.mxu0 0.0
      %2811 = vmatmul.mubr.f32.gmra.mrb[0].mxu0 %v2646
      %v2812 = vpop.f32.mrb[0].mxu0
      %v2813 = vadd.f32 0.0, %v2812
      %v2814 = vpop.f32.mrb[0].mxu0
      %2815 = vmatprep.mubr.f32.mxu0 0.0
      %2816 = vmatmul.mubr.f32.gmra.mrb[0].mxu0 %v2649
      %v2817 = vpop.f32.mrb[0].mxu0
      %v2818 = vadd.f32 0.0, %v2817
      %v2819 = vpop.f32.mrb[0].mxu0
      %2820 = vmatprep.mubr.f32.mxu0 0.0
      %2821 = vmatmul.mubr.f32.gmra.mrb[0].mxu0 %v2652
      %v2822 = vpop.f32.mrb[0].mxu0
      %v2823 = vadd.f32 0.0, %v2822
      %v2824 = vpop.f32.mrb[0].mxu0
      %2825 = vmatprep.mubr.f32.mxu0 0.0
      %2826 = vmatmul.mubr.f32.gmra.mrb[0].mxu0 %v2655
      %v2827 = vpop.f32.mrb[0].mxu0
      %v2828 = vadd.f32 0.0, %v2827
      %v2829 = vpop.f32.mrb[0].mxu0
      %2830 = vmatprep.mubr.f32.mxu0 0.0
      %2831 = vmatmul.mubr.f32.gmra.mrb[0].mxu0 %v2658
      %v2832 = vpop.f32.mrb[0].mxu0
      %v2833 = vadd.f32 0.0, %v2832
      %v2834 = vpop.f32.mrb[0].mxu0
      %2835 = vmatprep.mubr.f32.mxu0 0.0
      %2836 = vmatmul.mubr.f32.gmra.mrb[0].mxu0 %v2661
      %v2837 = vpop.f32.mrb[0].mxu0
      %v2838 = vadd.f32 0.0, %v2837
      %v2839 = vpop.f32.mrb[0].mxu0
      %2840 = vmatprep.mubr.f32.mxu0 0.0
      %2841 = vmatmul.mubr.f32.gmra.mrb[0].mxu0 %v2664
      %v2842 = vpop.f32.mrb[0].mxu0
      %v2843 = vadd.f32 0.0, %v2842
      %v2844 = vpop.f32.mrb[0].mxu0
      %2845 = vmatprep.mubr.f32.mxu0 0.0
      %2846 = vmatmul.mubr.f32.gmra.mrb[0].mxu0 %v2667
      %v2847 = vpop.f32.mrb[0].mxu0
      %v2848 = vadd.f32 0.0, %v2847
      %v2849 = vpop.f32.mrb[0].mxu0
      %2850 = vmatprep.mubr.f32.mxu0 0.0
      %2851 = vmatmul.mubr.f32.gmra.mrb[0].mxu0 %v2670
      %v2852 = vpop.f32.mrb[0].mxu0
      %v2853 = vadd.f32 0.0, %v2852
      %v2854 = vpop.f32.mrb[0].mxu0
      %2855 = vmatprep.mubr.f32.mxu0 0.0
      %2856 = vmatmul.mubr.f32.gmra.mrb[0].mxu0 %v2673
      %v2857 = vpop.f32.mrb[0].mxu0
      %v2858 = vadd.f32 0.0, %v2857
      %v2859 = vpop.f32.mrb[0].mxu0
      %2860 = vmatprep.mubr.f32.mxu0 0.0
      %2861 = vmatmul.mubr.f32.gmra.mrb[0].mxu0 %v2676
      %v2862 = vpop.f32.mrb[0].mxu0
      %v2863 = vadd.f32 0.0, %v2862
      %v2864 = vpop.f32.mrb[0].mxu0
      %2865 = vmatprep.mubr.f32.mxu0 0.0
      %2866 = vmatmul.mubr.f32.gmra.mrb[0].mxu0 %v2679
      %v2867 = vpop.f32.mrb[0].mxu0
      %v2868 = vadd.f32 0.0, %v2867
      %v2869 = vpop.f32.mrb[0].mxu0
      %2870 = vmatprep.mubr.f32.mxu0 0.0
      %2871 = vmatmul.mubr.f32.gmra.mrb[0].mxu0 %v2682
      %v2872 = vpop.f32.mrb[0].mxu0
      %v2873 = vadd.f32 0.0, %v2872
      %v2874 = vpop.f32.mrb[0].mxu0
      %2875 = vmatprep.mubr.f32.mxu0 0.0
      %2876 = vmatmul.mubr.f32.gmra.mrb[0].mxu0 %v2685
      %v2877 = vpop.f32.mrb[0].mxu0
      %v2878 = vadd.f32 0.0, %v2877
      %v2879 = vpop.f32.mrb[0].mxu0
      %2880 = vmatprep.mubr.f32.mxu0 0.0
      %2881 = vmatmul.mubr.f32.gmra.mrb[0].mxu0 %v2688
      %v2882 = vpop.f32.mrb[0].mxu0
      %v2883 = vadd.f32 0.0, %v2882
      %v2884 = vpop.f32.mrb[0].mxu0
      %2885 = vmatprep.mubr.f32.mxu0 0.0
      %2886 = vmatmul.mubr.f32.gmra.mrb[0].mxu0 %v2691
      %v2887 = vpop.f32.mrb[0].mxu0
      %v2888 = vadd.f32 0.0, %v2887
      %v2889 = vpop.f32.mrb[0].mxu0
      %2890 = vmatprep.mubr.f32.mxu0 0.0
      %2891 = vmatmul.mubr.f32.gmra.mrb[0].mxu0 %v2694
      %v2892 = vpop.f32.mrb[0].mxu0
      %v2893 = vadd.f32 0.0, %v2892
      %v2894 = vpop.f32.mrb[0].mxu0
      %2895 = vmatprep.mubr.f32.mxu0 0.0
      %2896 = vmatmul.mubr.f32.gmra.mrb[0].mxu0 %v2697
      %v2897 = vpop.f32.mrb[0].mxu0
      %v2898 = vadd.f32 0.0, %v2897
      %v2899 = vpop.f32.mrb[0].mxu0
      %2900 = vmatprep.mubr.f32.mxu0 0.0
      %2901 = vmatmul.mubr.f32.gmra.mrb[0].mxu0 %v2700
      %v2902 = vpop.f32.mrb[0].mxu0
      %v2903 = vadd.f32 0.0, %v2902
      %v2904 = vpop.f32.mrb[0].mxu0
      %2905 = vmatprep.mubr.f32.mxu0 0.0
      %2906 = vmatmul.mubr.f32.gmra.mrb[0].mxu0 %v2703
      %v2907 = vpop.f32.mrb[0].mxu0
      %v2908 = vadd.f32 0.0, %v2907
      %v2909 = vpop.f32.mrb[0].mxu0
      %2910 = vmatprep.mubr.f32.mxu0 0.0
      %2911 = vmatmul.mubr.f32.gmra.mrb[0].mxu0 %v2706
      %v2912 = vpop.f32.mrb[0].mxu0
      %v2913 = vadd.f32 0.0, %v2912
      %v2914 = vpop.f32.mrb[0].mxu0
      %2915 = vmatprep.mubr.f32.mxu0 0.0
      %2916 = vmatmul.mubr.f32.gmra.mrb[0].mxu0 %v2709
      %v2917 = vpop.f32.mrb[0].mxu0
      %v2918 = vadd.f32 0.0, %v2917
      %v2919 = vpop.f32.mrb[0].mxu0
      %2920 = vmatprep.mubr.f32.mxu0 0.0
      %2921 = vmatmul.mubr.f32.gmra.mrb[0].mxu0 %v2712
      %v2922 = vpop.f32.mrb[0].mxu0
      %v2923 = vadd.f32 0.0, %v2922
      %v2924 = vpop.f32.mrb[0].mxu0
      %2925 = vmatprep.mubr.f32.mxu0 0.0
      %2926 = vmatmul.mubr.f32.gmra.mrb[0].mxu0 %v2715
      %v2927 = vpop.f32.mrb[0].mxu0
      %v2928 = vadd.f32 0.0, %v2927
      %v2929 = vpop.f32.mrb[0].mxu0
      %2930 = vmatprep.mubr.f32.mxu0 0.0
      %2931 = vmatmul.mubr.f32.gmra.mrb[0].mxu0 %v2718
      %v2932 = vpop.f32.mrb[0].mxu0
      %v2933 = vadd.f32 0.0, %v2932
      %v2934 = vpop.f32.mrb[0].mxu0
      %2935 = vmatprep.mubr.f32.mxu0 0.0
      %2936 = vmatmul.mubr.f32.gmra.mrb[0].mxu0 %v2721
      %v2937 = vpop.f32.mrb[0].mxu0
      %v2938 = vadd.f32 0.0, %v2937
      %v2939 = vpop.f32.mrb[0].mxu0
      %2940 = vmatprep.mubr.f32.mxu0 0.0
      %2941 = vmatmul.mubr.f32.gmra.mrb[0].mxu0 %v2724
      %v2942 = vpop.f32.mrb[0].mxu0
      %v2943 = vadd.f32 0.0, %v2942
      %v2944 = vpop.f32.mrb[0].mxu0
      %2945 = vmatprep.mubr.f32.mxu0 0.0
      %2946 = vmatmul.mubr.f32.gmra.mrb[0].mxu0 %v2727
      %v2947 = vpop.f32.mrb[0].mxu0
      %v2948 = vadd.f32 0.0, %v2947
      %v2949 = vpop.f32.mrb[0].mxu0
      %2950 = vmatprep.mubr.f32.mxu0 0.0
      %2951 = vmatmul.mubr.f32.gmra.mrb[0].mxu0 %v2730
      %v2952 = vpop.f32.mrb[0].mxu0
      %v2953 = vadd.f32 0.0, %v2952
      %v2954 = vpop.f32.mrb[0].mxu0
      %2955 = vmatprep.mubr.f32.mxu0 0.0
      %2956 = vmatmul.mubr.f32.gmra.mrb[0].mxu0 %v2733
      %v2957 = vpop.f32.mrb[0].mxu0
      %v2958 = vadd.f32 0.0, %v2957
      %v2959 = vpop.f32.mrb[0].mxu0
      %2960 = vmatprep.mubr.f32.mxu0 0.0
      %2961 = vmatmul.mubr.f32.gmra.mrb[0].mxu0 %v2736
      %v2962 = vpop.f32.mrb[0].mxu0
      %v2963 = vadd.f32 0.0, %v2962
      %v2964 = vpop.f32.mrb[0].mxu0
      %2965 = vdwg.mxu0
      %v2966 = vadd.f32 %v2576, %v2808
      %v2967 = vadd.f32 %v2577, %v2813
      %v2968 = vadd.f32 %v2578, %v2818
      %v2969 = vadd.f32 %v2579, %v2823
      %v2970 = vadd.f32 %v2580, %v2828
      %v2971 = vadd.f32 %v2581, %v2833
      %v2972 = vadd.f32 %v2582, %v2838
      %v2973 = vadd.f32 %v2583, %v2843
      %v2974 = vadd.f32 %v2584, %v2848
      %v2975 = vadd.f32 %v2585, %v2853
      %v2976 = vadd.f32 %v2586, %v2858
      %v2977 = vadd.f32 %v2587, %v2863
      %v2978 = vadd.f32 %v2588, %v2868
      %v2979 = vadd.f32 %v2589, %v2873
      %v2980 = vadd.f32 %v2590, %v2878
      %v2981 = vadd.f32 %v2591, %v2883
      %v2982 = vadd.f32 %v2592, %v2888
      %v2983 = vadd.f32 %v2593, %v2893
      %v2984 = vadd.f32 %v2594, %v2898
      %v2985 = vadd.f32 %v2595, %v2903
      %v2986 = vadd.f32 %v2596, %v2908
      %v2987 = vadd.f32 %v2597, %v2913
      %v2988 = vadd.f32 %v2598, %v2918
      %v2989 = vadd.f32 %v2599, %v2923
      %v2990 = vadd.f32 %v2600, %v2928
      %v2991 = vadd.f32 %v2601, %v2933
      %v2992 = vadd.f32 %v2602, %v2938
      %v2993 = vadd.f32 %v2603, %v2943
      %v2994 = vadd.f32 %v2604, %v2948
      %v2995 = vadd.f32 %v2605, %v2953
      %v2996 = vadd.f32 %v2606, %v2958
      %v2997 = vadd.f32 %v2607, %v2963
      %v2998 = vxor.u32 %v2966, 2147483648
      %v2999 = vxor.u32 %v2967, 2147483648
      %v3000 = vxor.u32 %v2968, 2147483648
      %v3001 = vxor.u32 %v2969, 2147483648
      %v3002 = vxor.u32 %v2970, 2147483648
      %v3003 = vxor.u32 %v2971, 2147483648
      %v3004 = vxor.u32 %v2972, 2147483648
      %v3005 = vxor.u32 %v2973, 2147483648
      %v3006 = vxor.u32 %v2974, 2147483648
      %v3007 = vxor.u32 %v2975, 2147483648
      %v3008 = vxor.u32 %v2976, 2147483648
      %v3009 = vxor.u32 %v2977, 2147483648
      %v3010 = vxor.u32 %v2978, 2147483648
      %v3011 = vxor.u32 %v2979, 2147483648
      %v3012 = vxor.u32 %v2980, 2147483648
      %v3013 = vxor.u32 %v2981, 2147483648
      %v3014 = vxor.u32 %v2982, 2147483648
      %v3015 = vxor.u32 %v2983, 2147483648
      %v3016 = vxor.u32 %v2984, 2147483648
      %v3017 = vxor.u32 %v2985, 2147483648
      %v3018 = vxor.u32 %v2986, 2147483648
      %v3019 = vxor.u32 %v2987, 2147483648
      %v3020 = vxor.u32 %v2988, 2147483648
      %v3021 = vxor.u32 %v2989, 2147483648
      %v3022 = vxor.u32 %v2990, 2147483648
      %v3023 = vxor.u32 %v2991, 2147483648
      %v3024 = vxor.u32 %v2992, 2147483648
      %v3025 = vxor.u32 %v2993, 2147483648
      %v3026 = vxor.u32 %v2994, 2147483648
      %v3027 = vxor.u32 %v2995, 2147483648
      %v3028 = vxor.u32 %v2996, 2147483648
      %v3029 = vxor.u32 %v2997, 2147483648
      %v3030 = vmul.f32 %v2998, 1.442695
      %v3031 = vpow.pop %v3030
      %v3032 = vmul.f32 %v2999, 1.442695
      %v3033 = vpow.pop %v3032
      %v3034 = vmul.f32 %v3000, 1.442695
      %v3035 = vpow.pop %v3034
      %v3036 = vmul.f32 %v3001, 1.442695
      %v3037 = vpow.pop %v3036
      %v3038 = vmul.f32 %v3002, 1.442695
      %v3039 = vpow.pop %v3038
      %v3040 = vmul.f32 %v3003, 1.442695
      %v3041 = vpow.pop %v3040
      %v3042 = vmul.f32 %v3004, 1.442695
      %v3043 = vpow.pop %v3042
      %v3044 = vmul.f32 %v3005, 1.442695
      %v3045 = vpow.pop %v3044
      %v3046 = vmul.f32 %v3006, 1.442695
      %v3047 = vpow.pop %v3046
      %v3048 = vmul.f32 %v3007, 1.442695
      %v3049 = vpow.pop %v3048
      %v3050 = vmul.f32 %v3008, 1.442695
      %v3051 = vpow.pop %v3050
      %v3052 = vmul.f32 %v3009, 1.442695
      %v3053 = vpow.pop %v3052
      %v3054 = vmul.f32 %v3010, 1.442695
      %v3055 = vpow.pop %v3054
      %v3056 = vmul.f32 %v3011, 1.442695
      %v3057 = vpow.pop %v3056
      %v3058 = vmul.f32 %v3012, 1.442695
      %v3059 = vpow.pop %v3058
      %v3060 = vmul.f32 %v3013, 1.442695
      %v3061 = vpow.pop %v3060
      %v3062 = vmul.f32 %v3014, 1.442695
      %v3063 = vpow.pop %v3062
      %v3064 = vmul.f32 %v3015, 1.442695
      %v3065 = vpow.pop %v3064
      %v3066 = vmul.f32 %v3016, 1.442695
      %v3067 = vpow.pop %v3066
      %v3068 = vmul.f32 %v3017, 1.442695
      %v3069 = vpow.pop %v3068
      %v3070 = vmul.f32 %v3018, 1.442695
      %v3071 = vpow.pop %v3070
      %v3072 = vmul.f32 %v3019, 1.442695
      %v3073 = vpow.pop %v3072
      %v3074 = vmul.f32 %v3020, 1.442695
      %v3075 = vpow.pop %v3074
      %v3076 = vmul.f32 %v3021, 1.442695
      %v3077 = vpow.pop %v3076
      %v3078 = vmul.f32 %v3022, 1.442695
      %v3079 = vpow.pop %v3078
      %v3080 = vmul.f32 %v3023, 1.442695
      %v3081 = vpow.pop %v3080
      %v3082 = vmul.f32 %v3024, 1.442695
      %v3083 = vpow.pop %v3082
      %v3084 = vmul.f32 %v3025, 1.442695
      %v3085 = vpow.pop %v3084
      %v3086 = vmul.f32 %v3026, 1.442695
      %v3087 = vpow.pop %v3086
      %v3088 = vmul.f32 %v3027, 1.442695
      %v3089 = vpow.pop %v3088
      %v3090 = vmul.f32 %v3028, 1.442695
      %v3091 = vpow.pop %v3090
      %v3092 = vmul.f32 %v3029, 1.442695
      %v3093 = vpow.pop %v3092
      %v3094 = vadd.f32 %v3031, 1.0
      %v3095 = vadd.f32 %v3033, 1.0
      %v3096 = vadd.f32 %v3035, 1.0
      %v3097 = vadd.f32 %v3037, 1.0
      %v3098 = vadd.f32 %v3039, 1.0
      %v3099 = vadd.f32 %v3041, 1.0
      %v3100 = vadd.f32 %v3043, 1.0
      %v3101 = vadd.f32 %v3045, 1.0
      %v3102 = vadd.f32 %v3047, 1.0
      %v3103 = vadd.f32 %v3049, 1.0
      %v3104 = vadd.f32 %v3051, 1.0
      %v3105 = vadd.f32 %v3053, 1.0
      %v3106 = vadd.f32 %v3055, 1.0
      %v3107 = vadd.f32 %v3057, 1.0
      %v3108 = vadd.f32 %v3059, 1.0
      %v3109 = vadd.f32 %v3061, 1.0
      %v3110 = vadd.f32 %v3063, 1.0
      %v3111 = vadd.f32 %v3065, 1.0
      %v3112 = vadd.f32 %v3067, 1.0
      %v3113 = vadd.f32 %v3069, 1.0
      %v3114 = vadd.f32 %v3071, 1.0
      %v3115 = vadd.f32 %v3073, 1.0
      %v3116 = vadd.f32 %v3075, 1.0
      %v3117 = vadd.f32 %v3077, 1.0
      %v3118 = vadd.f32 %v3079, 1.0
      %v3119 = vadd.f32 %v3081, 1.0
      %v3120 = vadd.f32 %v3083, 1.0
      %v3121 = vadd.f32 %v3085, 1.0
      %v3122 = vadd.f32 %v3087, 1.0
      %v3123 = vadd.f32 %v3089, 1.0
      %v3124 = vadd.f32 %v3091, 1.0
      %v3125 = vadd.f32 %v3093, 1.0
      %v3126 = vrcp.pop %v3094
      %v3127 = vmul.f32 1.0, %v3126
      %v3128 = vrcp.pop %v3095
      %v3129 = vmul.f32 1.0, %v3128
      %v3130 = vrcp.pop %v3096
      %v3131 = vmul.f32 1.0, %v3130
      %v3132 = vrcp.pop %v3097
      %v3133 = vmul.f32 1.0, %v3132
      %v3134 = vrcp.pop %v3098
      %v3135 = vmul.f32 1.0, %v3134
      %v3136 = vrcp.pop %v3099
      %v3137 = vmul.f32 1.0, %v3136
      %v3138 = vrcp.pop %v3100
      %v3139 = vmul.f32 1.0, %v3138
      %v3140 = vrcp.pop %v3101
      %v3141 = vmul.f32 1.0, %v3140
      %v3142 = vrcp.pop %v3102
      %v3143 = vmul.f32 1.0, %v3142
      %v3144 = vrcp.pop %v3103
      %v3145 = vmul.f32 1.0, %v3144
      %v3146 = vrcp.pop %v3104
      %v3147 = vmul.f32 1.0, %v3146
      %v3148 = vrcp.pop %v3105
      %v3149 = vmul.f32 1.0, %v3148
      %v3150 = vrcp.pop %v3106
      %v3151 = vmul.f32 1.0, %v3150
      %v3152 = vrcp.pop %v3107
      %v3153 = vmul.f32 1.0, %v3152
      %v3154 = vrcp.pop %v3108
      %v3155 = vmul.f32 1.0, %v3154
      %v3156 = vrcp.pop %v3109
      %v3157 = vmul.f32 1.0, %v3156
      %v3158 = vrcp.pop %v3110
      %v3159 = vmul.f32 1.0, %v3158
      %v3160 = vrcp.pop %v3111
      %v3161 = vmul.f32 1.0, %v3160
      %v3162 = vrcp.pop %v3112
      %v3163 = vmul.f32 1.0, %v3162
      %v3164 = vrcp.pop %v3113
      %v3165 = vmul.f32 1.0, %v3164
      %v3166 = vrcp.pop %v3114
      %v3167 = vmul.f32 1.0, %v3166
      %v3168 = vrcp.pop %v3115
      %v3169 = vmul.f32 1.0, %v3168
      %v3170 = vrcp.pop %v3116
      %v3171 = vmul.f32 1.0, %v3170
      %v3172 = vrcp.pop %v3117
      %v3173 = vmul.f32 1.0, %v3172
      %v3174 = vrcp.pop %v3118
      %v3175 = vmul.f32 1.0, %v3174
      %v3176 = vrcp.pop %v3119
      %v3177 = vmul.f32 1.0, %v3176
      %v3178 = vrcp.pop %v3120
      %v3179 = vmul.f32 1.0, %v3178
      %v3180 = vrcp.pop %v3121
      %v3181 = vmul.f32 1.0, %v3180
      %v3182 = vrcp.pop %v3122
      %v3183 = vmul.f32 1.0, %v3182
      %v3184 = vrcp.pop %v3123
      %v3185 = vmul.f32 1.0, %v3184
      %v3186 = vrcp.pop %v3124
      %v3187 = vmul.f32 1.0, %v3186
      %v3188 = vrcp.pop %v3125
      %v3189 = vmul.f32 1.0, %v3188
      %v3190 = vmul.f32 %v2966, %v3127
      %v3191 = vmul.f32 %v2967, %v3129
      %v3192 = vmul.f32 %v2968, %v3131
      %v3193 = vmul.f32 %v2969, %v3133
      %v3194 = vmul.f32 %v2970, %v3135
      %v3195 = vmul.f32 %v2971, %v3137
      %v3196 = vmul.f32 %v2972, %v3139
      %v3197 = vmul.f32 %v2973, %v3141
      %v3198 = vmul.f32 %v2974, %v3143
      %v3199 = vmul.f32 %v2975, %v3145
      %v3200 = vmul.f32 %v2976, %v3147
      %v3201 = vmul.f32 %v2977, %v3149
      %v3202 = vmul.f32 %v2978, %v3151
      %v3203 = vmul.f32 %v2979, %v3153
      %v3204 = vmul.f32 %v2980, %v3155
      %v3205 = vmul.f32 %v2981, %v3157
      %v3206 = vmul.f32 %v2982, %v3159
      %v3207 = vmul.f32 %v2983, %v3161
      %v3208 = vmul.f32 %v2984, %v3163
      %v3209 = vmul.f32 %v2985, %v3165
      %v3210 = vmul.f32 %v2986, %v3167
      %v3211 = vmul.f32 %v2987, %v3169
      %v3212 = vmul.f32 %v2988, %v3171
      %v3213 = vmul.f32 %v2989, %v3173
      %v3214 = vmul.f32 %v2990, %v3175
      %v3215 = vmul.f32 %v2991, %v3177
      %v3216 = vmul.f32 %v2992, %v3179
      %v3217 = vmul.f32 %v2993, %v3181
      %v3218 = vmul.f32 %v2994, %v3183
      %v3219 = vmul.f32 %v2995, %v3185
      %v3220 = vmul.f32 %v2996, %v3187
      %v3221 = vmul.f32 %v2997, %v3189
      %v3222 = vadd.f32 %v225, %v3190
      %v3223 = vadd.f32 %v226, %v3191
      %v3224 = vadd.f32 %v227, %v3192
      %v3225 = vadd.f32 %v228, %v3193
      %v3226 = vadd.f32 %v229, %v3194
      %v3227 = vadd.f32 %v230, %v3195
      %v3228 = vadd.f32 %v231, %v3196
      %v3229 = vadd.f32 %v232, %v3197
      %v3230 = vadd.f32 %v233, %v3198
      %v3231 = vadd.f32 %v234, %v3199
      %v3232 = vadd.f32 %v235, %v3200
      %v3233 = vadd.f32 %v236, %v3201
      %v3234 = vadd.f32 %v237, %v3202
      %v3235 = vadd.f32 %v238, %v3203
      %v3236 = vadd.f32 %v239, %v3204
      %v3237 = vadd.f32 %v240, %v3205
      %v3238 = vadd.f32 %v241, %v3206
      %v3239 = vadd.f32 %v242, %v3207
      %v3240 = vadd.f32 %v243, %v3208
      %v3241 = vadd.f32 %v244, %v3209
      %v3242 = vadd.f32 %v245, %v3210
      %v3243 = vadd.f32 %v246, %v3211
      %v3244 = vadd.f32 %v247, %v3212
      %v3245 = vadd.f32 %v248, %v3213
      %v3246 = vadd.f32 %v249, %v3214
      %v3247 = vadd.f32 %v250, %v3215
      %v3248 = vadd.f32 %v251, %v3216
      %v3249 = vadd.f32 %v252, %v3217
      %v3250 = vadd.f32 %v253, %v3218
      %v3251 = vadd.f32 %v254, %v3219
      %v3252 = vadd.f32 %v255, %v3220
      %v3253 = vadd.f32 %v256, %v3221
      %3254 = vst.msk [vmem:[%s224] sm:$0xff] %vm265, %v3222
      %3255 = vst.msk [vmem:[%s224 + $0x8] sm:$0xff] %vm265, %v3223
      %3256 = vst.msk [vmem:[%s224 + $0x10] sm:$0xff] %vm265, %v3224
      %3257 = vst.msk [vmem:[%s224 + $0x18] sm:$0xff] %vm265, %v3225
      %3258 = vst.msk [vmem:[%s224 + $0x20] sm:$0xff] %vm265, %v3226
      %3259 = vst.msk [vmem:[%s224 + $0x28] sm:$0xff] %vm265, %v3227
      %3260 = vst.msk [vmem:[%s224 + $0x30] sm:$0xff] %vm265, %v3228
      %3261 = vst.msk [vmem:[%s224 + $0x38] sm:$0xff] %vm265, %v3229
      %3262 = vst.msk [vmem:[%s224 + $0x40] sm:$0xff] %vm265, %v3230
      %3263 = vst.msk [vmem:[%s224 + $0x48] sm:$0xff] %vm265, %v3231
      %3264 = vst.msk [vmem:[%s224 + $0x50] sm:$0xff] %vm265, %v3232
      %3265 = vst.msk [vmem:[%s224 + $0x58] sm:$0xff] %vm265, %v3233
      %3266 = vst.msk [vmem:[%s224 + $0x60] sm:$0xff] %vm265, %v3234
      %3267 = vst.msk [vmem:[%s224 + $0x68] sm:$0xff] %vm265, %v3235
      %3268 = vst.msk [vmem:[%s224 + $0x70] sm:$0xff] %vm265, %v3236
      %3269 = vst.msk [vmem:[%s224 + $0x78] sm:$0xff] %vm265, %v3237
      %3270 = vst.msk [vmem:[%s224 + $0x80] sm:$0xff] %vm265, %v3238
      %3271 = vst.msk [vmem:[%s224 + $0x88] sm:$0xff] %vm265, %v3239
      %3272 = vst.msk [vmem:[%s224 + $0x90] sm:$0xff] %vm265, %v3240
      %3273 = vst.msk [vmem:[%s224 + $0x98] sm:$0xff] %vm265, %v3241
      %3274 = vst.msk [vmem:[%s224 + $0xa0] sm:$0xff] %vm265, %v3242
      %3275 = vst.msk [vmem:[%s224 + $0xa8] sm:$0xff] %vm265, %v3243
      %3276 = vst.msk [vmem:[%s224 + $0xb0] sm:$0xff] %vm265, %v3244
      %3277 = vst.msk [vmem:[%s224 + $0xb8] sm:$0xff] %vm265, %v3245
      %3278 = vst.msk [vmem:[%s224 + $0xc0] sm:$0xff] %vm265, %v3246
      %3279 = vst.msk [vmem:[%s224 + $0xc8] sm:$0xff] %vm265, %v3247
      %3280 = vst.msk [vmem:[%s224 + $0xd0] sm:$0xff] %vm265, %v3248
      %3281 = vst.msk [vmem:[%s224 + $0xd8] sm:$0xff] %vm265, %v3249
      %3282 = vst.msk [vmem:[%s224 + $0xe0] sm:$0xff] %vm265, %v3250
      %3283 = vst.msk [vmem:[%s224 + $0xe8] sm:$0xff] %vm265, %v3251
      %3284 = vst.msk [vmem:[%s224 + $0xf0] sm:$0xff] %vm265, %v3252
      %3285 = vst.msk [vmem:[%s224 + $0xf8] sm:$0xff] %vm265, %v3253
      %p3286 = scmp.lt.s32.totalorder %s16, 1
      %s3287 = scalar_select %p3286, %s16, 1
      %s3288 = smul.addr %s3287, 32
      %s3289 = smul.addr %s3288, 8
      %s3290 = scalar_lea.vmem %s5, %s3289
      // Predicated region
      $region41: #{res_unit_forward_nhwc.1} parent=39 // pred_check
        %p3291 = pneg %p144
      $region42: #{res_unit_forward_nhwc.1} parent=39 // pred_check_branch
        %3293 = sbr.rel (%p3291) target = $region44
      $region43: #{res_unit_forward_nhwc.1} parent=39 // pred_region
        _
      $region44: #{res_unit_forward_nhwc.1} parent=39 // pred_fallthru
        _
    $region40: #{res_unit_forward_nhwc.1} parent=5 // pred_fallthru
      _
    %p3294 = scmp.le.s32.totalorder 2, %s11
    // Predicated region
    $region45: #{res_unit_forward_nhwc.1} parent=5 // pred_check
      %p3295 = pneg %p3294
    $region46: #{res_unit_forward_nhwc.1} parent=5 // pred_check_branch
      %3297 = sbr.rel (%p3295) target = $region48
    $region47: #{res_unit_forward_nhwc.1} parent=5 // pred_region
      %s3298 = ssub.s32 %s11, 2
      // Predicated region
      $region49: #{res_unit_forward_nhwc.1} parent=47 // pred_check
        %p3299 = pneg %p150
      $region50: #{res_unit_forward_nhwc.1} parent=47 // pred_check_branch
        %3301 = sbr.rel (%p3299) target = $region52
      $region51: #{res_unit_forward_nhwc.1} parent=47 // pred_region
        %p3302 = scmp.lt.s32.totalorder %s17, 1
        %s3303 = scalar_select %p3302, %s17, 1
        %s3304 = smul.addr %s3303, 32
        %s3305 = smul.addr %s3304, 8
        %s3306 = scalar_lea.vmem %s5, %s3305
      $region52: #{res_unit_forward_nhwc.1} parent=47 // pred_fallthru
        _
    $region48: #{res_unit_forward_nhwc.1} parent=5 // pred_fallthru
      _
  $region6: #{res_unit_forward_nhwc.1} parent=0 // loop_footer
    %s15 = sadd.s32 1, %s11
  $region7: #{res_unit_forward_nhwc.1} parent=0 // loop_footer_branch
    %10 = sbr.rel target = $region3
  $region8: #{res_unit_forward_nhwc.1} parent=0 // loop_exit
    _

</llo_original>
